<compile_context>
chip_gen: v7x
topology: tpu7x:2x2x1
jax: 0.10.0
libtpu: 0.0.40
codegen_flags: <defaults>
</compile_context>

<pallas_src>
import numpy as np
import jax
import jax.numpy as jnp
from jax.experimental import pallas as pl
from jax.experimental.pallas import tpu as pltpu


# ----------------------------------------------------------------------------
# Fused kernel.
#   x_ref:    [L*B, E]    time-major flattened input (row = t*B + b)
#   wih0_ref: [E, 8H]     layer-0 input weights, cols = [fwd i,f,g,o | bwd i,f,g,o]
#   whh0_ref: [2H, 8H]    layer-0 recurrent weights, block-diagonal:
#                         rows 0:H -> cols 0:4H (fwd), rows H:2H -> cols 4H:8H (bwd)
#   b0_ref:   [1, 8H]     layer-0 bias (b_ih + b_hh, zero here)
#   wih1_ref: [2, H, 8H]  layer-1 input weights; [0] multiplies the fwd half of
#                         the concatenated layer-0 output, [1] the bwd half
#   whh1_ref: [2H, 8H], b1_ref: [1, 8H]
#   watt/batt, w1/bfc1, w2/bfc2: Linear weights stored transposed (x @ W)
#   res_ref:  [B, C]      softmax class probabilities
#   out0f_sc / out0b_sc: [L*B, H] VMEM scratch holding layer-0 per-step outputs
# ----------------------------------------------------------------------------
def text_bilstm_kernel(x_ref, wih0_ref, whh0_ref, b0_ref,
                       wih1_ref, whh1_ref, b1_ref,
                       watt_ref, batt_ref, w1_ref, bfc1_ref,
                       w2_ref, bfc2_ref,
                       res_ref, out0f_sc, out0b_sc):
    H = out0f_sc.shape[1]
    G = 4 * H
    B = res_ref.shape[0]
    L = x_ref.shape[0] // B

    def run_layer(proj, whh_blk, fwd_out_ref, bwd_out_ref):
        """Both directions advance together: one [B,2H]@[2H,8H] matmul/step.

        At unrolled step s the forward chain consumes time tf = s and the
        backward chain consumes time tb = L-1-s (PyTorch bidirectional order).
        """
        hf = jnp.zeros((B, H), jnp.float32)
        cf = jnp.zeros((B, H), jnp.float32)
        hb = jnp.zeros((B, H), jnp.float32)
        cb = jnp.zeros((B, H), jnp.float32)
        outs_f = [None] * L
        outs_b = [None] * L

        def cell(g_all, c):
            # one EUP pass over the full 4H-wide gate vector, then slice
            sg = jax.nn.sigmoid(g_all)                 # i | f | (unused) | o
            th = jnp.tanh(g_all)                       # (unused)x2 | g | (unused)
            c_new = sg[:, H:2 * H] * c + sg[:, 0:H] * th[:, 2 * H:3 * H]
            h_new = sg[:, 3 * H:4 * H] * jnp.tanh(c_new)
            return h_new, c_new

        for s in range(L):                             # static, fully unrolled
            tf = s
            tb = L - 1 - s
            hcat = jnp.concatenate([hf, hb], axis=1)   # [B, 2H]
            rec = jnp.dot(hcat, whh_blk,
                          preferred_element_type=jnp.float32)        # [B, 8H]
            g_f = proj[tf * B:(tf + 1) * B, 0:G] + rec[:, 0:G]
            g_b = proj[tb * B:(tb + 1) * B, G:2 * G] + rec[:, G:2 * G]
            hf, cf = cell(g_f, cf)
            hb, cb = cell(g_b, cb)
            if fwd_out_ref is not None:
                fwd_out_ref[pl.ds(tf * B, B), :] = hf
                bwd_out_ref[pl.ds(tb * B, B), :] = hb
            outs_f[tf] = hf
            outs_b[tb] = hb
        return outs_f, outs_b, hf, hb

    # ---- LSTM layer 0: one hoisted [L*B, E] @ [E, 8H] projection ----
    proj0 = (jnp.dot(x_ref[...], wih0_ref[...],
                     preferred_element_type=jnp.float32) + b0_ref[...])
    _, _, hf0, hb0 = run_layer(proj0, whh0_ref[...], out0f_sc, out0b_sc)

    # ---- LSTM layer 1: hoisted projection of concat(fwd, bwd) layer-0 output ----
    proj1 = (jnp.dot(out0f_sc[...], wih1_ref[0],
                     preferred_element_type=jnp.float32)
             + jnp.dot(out0b_sc[...], wih1_ref[1],
                       preferred_element_type=jnp.float32)
             + b1_ref[...])
    outs1f, outs1b, hf1, hb1 = run_layer(proj1, whh1_ref[...], None, None)

    # ---- attention_net_with_w ----
    hidden = hf0 + hb0 + hf1 + hb1                               # [B, H]
    atten_w = jnp.maximum(
        jnp.dot(hidden, watt_ref[...], preferred_element_type=jnp.float32)
        + batt_ref[...], 0.0)                                    # [B, H]

    h_att = [outs1f[t] + outs1b[t] for t in range(L)]            # L x [B, H]
    sc = [jnp.sum(atten_w * jnp.tanh(h_att[t]), axis=-1, keepdims=True)
          for t in range(L)]                                     # L x [B, 1]
    smax = sc[0]
    for t in range(1, L):
        smax = jnp.maximum(smax, sc[t])
    es = [jnp.exp(sc[t] - smax) for t in range(L)]
    denom = es[0]
    num = es[0] * h_att[0]
    for t in range(1, L):
        denom = denom + es[t]
        num = num + es[t] * h_att[t]
    context = num * pl.reciprocal(denom, approx=False)           # [B, H]

    # ---- fc_out (eval mode: Dropout = identity) ----
    z = jnp.maximum(
        jnp.dot(context, w1_ref[...], preferred_element_type=jnp.float32)
        + bfc1_ref[...], 0.0)
    logits = (jnp.dot(z, w2_ref[...], preferred_element_type=jnp.float32)
              + bfc2_ref[...])
    logits = logits - jnp.max(logits, axis=-1, keepdims=True)
    el = jnp.exp(logits)
    res_ref[...] = el / jnp.sum(el, axis=-1, keepdims=True)


def text_bilstm_forward(x, params):
    """x: [B, L, E] -> class probabilities [B, C]."""
    B, L, E = x.shape
    H = params['watt'].shape[0]
    C = params['w2'].shape[1]
    # one tiny layout-plumbing op: time-major flatten of the input
    x_tm = jnp.transpose(x, (1, 0, 2)).reshape(L * B, E)
    return pl.pallas_call(
        text_bilstm_kernel,
        out_shape=jax.ShapeDtypeStruct((B, C), jnp.float32),
        in_specs=[pl.BlockSpec(memory_space=pltpu.MemorySpace.VMEM)] * 13,
        out_specs=pl.BlockSpec(memory_space=pltpu.MemorySpace.VMEM),
        scratch_shapes=[pltpu.VMEM((L * B, H), jnp.float32),
                        pltpu.VMEM((L * B, H), jnp.float32)],
    )(x_tm, params['wih0'], params['whh0'], params['b0'],
      params['wih1'], params['whh1'], params['b1'],
      params['watt'], params['batt'], params['w1'], params['bfc1'],
      params['w2'], params['bfc2'])


# ----------------------------------------------------------------------------
# Deterministic parameter init (xavier_uniform weights, zero biases), packed
# into the fused layouts consumed by the kernel.
# ----------------------------------------------------------------------------
def xavier(key, shape):
    fan_out, fan_in = shape                    # torch convention (out, in)
    limit = (6.0 / (fan_in + fan_out)) ** 0.5
    return jax.random.uniform(key, shape, jnp.float32, -limit, limit)


def block_diag2(a, b):
    """[[a, 0], [0, b]]"""
    top = jnp.concatenate([a, jnp.zeros((a.shape[0], b.shape[1]), jnp.float32)],
                          axis=1)
    bot = jnp.concatenate([jnp.zeros((b.shape[0], a.shape[1]), jnp.float32), b],
                          axis=1)
    return jnp.concatenate([top, bot], axis=0)


def init_params(key, E, H, C):
    G = 4 * H
    p = {}
    # layer 0 (input size E)
    key, kfi, kfh, kbi, kbh = jax.random.split(key, 5)
    wih_f = xavier(kfi, (G, E)).T              # [E, 4H], gate cols i,f,g,o
    wih_b = xavier(kbi, (G, E)).T
    whh_f = xavier(kfh, (G, H)).T              # [H, 4H]
    whh_b = xavier(kbh, (G, H)).T
    p['wih0'] = jnp.concatenate([wih_f, wih_b], axis=1)            # [E, 8H]
    p['whh0'] = block_diag2(whh_f, whh_b)                          # [2H, 8H]
    p['b0'] = jnp.zeros((1, 2 * G), jnp.float32)
    # layer 1 (input size 2H = concat(fwd, bwd))
    key, kfi, kfh, kbi, kbh = jax.random.split(key, 5)
    wih_f = xavier(kfi, (G, 2 * H)).T          # [2H, 4H]
    wih_b = xavier(kbi, (G, 2 * H)).T
    whh_f = xavier(kfh, (G, H)).T
    whh_b = xavier(kbh, (G, H)).T
    wih1_full = jnp.concatenate([wih_f, wih_b], axis=1)            # [2H, 8H]
    p['wih1'] = jnp.stack([wih1_full[:H], wih1_full[H:]], axis=0)  # [2, H, 8H]
    p['whh1'] = block_diag2(whh_f, whh_b)                          # [2H, 8H]
    p['b1'] = jnp.zeros((1, 2 * G), jnp.float32)
    # attention + fc
    key, ka, k1, k2 = jax.random.split(key, 4)
    p['watt'] = xavier(ka, (H, H)).T
    p['batt'] = jnp.zeros((1, H), jnp.float32)
    p['w1'] = xavier(k1, (H, H)).T
    p['bfc1'] = jnp.zeros((1, H), jnp.float32)
    p['w2'] = xavier(k2, (C, H)).T                                 # [H, C]
    p['bfc2'] = jnp.zeros((1, C), jnp.float32)
    return p


# ----------------------------------------------------------------------------
# Pure numpy reference (same math, host f32, per-direction weights) for a
# sanity check of the fused/packed kernel.
# ----------------------------------------------------------------------------
def ref_forward(x, params):
    x = np.asarray(x, np.float32)
    B, L, E = x.shape
    H = np.asarray(params['watt']).shape[0]
    G = 4 * H
    wih0 = np.asarray(params['wih0']); b0 = np.asarray(params['b0'])
    wih1 = np.asarray(params['wih1']); b1 = np.asarray(params['b1'])
    whh0 = np.asarray(params['whh0']); whh1 = np.asarray(params['whh1'])
    whh0_f, whh0_b = whh0[:H, :G], whh0[H:, G:]     # unpack block-diagonal
    whh1_f, whh1_b = whh1[:H, :G], whh1[H:, G:]

    def sig(z):
        return 1.0 / (1.0 + np.exp(-z))

    def run_dir(proj, col0, whh, reverse):
        h = np.zeros((B, H), np.float32)
        c = np.zeros((B, H), np.float32)
        outs = [None] * L
        order = range(L - 1, -1, -1) if reverse else range(L)
        for t in order:
            gates = proj[t * B:(t + 1) * B, col0:col0 + G] + h @ whh
            i = sig(gates[:, :H]); f = sig(gates[:, H:2 * H])
            g = np.tanh(gates[:, 2 * H:3 * H]); o = sig(gates[:, 3 * H:])
            c = f * c + i * g
            h = o * np.tanh(c)
            outs[t] = h
        return outs, h

    x_tm = np.transpose(x, (1, 0, 2)).reshape(L * B, E)
    proj0 = x_tm @ wih0 + b0
    outs0f, hf0 = run_dir(proj0, 0, whh0_f, False)
    outs0b, hb0 = run_dir(proj0, G, whh0_b, True)

    m_f = np.concatenate(outs0f, axis=0)
    m_b = np.concatenate(outs0b, axis=0)
    proj1 = m_f @ wih1[0] + m_b @ wih1[1] + b1
    outs1f, hf1 = run_dir(proj1, 0, whh1_f, False)
    outs1b, hb1 = run_dir(proj1, G, whh1_b, True)

    hidden = hf0 + hb0 + hf1 + hb1
    watt = np.asarray(params['watt']); batt = np.asarray(params['batt'])
    w1 = np.asarray(params['w1']); bfc1 = np.asarray(params['bfc1'])
    w2 = np.asarray(params['w2']); bfc2 = np.asarray(params['bfc2'])

    atten_w = np.maximum(hidden @ watt + batt, 0.0)                   # [B, H]
    h_att = np.stack([outs1f[t] + outs1b[t] for t in range(L)], 1)    # [B, L, H]
    m = np.tanh(h_att)
    scores = np.einsum('bh,blh->bl', atten_w, m)
    scores = scores - scores.max(-1, keepdims=True)
    sm = np.exp(scores); sm = sm / sm.sum(-1, keepdims=True)
    context = np.einsum('bl,blh->bh', sm, h_att)
    z = np.maximum(context @ w1 + bfc1, 0.0)
    logits = z @ w2 + bfc2
    logits = logits - logits.max(-1, keepdims=True)
    out = np.exp(logits)
    return out / out.sum(-1, keepdims=True)


if __name__ == "__main__":
    # Small, module-consistent shapes: batch=2, seq=8, embed=64, hidden=32,
    # rnn_layers=2, bidirectional=True, num_classes=2.
    B, L, E, H, C = 2, 8, 64, 32, 2

    key = jax.random.PRNGKey(0)
    key, xk = jax.random.split(key)
    x = jax.random.normal(xk, (B, L, E), dtype=jnp.float32)
    params = init_params(key, E, H, C)

    fwd = jax.jit(text_bilstm_forward)
    out = jax.block_until_ready(fwd(x, params))
    assert out.shape == (B, C), out.shape

    ref = ref_forward(np.asarray(x), params)
    # loose tolerance: in-kernel MXU f32 matmuls may use reduced-precision passes
    np.testing.assert_allclose(np.asarray(out), ref, rtol=1e-2, atol=1e-2)

    print("KERNEL_OK")
</pallas_src>

<mosaic_0001>
module attributes {stable_mosaic.version = 11 : i64} {
  func.func @text_bilstm_kernel(%arg0: memref<16x64xf32, #tpu.memory_space<vmem>>, %arg1: memref<64x256xf32, #tpu.memory_space<vmem>>, %arg2: memref<64x256xf32, #tpu.memory_space<vmem>>, %arg3: memref<1x256xf32, #tpu.memory_space<vmem>>, %arg4: memref<2x32x256xf32, #tpu.memory_space<vmem>>, %arg5: memref<64x256xf32, #tpu.memory_space<vmem>>, %arg6: memref<1x256xf32, #tpu.memory_space<vmem>>, %arg7: memref<32x32xf32, #tpu.memory_space<vmem>>, %arg8: memref<1x32xf32, #tpu.memory_space<vmem>>, %arg9: memref<32x32xf32, #tpu.memory_space<vmem>>, %arg10: memref<1x32xf32, #tpu.memory_space<vmem>>, %arg11: memref<32x2xf32, #tpu.memory_space<vmem>>, %arg12: memref<1x2xf32, #tpu.memory_space<vmem>>, %arg13: memref<2x2xf32, #tpu.memory_space<vmem>>, %arg14: memref<16x32xf32, #tpu.memory_space<vmem>>, %arg15: memref<16x32xf32, #tpu.memory_space<vmem>>) attributes {dimension_semantics = [], scalar_prefetch = 0 : i64, scratch_operands = 2 : i64, tpu.core_type = #tpu.core_type<tc>} {
    %c0 = arith.constant 0 : index
    %c0_0 = arith.constant 0 : index
    %0 = vector.load %arg0[%c0, %c0_0] : memref<16x64xf32, #tpu.memory_space<vmem>>, vector<16x64xf32>
    %c0_1 = arith.constant 0 : index
    %c0_2 = arith.constant 0 : index
    %1 = vector.load %arg1[%c0_1, %c0_2] : memref<64x256xf32, #tpu.memory_space<vmem>>, vector<64x256xf32>
    %cst = arith.constant dense<0.000000e+00> : vector<16x256xf32>
    %2 = tpu.matmul %0, %1, %cst {dimension_numbers = #tpu.dot_dimension_numbers<[1], [0], [0], [1], [0, 0, 1, 1], [], []>} : vector<16x64xf32>, vector<64x256xf32>, vector<16x256xf32> -> vector<16x256xf32>
    %c0_3 = arith.constant 0 : index
    %c0_4 = arith.constant 0 : index
    %3 = vector.load %arg3[%c0_3, %c0_4] : memref<1x256xf32, #tpu.memory_space<vmem>>, vector<1x256xf32>
    %4 = vector.broadcast %3 : vector<1x256xf32> to vector<16x256xf32>
    %5 = arith.addf %2, %4 : vector<16x256xf32>
    %c0_5 = arith.constant 0 : index
    %c0_6 = arith.constant 0 : index
    %6 = vector.load %arg2[%c0_5, %c0_6] : memref<64x256xf32, #tpu.memory_space<vmem>>, vector<64x256xf32>
    %cst_7 = arith.constant 0.000000e+00 : f32
    %7 = vector.broadcast %cst_7 : f32 to vector<2x32xf32>
    %cst_8 = arith.constant 0.000000e+00 : f32
    %8 = vector.broadcast %cst_8 : f32 to vector<2x32xf32>
    %cst_9 = arith.constant 0.000000e+00 : f32
    %9 = vector.broadcast %cst_9 : f32 to vector<2x32xf32>
    %cst_10 = arith.constant 0.000000e+00 : f32
    %10 = vector.broadcast %cst_10 : f32 to vector<2x32xf32>
    %11 = tpu.concatenate %7, %9 in 1 : vector<2x32xf32>, vector<2x32xf32> -> vector<2x64xf32>
    %cst_11 = arith.constant dense<0.000000e+00> : vector<2x256xf32>
    %12 = tpu.matmul %11, %6, %cst_11 {dimension_numbers = #tpu.dot_dimension_numbers<[1], [0], [0], [1], [0, 0, 1, 1], [], []>} : vector<2x64xf32>, vector<64x256xf32>, vector<2x256xf32> -> vector<2x256xf32>
    %13 = vector.extract_strided_slice %5 {offsets = [0, 0], sizes = [2, 128], strides = [1, 1]} : vector<16x256xf32> to vector<2x128xf32>
    %14 = vector.extract_strided_slice %12 {offsets = [0, 0], sizes = [2, 128], strides = [1, 1]} : vector<2x256xf32> to vector<2x128xf32>
    %15 = arith.addf %13, %14 : vector<2x128xf32>
    %16 = vector.extract_strided_slice %5 {offsets = [14, 128], sizes = [2, 128], strides = [1, 1]} : vector<16x256xf32> to vector<2x128xf32>
    %17 = vector.extract_strided_slice %12 {offsets = [0, 128], sizes = [2, 128], strides = [1, 1]} : vector<2x256xf32> to vector<2x128xf32>
    %18 = arith.addf %16, %17 : vector<2x128xf32>
    %19 = arith.negf %15 : vector<2x128xf32>
    %20 = math.exp %19 : vector<2x128xf32>
    %cst_12 = arith.constant 1.000000e+00 : f32
    %21 = vector.broadcast %cst_12 : f32 to vector<2x128xf32>
    %22 = arith.addf %21, %20 : vector<2x128xf32>
    %23 = arith.divf %21, %22 : vector<2x128xf32>
    %24 = math.tanh %15 : vector<2x128xf32>
    %25 = vector.extract_strided_slice %23 {offsets = [0, 32], sizes = [2, 32], strides = [1, 1]} : vector<2x128xf32> to vector<2x32xf32>
    %26 = arith.mulf %25, %8 : vector<2x32xf32>
    %27 = vector.extract_strided_slice %23 {offsets = [0, 0], sizes = [2, 32], strides = [1, 1]} : vector<2x128xf32> to vector<2x32xf32>
    %28 = vector.extract_strided_slice %24 {offsets = [0, 64], sizes = [2, 32], strides = [1, 1]} : vector<2x128xf32> to vector<2x32xf32>
    %29 = arith.mulf %27, %28 : vector<2x32xf32>
    %30 = arith.addf %26, %29 : vector<2x32xf32>
    %31 = vector.extract_strided_slice %23 {offsets = [0, 96], sizes = [2, 32], strides = [1, 1]} : vector<2x128xf32> to vector<2x32xf32>
    %32 = math.tanh %30 : vector<2x32xf32>
    %33 = arith.mulf %31, %32 : vector<2x32xf32>
    %34 = arith.negf %18 : vector<2x128xf32>
    %35 = math.exp %34 : vector<2x128xf32>
    %cst_13 = arith.constant 1.000000e+00 : f32
    %36 = vector.broadcast %cst_13 : f32 to vector<2x128xf32>
    %37 = arith.addf %36, %35 : vector<2x128xf32>
    %38 = arith.divf %36, %37 : vector<2x128xf32>
    %39 = math.tanh %18 : vector<2x128xf32>
    %40 = vector.extract_strided_slice %38 {offsets = [0, 32], sizes = [2, 32], strides = [1, 1]} : vector<2x128xf32> to vector<2x32xf32>
    %41 = arith.mulf %40, %10 : vector<2x32xf32>
    %42 = vector.extract_strided_slice %38 {offsets = [0, 0], sizes = [2, 32], strides = [1, 1]} : vector<2x128xf32> to vector<2x32xf32>
    %43 = vector.extract_strided_slice %39 {offsets = [0, 64], sizes = [2, 32], strides = [1, 1]} : vector<2x128xf32> to vector<2x32xf32>
    %44 = arith.mulf %42, %43 : vector<2x32xf32>
    %45 = arith.addf %41, %44 : vector<2x32xf32>
    %46 = vector.extract_strided_slice %38 {offsets = [0, 96], sizes = [2, 32], strides = [1, 1]} : vector<2x128xf32> to vector<2x32xf32>
    %47 = math.tanh %45 : vector<2x32xf32>
    %48 = arith.mulf %46, %47 : vector<2x32xf32>
    %c0_14 = arith.constant 0 : index
    %c0_15 = arith.constant 0 : index
    %49 = vector.load %arg14[%c0_14, %c0_15] : memref<16x32xf32, #tpu.memory_space<vmem>>, vector<2x32xf32>
    tpu.vector_store %arg14[%c0_14, %c0_15], %33 {strides = array<i32>} : memref<16x32xf32, #tpu.memory_space<vmem>>, vector<2x32xf32>,
    %c14 = arith.constant 14 : index
    %c0_16 = arith.constant 0 : index
    %50 = vector.load %arg15[%c14, %c0_16] : memref<16x32xf32, #tpu.memory_space<vmem>>, vector<2x32xf32>
    tpu.vector_store %arg15[%c14, %c0_16], %48 {strides = array<i32>} : memref<16x32xf32, #tpu.memory_space<vmem>>, vector<2x32xf32>,
    %51 = tpu.concatenate %33, %48 in 1 : vector<2x32xf32>, vector<2x32xf32> -> vector<2x64xf32>
    %cst_17 = arith.constant dense<0.000000e+00> : vector<2x256xf32>
    %52 = tpu.matmul %51, %6, %cst_17 {dimension_numbers = #tpu.dot_dimension_numbers<[1], [0], [0], [1], [0, 0, 1, 1], [], []>} : vector<2x64xf32>, vector<64x256xf32>, vector<2x256xf32> -> vector<2x256xf32>
    %53 = vector.extract_strided_slice %5 {offsets = [2, 0], sizes = [2, 128], strides = [1, 1]} : vector<16x256xf32> to vector<2x128xf32>
    %54 = vector.extract_strided_slice %52 {offsets = [0, 0], sizes = [2, 128], strides = [1, 1]} : vector<2x256xf32> to vector<2x128xf32>
    %55 = arith.addf %53, %54 : vector<2x128xf32>
    %56 = vector.extract_strided_slice %5 {offsets = [12, 128], sizes = [2, 128], strides = [1, 1]} : vector<16x256xf32> to vector<2x128xf32>
    %57 = vector.extract_strided_slice %52 {offsets = [0, 128], sizes = [2, 128], strides = [1, 1]} : vector<2x256xf32> to vector<2x128xf32>
    %58 = arith.addf %56, %57 : vector<2x128xf32>
    %59 = arith.negf %55 : vector<2x128xf32>
    %60 = math.exp %59 : vector<2x128xf32>
    %cst_18 = arith.constant 1.000000e+00 : f32
    %61 = vector.broadcast %cst_18 : f32 to vector<2x128xf32>
    %62 = arith.addf %61, %60 : vector<2x128xf32>
    %63 = arith.divf %61, %62 : vector<2x128xf32>
    %64 = math.tanh %55 : vector<2x128xf32>
    %65 = vector.extract_strided_slice %63 {offsets = [0, 32], sizes = [2, 32], strides = [1, 1]} : vector<2x128xf32> to vector<2x32xf32>
    %66 = arith.mulf %65, %30 : vector<2x32xf32>
    %67 = vector.extract_strided_slice %63 {offsets = [0, 0], sizes = [2, 32], strides = [1, 1]} : vector<2x128xf32> to vector<2x32xf32>
    %68 = vector.extract_strided_slice %64 {offsets = [0, 64], sizes = [2, 32], strides = [1, 1]} : vector<2x128xf32> to vector<2x32xf32>
    %69 = arith.mulf %67, %68 : vector<2x32xf32>
    %70 = arith.addf %66, %69 : vector<2x32xf32>
    %71 = vector.extract_strided_slice %63 {offsets = [0, 96], sizes = [2, 32], strides = [1, 1]} : vector<2x128xf32> to vector<2x32xf32>
    %72 = math.tanh %70 : vector<2x32xf32>
    %73 = arith.mulf %71, %72 : vector<2x32xf32>
    %74 = arith.negf %58 : vector<2x128xf32>
    %75 = math.exp %74 : vector<2x128xf32>
    %cst_19 = arith.constant 1.000000e+00 : f32
    %76 = vector.broadcast %cst_19 : f32 to vector<2x128xf32>
    %77 = arith.addf %76, %75 : vector<2x128xf32>
    %78 = arith.divf %76, %77 : vector<2x128xf32>
    %79 = math.tanh %58 : vector<2x128xf32>
    %80 = vector.extract_strided_slice %78 {offsets = [0, 32], sizes = [2, 32], strides = [1, 1]} : vector<2x128xf32> to vector<2x32xf32>
    %81 = arith.mulf %80, %45 : vector<2x32xf32>
    %82 = vector.extract_strided_slice %78 {offsets = [0, 0], sizes = [2, 32], strides = [1, 1]} : vector<2x128xf32> to vector<2x32xf32>
    %83 = vector.extract_strided_slice %79 {offsets = [0, 64], sizes = [2, 32], strides = [1, 1]} : vector<2x128xf32> to vector<2x32xf32>
    %84 = arith.mulf %82, %83 : vector<2x32xf32>
    %85 = arith.addf %81, %84 : vector<2x32xf32>
    %86 = vector.extract_strided_slice %78 {offsets = [0, 96], sizes = [2, 32], strides = [1, 1]} : vector<2x128xf32> to vector<2x32xf32>
    %87 = math.tanh %85 : vector<2x32xf32>
    %88 = arith.mulf %86, %87 : vector<2x32xf32>
    %c2 = arith.constant 2 : index
    %c0_20 = arith.constant 0 : index
    %89 = vector.load %arg14[%c2, %c0_20] : memref<16x32xf32, #tpu.memory_space<vmem>>, vector<2x32xf32>
    tpu.vector_store %arg14[%c2, %c0_20], %73 {strides = array<i32>} : memref<16x32xf32, #tpu.memory_space<vmem>>, vector<2x32xf32>,
    %c12 = arith.constant 12 : index
    %c0_21 = arith.constant 0 : index
    %90 = vector.load %arg15[%c12, %c0_21] : memref<16x32xf32, #tpu.memory_space<vmem>>, vector<2x32xf32>
    tpu.vector_store %arg15[%c12, %c0_21], %88 {strides = array<i32>} : memref<16x32xf32, #tpu.memory_space<vmem>>, vector<2x32xf32>,
    %91 = tpu.concatenate %73, %88 in 1 : vector<2x32xf32>, vector<2x32xf32> -> vector<2x64xf32>
    %cst_22 = arith.constant dense<0.000000e+00> : vector<2x256xf32>
    %92 = tpu.matmul %91, %6, %cst_22 {dimension_numbers = #tpu.dot_dimension_numbers<[1], [0], [0], [1], [0, 0, 1, 1], [], []>} : vector<2x64xf32>, vector<64x256xf32>, vector<2x256xf32> -> vector<2x256xf32>
    %93 = vector.extract_strided_slice %5 {offsets = [4, 0], sizes = [2, 128], strides = [1, 1]} : vector<16x256xf32> to vector<2x128xf32>
    %94 = vector.extract_strided_slice %92 {offsets = [0, 0], sizes = [2, 128], strides = [1, 1]} : vector<2x256xf32> to vector<2x128xf32>
    %95 = arith.addf %93, %94 : vector<2x128xf32>
    %96 = vector.extract_strided_slice %5 {offsets = [10, 128], sizes = [2, 128], strides = [1, 1]} : vector<16x256xf32> to vector<2x128xf32>
    %97 = vector.extract_strided_slice %92 {offsets = [0, 128], sizes = [2, 128], strides = [1, 1]} : vector<2x256xf32> to vector<2x128xf32>
    %98 = arith.addf %96, %97 : vector<2x128xf32>
    %99 = arith.negf %95 : vector<2x128xf32>
    %100 = math.exp %99 : vector<2x128xf32>
    %cst_23 = arith.constant 1.000000e+00 : f32
    %101 = vector.broadcast %cst_23 : f32 to vector<2x128xf32>
    %102 = arith.addf %101, %100 : vector<2x128xf32>
    %103 = arith.divf %101, %102 : vector<2x128xf32>
    %104 = math.tanh %95 : vector<2x128xf32>
    %105 = vector.extract_strided_slice %103 {offsets = [0, 32], sizes = [2, 32], strides = [1, 1]} : vector<2x128xf32> to vector<2x32xf32>
    %106 = arith.mulf %105, %70 : vector<2x32xf32>
    %107 = vector.extract_strided_slice %103 {offsets = [0, 0], sizes = [2, 32], strides = [1, 1]} : vector<2x128xf32> to vector<2x32xf32>
    %108 = vector.extract_strided_slice %104 {offsets = [0, 64], sizes = [2, 32], strides = [1, 1]} : vector<2x128xf32> to vector<2x32xf32>
    %109 = arith.mulf %107, %108 : vector<2x32xf32>
    %110 = arith.addf %106, %109 : vector<2x32xf32>
    %111 = vector.extract_strided_slice %103 {offsets = [0, 96], sizes = [2, 32], strides = [1, 1]} : vector<2x128xf32> to vector<2x32xf32>
    %112 = math.tanh %110 : vector<2x32xf32>
    %113 = arith.mulf %111, %112 : vector<2x32xf32>
    %114 = arith.negf %98 : vector<2x128xf32>
    %115 = math.exp %114 : vector<2x128xf32>
    %cst_24 = arith.constant 1.000000e+00 : f32
    %116 = vector.broadcast %cst_24 : f32 to vector<2x128xf32>
    %117 = arith.addf %116, %115 : vector<2x128xf32>
    %118 = arith.divf %116, %117 : vector<2x128xf32>
    %119 = math.tanh %98 : vector<2x128xf32>
    %120 = vector.extract_strided_slice %118 {offsets = [0, 32], sizes = [2, 32], strides = [1, 1]} : vector<2x128xf32> to vector<2x32xf32>
    %121 = arith.mulf %120, %85 : vector<2x32xf32>
    %122 = vector.extract_strided_slice %118 {offsets = [0, 0], sizes = [2, 32], strides = [1, 1]} : vector<2x128xf32> to vector<2x32xf32>
    %123 = vector.extract_strided_slice %119 {offsets = [0, 64], sizes = [2, 32], strides = [1, 1]} : vector<2x128xf32> to vector<2x32xf32>
    %124 = arith.mulf %122, %123 : vector<2x32xf32>
    %125 = arith.addf %121, %124 : vector<2x32xf32>
    %126 = vector.extract_strided_slice %118 {offsets = [0, 96], sizes = [2, 32], strides = [1, 1]} : vector<2x128xf32> to vector<2x32xf32>
    %127 = math.tanh %125 : vector<2x32xf32>
    %128 = arith.mulf %126, %127 : vector<2x32xf32>
    %c4 = arith.constant 4 : index
    %c0_25 = arith.constant 0 : index
    %129 = vector.load %arg14[%c4, %c0_25] : memref<16x32xf32, #tpu.memory_space<vmem>>, vector<2x32xf32>
    tpu.vector_store %arg14[%c4, %c0_25], %113 {strides = array<i32>} : memref<16x32xf32, #tpu.memory_space<vmem>>, vector<2x32xf32>,
    %c10 = arith.constant 10 : index
    %c0_26 = arith.constant 0 : index
    %130 = vector.load %arg15[%c10, %c0_26] : memref<16x32xf32, #tpu.memory_space<vmem>>, vector<2x32xf32>
    tpu.vector_store %arg15[%c10, %c0_26], %128 {strides = array<i32>} : memref<16x32xf32, #tpu.memory_space<vmem>>, vector<2x32xf32>,
    %131 = tpu.concatenate %113, %128 in 1 : vector<2x32xf32>, vector<2x32xf32> -> vector<2x64xf32>
    %cst_27 = arith.constant dense<0.000000e+00> : vector<2x256xf32>
    %132 = tpu.matmul %131, %6, %cst_27 {dimension_numbers = #tpu.dot_dimension_numbers<[1], [0], [0], [1], [0, 0, 1, 1], [], []>} : vector<2x64xf32>, vector<64x256xf32>, vector<2x256xf32> -> vector<2x256xf32>
    %133 = vector.extract_strided_slice %5 {offsets = [6, 0], sizes = [2, 128], strides = [1, 1]} : vector<16x256xf32> to vector<2x128xf32>
    %134 = vector.extract_strided_slice %132 {offsets = [0, 0], sizes = [2, 128], strides = [1, 1]} : vector<2x256xf32> to vector<2x128xf32>
    %135 = arith.addf %133, %134 : vector<2x128xf32>
    %136 = vector.extract_strided_slice %5 {offsets = [8, 128], sizes = [2, 128], strides = [1, 1]} : vector<16x256xf32> to vector<2x128xf32>
    %137 = vector.extract_strided_slice %132 {offsets = [0, 128], sizes = [2, 128], strides = [1, 1]} : vector<2x256xf32> to vector<2x128xf32>
    %138 = arith.addf %136, %137 : vector<2x128xf32>
    %139 = arith.negf %135 : vector<2x128xf32>
    %140 = math.exp %139 : vector<2x128xf32>
    %cst_28 = arith.constant 1.000000e+00 : f32
    %141 = vector.broadcast %cst_28 : f32 to vector<2x128xf32>
    %142 = arith.addf %141, %140 : vector<2x128xf32>
    %143 = arith.divf %141, %142 : vector<2x128xf32>
    %144 = math.tanh %135 : vector<2x128xf32>
    %145 = vector.extract_strided_slice %143 {offsets = [0, 32], sizes = [2, 32], strides = [1, 1]} : vector<2x128xf32> to vector<2x32xf32>
    %146 = arith.mulf %145, %110 : vector<2x32xf32>
    %147 = vector.extract_strided_slice %143 {offsets = [0, 0], sizes = [2, 32], strides = [1, 1]} : vector<2x128xf32> to vector<2x32xf32>
    %148 = vector.extract_strided_slice %144 {offsets = [0, 64], sizes = [2, 32], strides = [1, 1]} : vector<2x128xf32> to vector<2x32xf32>
    %149 = arith.mulf %147, %148 : vector<2x32xf32>
    %150 = arith.addf %146, %149 : vector<2x32xf32>
    %151 = vector.extract_strided_slice %143 {offsets = [0, 96], sizes = [2, 32], strides = [1, 1]} : vector<2x128xf32> to vector<2x32xf32>
    %152 = math.tanh %150 : vector<2x32xf32>
    %153 = arith.mulf %151, %152 : vector<2x32xf32>
    %154 = arith.negf %138 : vector<2x128xf32>
    %155 = math.exp %154 : vector<2x128xf32>
    %cst_29 = arith.constant 1.000000e+00 : f32
    %156 = vector.broadcast %cst_29 : f32 to vector<2x128xf32>
    %157 = arith.addf %156, %155 : vector<2x128xf32>
    %158 = arith.divf %156, %157 : vector<2x128xf32>
    %159 = math.tanh %138 : vector<2x128xf32>
    %160 = vector.extract_strided_slice %158 {offsets = [0, 32], sizes = [2, 32], strides = [1, 1]} : vector<2x128xf32> to vector<2x32xf32>
    %161 = arith.mulf %160, %125 : vector<2x32xf32>
    %162 = vector.extract_strided_slice %158 {offsets = [0, 0], sizes = [2, 32], strides = [1, 1]} : vector<2x128xf32> to vector<2x32xf32>
    %163 = vector.extract_strided_slice %159 {offsets = [0, 64], sizes = [2, 32], strides = [1, 1]} : vector<2x128xf32> to vector<2x32xf32>
    %164 = arith.mulf %162, %163 : vector<2x32xf32>
    %165 = arith.addf %161, %164 : vector<2x32xf32>
    %166 = vector.extract_strided_slice %158 {offsets = [0, 96], sizes = [2, 32], strides = [1, 1]} : vector<2x128xf32> to vector<2x32xf32>
    %167 = math.tanh %165 : vector<2x32xf32>
    %168 = arith.mulf %166, %167 : vector<2x32xf32>
    %c6 = arith.constant 6 : index
    %c0_30 = arith.constant 0 : index
    %169 = vector.load %arg14[%c6, %c0_30] : memref<16x32xf32, #tpu.memory_space<vmem>>, vector<2x32xf32>
    tpu.vector_store %arg14[%c6, %c0_30], %153 {strides = array<i32>} : memref<16x32xf32, #tpu.memory_space<vmem>>, vector<2x32xf32>,
    %c8 = arith.constant 8 : index
    %c0_31 = arith.constant 0 : index
    %170 = vector.load %arg15[%c8, %c0_31] : memref<16x32xf32, #tpu.memory_space<vmem>>, vector<2x32xf32>
    tpu.vector_store %arg15[%c8, %c0_31], %168 {strides = array<i32>} : memref<16x32xf32, #tpu.memory_space<vmem>>, vector<2x32xf32>,
    %171 = tpu.concatenate %153, %168 in 1 : vector<2x32xf32>, vector<2x32xf32> -> vector<2x64xf32>
    %cst_32 = arith.constant dense<0.000000e+00> : vector<2x256xf32>
    %172 = tpu.matmul %171, %6, %cst_32 {dimension_numbers = #tpu.dot_dimension_numbers<[1], [0], [0], [1], [0, 0, 1, 1], [], []>} : vector<2x64xf32>, vector<64x256xf32>, vector<2x256xf32> -> vector<2x256xf32>
    %173 = vector.extract_strided_slice %5 {offsets = [8, 0], sizes = [2, 128], strides = [1, 1]} : vector<16x256xf32> to vector<2x128xf32>
    %174 = vector.extract_strided_slice %172 {offsets = [0, 0], sizes = [2, 128], strides = [1, 1]} : vector<2x256xf32> to vector<2x128xf32>
    %175 = arith.addf %173, %174 : vector<2x128xf32>
    %176 = vector.extract_strided_slice %5 {offsets = [6, 128], sizes = [2, 128], strides = [1, 1]} : vector<16x256xf32> to vector<2x128xf32>
    %177 = vector.extract_strided_slice %172 {offsets = [0, 128], sizes = [2, 128], strides = [1, 1]} : vector<2x256xf32> to vector<2x128xf32>
    %178 = arith.addf %176, %177 : vector<2x128xf32>
    %179 = arith.negf %175 : vector<2x128xf32>
    %180 = math.exp %179 : vector<2x128xf32>
    %cst_33 = arith.constant 1.000000e+00 : f32
    %181 = vector.broadcast %cst_33 : f32 to vector<2x128xf32>
    %182 = arith.addf %181, %180 : vector<2x128xf32>
    %183 = arith.divf %181, %182 : vector<2x128xf32>
    %184 = math.tanh %175 : vector<2x128xf32>
    %185 = vector.extract_strided_slice %183 {offsets = [0, 32], sizes = [2, 32], strides = [1, 1]} : vector<2x128xf32> to vector<2x32xf32>
    %186 = arith.mulf %185, %150 : vector<2x32xf32>
    %187 = vector.extract_strided_slice %183 {offsets = [0, 0], sizes = [2, 32], strides = [1, 1]} : vector<2x128xf32> to vector<2x32xf32>
    %188 = vector.extract_strided_slice %184 {offsets = [0, 64], sizes = [2, 32], strides = [1, 1]} : vector<2x128xf32> to vector<2x32xf32>
    %189 = arith.mulf %187, %188 : vector<2x32xf32>
    %190 = arith.addf %186, %189 : vector<2x32xf32>
    %191 = vector.extract_strided_slice %183 {offsets = [0, 96], sizes = [2, 32], strides = [1, 1]} : vector<2x128xf32> to vector<2x32xf32>
    %192 = math.tanh %190 : vector<2x32xf32>
    %193 = arith.mulf %191, %192 : vector<2x32xf32>
    %194 = arith.negf %178 : vector<2x128xf32>
    %195 = math.exp %194 : vector<2x128xf32>
    %cst_34 = arith.constant 1.000000e+00 : f32
    %196 = vector.broadcast %cst_34 : f32 to vector<2x128xf32>
    %197 = arith.addf %196, %195 : vector<2x128xf32>
    %198 = arith.divf %196, %197 : vector<2x128xf32>
    %199 = math.tanh %178 : vector<2x128xf32>
    %200 = vector.extract_strided_slice %198 {offsets = [0, 32], sizes = [2, 32], strides = [1, 1]} : vector<2x128xf32> to vector<2x32xf32>
    %201 = arith.mulf %200, %165 : vector<2x32xf32>
    %202 = vector.extract_strided_slice %198 {offsets = [0, 0], sizes = [2, 32], strides = [1, 1]} : vector<2x128xf32> to vector<2x32xf32>
    %203 = vector.extract_strided_slice %199 {offsets = [0, 64], sizes = [2, 32], strides = [1, 1]} : vector<2x128xf32> to vector<2x32xf32>
    %204 = arith.mulf %202, %203 : vector<2x32xf32>
    %205 = arith.addf %201, %204 : vector<2x32xf32>
    %206 = vector.extract_strided_slice %198 {offsets = [0, 96], sizes = [2, 32], strides = [1, 1]} : vector<2x128xf32> to vector<2x32xf32>
    %207 = math.tanh %205 : vector<2x32xf32>
    %208 = arith.mulf %206, %207 : vector<2x32xf32>
    %c8_35 = arith.constant 8 : index
    %c0_36 = arith.constant 0 : index
    %209 = vector.load %arg14[%c8_35, %c0_36] : memref<16x32xf32, #tpu.memory_space<vmem>>, vector<2x32xf32>
    tpu.vector_store %arg14[%c8_35, %c0_36], %193 {strides = array<i32>} : memref<16x32xf32, #tpu.memory_space<vmem>>, vector<2x32xf32>,
    %c6_37 = arith.constant 6 : index
    %c0_38 = arith.constant 0 : index
    %210 = vector.load %arg15[%c6_37, %c0_38] : memref<16x32xf32, #tpu.memory_space<vmem>>, vector<2x32xf32>
    tpu.vector_store %arg15[%c6_37, %c0_38], %208 {strides = array<i32>} : memref<16x32xf32, #tpu.memory_space<vmem>>, vector<2x32xf32>,
    %211 = tpu.concatenate %193, %208 in 1 : vector<2x32xf32>, vector<2x32xf32> -> vector<2x64xf32>
    %cst_39 = arith.constant dense<0.000000e+00> : vector<2x256xf32>
    %212 = tpu.matmul %211, %6, %cst_39 {dimension_numbers = #tpu.dot_dimension_numbers<[1], [0], [0], [1], [0, 0, 1, 1], [], []>} : vector<2x64xf32>, vector<64x256xf32>, vector<2x256xf32> -> vector<2x256xf32>
    %213 = vector.extract_strided_slice %5 {offsets = [10, 0], sizes = [2, 128], strides = [1, 1]} : vector<16x256xf32> to vector<2x128xf32>
    %214 = vector.extract_strided_slice %212 {offsets = [0, 0], sizes = [2, 128], strides = [1, 1]} : vector<2x256xf32> to vector<2x128xf32>
    %215 = arith.addf %213, %214 : vector<2x128xf32>
    %216 = vector.extract_strided_slice %5 {offsets = [4, 128], sizes = [2, 128], strides = [1, 1]} : vector<16x256xf32> to vector<2x128xf32>
    %217 = vector.extract_strided_slice %212 {offsets = [0, 128], sizes = [2, 128], strides = [1, 1]} : vector<2x256xf32> to vector<2x128xf32>
    %218 = arith.addf %216, %217 : vector<2x128xf32>
    %219 = arith.negf %215 : vector<2x128xf32>
    %220 = math.exp %219 : vector<2x128xf32>
    %cst_40 = arith.constant 1.000000e+00 : f32
    %221 = vector.broadcast %cst_40 : f32 to vector<2x128xf32>
    %222 = arith.addf %221, %220 : vector<2x128xf32>
    %223 = arith.divf %221, %222 : vector<2x128xf32>
    %224 = math.tanh %215 : vector<2x128xf32>
    %225 = vector.extract_strided_slice %223 {offsets = [0, 32], sizes = [2, 32], strides = [1, 1]} : vector<2x128xf32> to vector<2x32xf32>
    %226 = arith.mulf %225, %190 : vector<2x32xf32>
    %227 = vector.extract_strided_slice %223 {offsets = [0, 0], sizes = [2, 32], strides = [1, 1]} : vector<2x128xf32> to vector<2x32xf32>
    %228 = vector.extract_strided_slice %224 {offsets = [0, 64], sizes = [2, 32], strides = [1, 1]} : vector<2x128xf32> to vector<2x32xf32>
    %229 = arith.mulf %227, %228 : vector<2x32xf32>
    %230 = arith.addf %226, %229 : vector<2x32xf32>
    %231 = vector.extract_strided_slice %223 {offsets = [0, 96], sizes = [2, 32], strides = [1, 1]} : vector<2x128xf32> to vector<2x32xf32>
    %232 = math.tanh %230 : vector<2x32xf32>
    %233 = arith.mulf %231, %232 : vector<2x32xf32>
    %234 = arith.negf %218 : vector<2x128xf32>
    %235 = math.exp %234 : vector<2x128xf32>
    %cst_41 = arith.constant 1.000000e+00 : f32
    %236 = vector.broadcast %cst_41 : f32 to vector<2x128xf32>
    %237 = arith.addf %236, %235 : vector<2x128xf32>
    %238 = arith.divf %236, %237 : vector<2x128xf32>
    %239 = math.tanh %218 : vector<2x128xf32>
    %240 = vector.extract_strided_slice %238 {offsets = [0, 32], sizes = [2, 32], strides = [1, 1]} : vector<2x128xf32> to vector<2x32xf32>
    %241 = arith.mulf %240, %205 : vector<2x32xf32>
    %242 = vector.extract_strided_slice %238 {offsets = [0, 0], sizes = [2, 32], strides = [1, 1]} : vector<2x128xf32> to vector<2x32xf32>
    %243 = vector.extract_strided_slice %239 {offsets = [0, 64], sizes = [2, 32], strides = [1, 1]} : vector<2x128xf32> to vector<2x32xf32>
    %244 = arith.mulf %242, %243 : vector<2x32xf32>
    %245 = arith.addf %241, %244 : vector<2x32xf32>
    %246 = vector.extract_strided_slice %238 {offsets = [0, 96], sizes = [2, 32], strides = [1, 1]} : vector<2x128xf32> to vector<2x32xf32>
    %247 = math.tanh %245 : vector<2x32xf32>
    %248 = arith.mulf %246, %247 : vector<2x32xf32>
    %c10_42 = arith.constant 10 : index
    %c0_43 = arith.constant 0 : index
    %249 = vector.load %arg14[%c10_42, %c0_43] : memref<16x32xf32, #tpu.memory_space<vmem>>, vector<2x32xf32>
    tpu.vector_store %arg14[%c10_42, %c0_43], %233 {strides = array<i32>} : memref<16x32xf32, #tpu.memory_space<vmem>>, vector<2x32xf32>,
    %c4_44 = arith.constant 4 : index
    %c0_45 = arith.constant 0 : index
    %250 = vector.load %arg15[%c4_44, %c0_45] : memref<16x32xf32, #tpu.memory_space<vmem>>, vector<2x32xf32>
    tpu.vector_store %arg15[%c4_44, %c0_45], %248 {strides = array<i32>} : memref<16x32xf32, #tpu.memory_space<vmem>>, vector<2x32xf32>,
    %251 = tpu.concatenate %233, %248 in 1 : vector<2x32xf32>, vector<2x32xf32> -> vector<2x64xf32>
    %cst_46 = arith.constant dense<0.000000e+00> : vector<2x256xf32>
    %252 = tpu.matmul %251, %6, %cst_46 {dimension_numbers = #tpu.dot_dimension_numbers<[1], [0], [0], [1], [0, 0, 1, 1], [], []>} : vector<2x64xf32>, vector<64x256xf32>, vector<2x256xf32> -> vector<2x256xf32>
    %253 = vector.extract_strided_slice %5 {offsets = [12, 0], sizes = [2, 128], strides = [1, 1]} : vector<16x256xf32> to vector<2x128xf32>
    %254 = vector.extract_strided_slice %252 {offsets = [0, 0], sizes = [2, 128], strides = [1, 1]} : vector<2x256xf32> to vector<2x128xf32>
    %255 = arith.addf %253, %254 : vector<2x128xf32>
    %256 = vector.extract_strided_slice %5 {offsets = [2, 128], sizes = [2, 128], strides = [1, 1]} : vector<16x256xf32> to vector<2x128xf32>
    %257 = vector.extract_strided_slice %252 {offsets = [0, 128], sizes = [2, 128], strides = [1, 1]} : vector<2x256xf32> to vector<2x128xf32>
    %258 = arith.addf %256, %257 : vector<2x128xf32>
    %259 = arith.negf %255 : vector<2x128xf32>
    %260 = math.exp %259 : vector<2x128xf32>
    %cst_47 = arith.constant 1.000000e+00 : f32
    %261 = vector.broadcast %cst_47 : f32 to vector<2x128xf32>
    %262 = arith.addf %261, %260 : vector<2x128xf32>
    %263 = arith.divf %261, %262 : vector<2x128xf32>
    %264 = math.tanh %255 : vector<2x128xf32>
    %265 = vector.extract_strided_slice %263 {offsets = [0, 32], sizes = [2, 32], strides = [1, 1]} : vector<2x128xf32> to vector<2x32xf32>
    %266 = arith.mulf %265, %230 : vector<2x32xf32>
    %267 = vector.extract_strided_slice %263 {offsets = [0, 0], sizes = [2, 32], strides = [1, 1]} : vector<2x128xf32> to vector<2x32xf32>
    %268 = vector.extract_strided_slice %264 {offsets = [0, 64], sizes = [2, 32], strides = [1, 1]} : vector<2x128xf32> to vector<2x32xf32>
    %269 = arith.mulf %267, %268 : vector<2x32xf32>
    %270 = arith.addf %266, %269 : vector<2x32xf32>
    %271 = vector.extract_strided_slice %263 {offsets = [0, 96], sizes = [2, 32], strides = [1, 1]} : vector<2x128xf32> to vector<2x32xf32>
    %272 = math.tanh %270 : vector<2x32xf32>
    %273 = arith.mulf %271, %272 : vector<2x32xf32>
    %274 = arith.negf %258 : vector<2x128xf32>
    %275 = math.exp %274 : vector<2x128xf32>
    %cst_48 = arith.constant 1.000000e+00 : f32
    %276 = vector.broadcast %cst_48 : f32 to vector<2x128xf32>
    %277 = arith.addf %276, %275 : vector<2x128xf32>
    %278 = arith.divf %276, %277 : vector<2x128xf32>
    %279 = math.tanh %258 : vector<2x128xf32>
    %280 = vector.extract_strided_slice %278 {offsets = [0, 32], sizes = [2, 32], strides = [1, 1]} : vector<2x128xf32> to vector<2x32xf32>
    %281 = arith.mulf %280, %245 : vector<2x32xf32>
    %282 = vector.extract_strided_slice %278 {offsets = [0, 0], sizes = [2, 32], strides = [1, 1]} : vector<2x128xf32> to vector<2x32xf32>
    %283 = vector.extract_strided_slice %279 {offsets = [0, 64], sizes = [2, 32], strides = [1, 1]} : vector<2x128xf32> to vector<2x32xf32>
    %284 = arith.mulf %282, %283 : vector<2x32xf32>
    %285 = arith.addf %281, %284 : vector<2x32xf32>
    %286 = vector.extract_strided_slice %278 {offsets = [0, 96], sizes = [2, 32], strides = [1, 1]} : vector<2x128xf32> to vector<2x32xf32>
    %287 = math.tanh %285 : vector<2x32xf32>
    %288 = arith.mulf %286, %287 : vector<2x32xf32>
    %c12_49 = arith.constant 12 : index
    %c0_50 = arith.constant 0 : index
    %289 = vector.load %arg14[%c12_49, %c0_50] : memref<16x32xf32, #tpu.memory_space<vmem>>, vector<2x32xf32>
    tpu.vector_store %arg14[%c12_49, %c0_50], %273 {strides = array<i32>} : memref<16x32xf32, #tpu.memory_space<vmem>>, vector<2x32xf32>,
    %c2_51 = arith.constant 2 : index
    %c0_52 = arith.constant 0 : index
    %290 = vector.load %arg15[%c2_51, %c0_52] : memref<16x32xf32, #tpu.memory_space<vmem>>, vector<2x32xf32>
    tpu.vector_store %arg15[%c2_51, %c0_52], %288 {strides = array<i32>} : memref<16x32xf32, #tpu.memory_space<vmem>>, vector<2x32xf32>,
    %291 = tpu.concatenate %273, %288 in 1 : vector<2x32xf32>, vector<2x32xf32> -> vector<2x64xf32>
    %cst_53 = arith.constant dense<0.000000e+00> : vector<2x256xf32>
    %292 = tpu.matmul %291, %6, %cst_53 {dimension_numbers = #tpu.dot_dimension_numbers<[1], [0], [0], [1], [0, 0, 1, 1], [], []>} : vector<2x64xf32>, vector<64x256xf32>, vector<2x256xf32> -> vector<2x256xf32>
    %293 = vector.extract_strided_slice %5 {offsets = [14, 0], sizes = [2, 128], strides = [1, 1]} : vector<16x256xf32> to vector<2x128xf32>
    %294 = vector.extract_strided_slice %292 {offsets = [0, 0], sizes = [2, 128], strides = [1, 1]} : vector<2x256xf32> to vector<2x128xf32>
    %295 = arith.addf %293, %294 : vector<2x128xf32>
    %296 = vector.extract_strided_slice %5 {offsets = [0, 128], sizes = [2, 128], strides = [1, 1]} : vector<16x256xf32> to vector<2x128xf32>
    %297 = vector.extract_strided_slice %292 {offsets = [0, 128], sizes = [2, 128], strides = [1, 1]} : vector<2x256xf32> to vector<2x128xf32>
    %298 = arith.addf %296, %297 : vector<2x128xf32>
    %299 = arith.negf %295 : vector<2x128xf32>
    %300 = math.exp %299 : vector<2x128xf32>
    %cst_54 = arith.constant 1.000000e+00 : f32
    %301 = vector.broadcast %cst_54 : f32 to vector<2x128xf32>
    %302 = arith.addf %301, %300 : vector<2x128xf32>
    %303 = arith.divf %301, %302 : vector<2x128xf32>
    %304 = math.tanh %295 : vector<2x128xf32>
    %305 = vector.extract_strided_slice %303 {offsets = [0, 32], sizes = [2, 32], strides = [1, 1]} : vector<2x128xf32> to vector<2x32xf32>
    %306 = arith.mulf %305, %270 : vector<2x32xf32>
    %307 = vector.extract_strided_slice %303 {offsets = [0, 0], sizes = [2, 32], strides = [1, 1]} : vector<2x128xf32> to vector<2x32xf32>
    %308 = vector.extract_strided_slice %304 {offsets = [0, 64], sizes = [2, 32], strides = [1, 1]} : vector<2x128xf32> to vector<2x32xf32>
    %309 = arith.mulf %307, %308 : vector<2x32xf32>
    %310 = arith.addf %306, %309 : vector<2x32xf32>
    %311 = vector.extract_strided_slice %303 {offsets = [0, 96], sizes = [2, 32], strides = [1, 1]} : vector<2x128xf32> to vector<2x32xf32>
    %312 = math.tanh %310 : vector<2x32xf32>
    %313 = arith.mulf %311, %312 : vector<2x32xf32>
    %314 = arith.negf %298 : vector<2x128xf32>
    %315 = math.exp %314 : vector<2x128xf32>
    %cst_55 = arith.constant 1.000000e+00 : f32
    %316 = vector.broadcast %cst_55 : f32 to vector<2x128xf32>
    %317 = arith.addf %316, %315 : vector<2x128xf32>
    %318 = arith.divf %316, %317 : vector<2x128xf32>
    %319 = math.tanh %298 : vector<2x128xf32>
    %320 = vector.extract_strided_slice %318 {offsets = [0, 32], sizes = [2, 32], strides = [1, 1]} : vector<2x128xf32> to vector<2x32xf32>
    %321 = arith.mulf %320, %285 : vector<2x32xf32>
    %322 = vector.extract_strided_slice %318 {offsets = [0, 0], sizes = [2, 32], strides = [1, 1]} : vector<2x128xf32> to vector<2x32xf32>
    %323 = vector.extract_strided_slice %319 {offsets = [0, 64], sizes = [2, 32], strides = [1, 1]} : vector<2x128xf32> to vector<2x32xf32>
    %324 = arith.mulf %322, %323 : vector<2x32xf32>
    %325 = arith.addf %321, %324 : vector<2x32xf32>
    %326 = vector.extract_strided_slice %318 {offsets = [0, 96], sizes = [2, 32], strides = [1, 1]} : vector<2x128xf32> to vector<2x32xf32>
    %327 = math.tanh %325 : vector<2x32xf32>
    %328 = arith.mulf %326, %327 : vector<2x32xf32>
    %c14_56 = arith.constant 14 : index
    %c0_57 = arith.constant 0 : index
    %329 = vector.load %arg14[%c14_56, %c0_57] : memref<16x32xf32, #tpu.memory_space<vmem>>, vector<2x32xf32>
    tpu.vector_store %arg14[%c14_56, %c0_57], %313 {strides = array<i32>} : memref<16x32xf32, #tpu.memory_space<vmem>>, vector<2x32xf32>,
    %c0_58 = arith.constant 0 : index
    %c0_59 = arith.constant 0 : index
    %330 = vector.load %arg15[%c0_58, %c0_59] : memref<16x32xf32, #tpu.memory_space<vmem>>, vector<2x32xf32>
    tpu.vector_store %arg15[%c0_58, %c0_59], %328 {strides = array<i32>} : memref<16x32xf32, #tpu.memory_space<vmem>>, vector<2x32xf32>,
    %c0_60 = arith.constant 0 : index
    %c0_61 = arith.constant 0 : index
    %331 = vector.load %arg14[%c0_60, %c0_61] : memref<16x32xf32, #tpu.memory_space<vmem>>, vector<16x32xf32>
    %c0_62 = arith.constant 0 : index
    %c0_63 = arith.constant 0 : index
    %c0_64 = arith.constant 0 : index
    %332 = vector.load %arg4[%c0_62, %c0_63, %c0_64] : memref<2x32x256xf32, #tpu.memory_space<vmem>>, vector<1x32x256xf32>
    %333 = vector.shape_cast %332 : vector<1x32x256xf32> to vector<32x256xf32>
    %cst_65 = arith.constant dense<0.000000e+00> : vector<16x256xf32>
    %334 = tpu.matmul %331, %333, %cst_65 {dimension_numbers = #tpu.dot_dimension_numbers<[1], [0], [0], [1], [0, 0, 1, 1], [], []>} : vector<16x32xf32>, vector<32x256xf32>, vector<16x256xf32> -> vector<16x256xf32>
    %c0_66 = arith.constant 0 : index
    %c0_67 = arith.constant 0 : index
    %335 = vector.load %arg15[%c0_66, %c0_67] : memref<16x32xf32, #tpu.memory_space<vmem>>, vector<16x32xf32>
    %c1 = arith.constant 1 : index
    %c0_68 = arith.constant 0 : index
    %c0_69 = arith.constant 0 : index
    %336 = vector.load %arg4[%c1, %c0_68, %c0_69] : memref<2x32x256xf32, #tpu.memory_space<vmem>>, vector<1x32x256xf32>
    %337 = vector.shape_cast %336 : vector<1x32x256xf32> to vector<32x256xf32>
    %cst_70 = arith.constant dense<0.000000e+00> : vector<16x256xf32>
    %338 = tpu.matmul %335, %337, %cst_70 {dimension_numbers = #tpu.dot_dimension_numbers<[1], [0], [0], [1], [0, 0, 1, 1], [], []>} : vector<16x32xf32>, vector<32x256xf32>, vector<16x256xf32> -> vector<16x256xf32>
    %339 = arith.addf %334, %338 : vector<16x256xf32>
    %c0_71 = arith.constant 0 : index
    %c0_72 = arith.constant 0 : index
    %340 = vector.load %arg6[%c0_71, %c0_72] : memref<1x256xf32, #tpu.memory_space<vmem>>, vector<1x256xf32>
    %341 = vector.broadcast %340 : vector<1x256xf32> to vector<16x256xf32>
    %342 = arith.addf %339, %341 : vector<16x256xf32>
    %c0_73 = arith.constant 0 : index
    %c0_74 = arith.constant 0 : index
    %343 = vector.load %arg5[%c0_73, %c0_74] : memref<64x256xf32, #tpu.memory_space<vmem>>, vector<64x256xf32>
    %cst_75 = arith.constant 0.000000e+00 : f32
    %344 = vector.broadcast %cst_75 : f32 to vector<2x32xf32>
    %cst_76 = arith.constant 0.000000e+00 : f32
    %345 = vector.broadcast %cst_76 : f32 to vector<2x32xf32>
    %cst_77 = arith.constant 0.000000e+00 : f32
    %346 = vector.broadcast %cst_77 : f32 to vector<2x32xf32>
    %cst_78 = arith.constant 0.000000e+00 : f32
    %347 = vector.broadcast %cst_78 : f32 to vector<2x32xf32>
    %348 = tpu.concatenate %344, %346 in 1 : vector<2x32xf32>, vector<2x32xf32> -> vector<2x64xf32>
    %cst_79 = arith.constant dense<0.000000e+00> : vector<2x256xf32>
    %349 = tpu.matmul %348, %343, %cst_79 {dimension_numbers = #tpu.dot_dimension_numbers<[1], [0], [0], [1], [0, 0, 1, 1], [], []>} : vector<2x64xf32>, vector<64x256xf32>, vector<2x256xf32> -> vector<2x256xf32>
    %350 = vector.extract_strided_slice %342 {offsets = [0, 0], sizes = [2, 128], strides = [1, 1]} : vector<16x256xf32> to vector<2x128xf32>
    %351 = vector.extract_strided_slice %349 {offsets = [0, 0], sizes = [2, 128], strides = [1, 1]} : vector<2x256xf32> to vector<2x128xf32>
    %352 = arith.addf %350, %351 : vector<2x128xf32>
    %353 = vector.extract_strided_slice %342 {offsets = [14, 128], sizes = [2, 128], strides = [1, 1]} : vector<16x256xf32> to vector<2x128xf32>
    %354 = vector.extract_strided_slice %349 {offsets = [0, 128], sizes = [2, 128], strides = [1, 1]} : vector<2x256xf32> to vector<2x128xf32>
    %355 = arith.addf %353, %354 : vector<2x128xf32>
    %356 = arith.negf %352 : vector<2x128xf32>
    %357 = math.exp %356 : vector<2x128xf32>
    %cst_80 = arith.constant 1.000000e+00 : f32
    %358 = vector.broadcast %cst_80 : f32 to vector<2x128xf32>
    %359 = arith.addf %358, %357 : vector<2x128xf32>
    %360 = arith.divf %358, %359 : vector<2x128xf32>
    %361 = math.tanh %352 : vector<2x128xf32>
    %362 = vector.extract_strided_slice %360 {offsets = [0, 32], sizes = [2, 32], strides = [1, 1]} : vector<2x128xf32> to vector<2x32xf32>
    %363 = arith.mulf %362, %345 : vector<2x32xf32>
    %364 = vector.extract_strided_slice %360 {offsets = [0, 0], sizes = [2, 32], strides = [1, 1]} : vector<2x128xf32> to vector<2x32xf32>
    %365 = vector.extract_strided_slice %361 {offsets = [0, 64], sizes = [2, 32], strides = [1, 1]} : vector<2x128xf32> to vector<2x32xf32>
    %366 = arith.mulf %364, %365 : vector<2x32xf32>
    %367 = arith.addf %363, %366 : vector<2x32xf32>
    %368 = vector.extract_strided_slice %360 {offsets = [0, 96], sizes = [2, 32], strides = [1, 1]} : vector<2x128xf32> to vector<2x32xf32>
    %369 = math.tanh %367 : vector<2x32xf32>
    %370 = arith.mulf %368, %369 : vector<2x32xf32>
    %371 = arith.negf %355 : vector<2x128xf32>
    %372 = math.exp %371 : vector<2x128xf32>
    %cst_81 = arith.constant 1.000000e+00 : f32
    %373 = vector.broadcast %cst_81 : f32 to vector<2x128xf32>
    %374 = arith.addf %373, %372 : vector<2x128xf32>
    %375 = arith.divf %373, %374 : vector<2x128xf32>
    %376 = math.tanh %355 : vector<2x128xf32>
    %377 = vector.extract_strided_slice %375 {offsets = [0, 32], sizes = [2, 32], strides = [1, 1]} : vector<2x128xf32> to vector<2x32xf32>
    %378 = arith.mulf %377, %347 : vector<2x32xf32>
    %379 = vector.extract_strided_slice %375 {offsets = [0, 0], sizes = [2, 32], strides = [1, 1]} : vector<2x128xf32> to vector<2x32xf32>
    %380 = vector.extract_strided_slice %376 {offsets = [0, 64], sizes = [2, 32], strides = [1, 1]} : vector<2x128xf32> to vector<2x32xf32>
    %381 = arith.mulf %379, %380 : vector<2x32xf32>
    %382 = arith.addf %378, %381 : vector<2x32xf32>
    %383 = vector.extract_strided_slice %375 {offsets = [0, 96], sizes = [2, 32], strides = [1, 1]} : vector<2x128xf32> to vector<2x32xf32>
    %384 = math.tanh %382 : vector<2x32xf32>
    %385 = arith.mulf %383, %384 : vector<2x32xf32>
    %386 = tpu.concatenate %370, %385 in 1 : vector<2x32xf32>, vector<2x32xf32> -> vector<2x64xf32>
    %cst_82 = arith.constant dense<0.000000e+00> : vector<2x256xf32>
    %387 = tpu.matmul %386, %343, %cst_82 {dimension_numbers = #tpu.dot_dimension_numbers<[1], [0], [0], [1], [0, 0, 1, 1], [], []>} : vector<2x64xf32>, vector<64x256xf32>, vector<2x256xf32> -> vector<2x256xf32>
    %388 = vector.extract_strided_slice %342 {offsets = [2, 0], sizes = [2, 128], strides = [1, 1]} : vector<16x256xf32> to vector<2x128xf32>
    %389 = vector.extract_strided_slice %387 {offsets = [0, 0], sizes = [2, 128], strides = [1, 1]} : vector<2x256xf32> to vector<2x128xf32>
    %390 = arith.addf %388, %389 : vector<2x128xf32>
    %391 = vector.extract_strided_slice %342 {offsets = [12, 128], sizes = [2, 128], strides = [1, 1]} : vector<16x256xf32> to vector<2x128xf32>
    %392 = vector.extract_strided_slice %387 {offsets = [0, 128], sizes = [2, 128], strides = [1, 1]} : vector<2x256xf32> to vector<2x128xf32>
    %393 = arith.addf %391, %392 : vector<2x128xf32>
    %394 = arith.negf %390 : vector<2x128xf32>
    %395 = math.exp %394 : vector<2x128xf32>
    %cst_83 = arith.constant 1.000000e+00 : f32
    %396 = vector.broadcast %cst_83 : f32 to vector<2x128xf32>
    %397 = arith.addf %396, %395 : vector<2x128xf32>
    %398 = arith.divf %396, %397 : vector<2x128xf32>
    %399 = math.tanh %390 : vector<2x128xf32>
    %400 = vector.extract_strided_slice %398 {offsets = [0, 32], sizes = [2, 32], strides = [1, 1]} : vector<2x128xf32> to vector<2x32xf32>
    %401 = arith.mulf %400, %367 : vector<2x32xf32>
    %402 = vector.extract_strided_slice %398 {offsets = [0, 0], sizes = [2, 32], strides = [1, 1]} : vector<2x128xf32> to vector<2x32xf32>
    %403 = vector.extract_strided_slice %399 {offsets = [0, 64], sizes = [2, 32], strides = [1, 1]} : vector<2x128xf32> to vector<2x32xf32>
    %404 = arith.mulf %402, %403 : vector<2x32xf32>
    %405 = arith.addf %401, %404 : vector<2x32xf32>
    %406 = vector.extract_strided_slice %398 {offsets = [0, 96], sizes = [2, 32], strides = [1, 1]} : vector<2x128xf32> to vector<2x32xf32>
    %407 = math.tanh %405 : vector<2x32xf32>
    %408 = arith.mulf %406, %407 : vector<2x32xf32>
    %409 = arith.negf %393 : vector<2x128xf32>
    %410 = math.exp %409 : vector<2x128xf32>
    %cst_84 = arith.constant 1.000000e+00 : f32
    %411 = vector.broadcast %cst_84 : f32 to vector<2x128xf32>
    %412 = arith.addf %411, %410 : vector<2x128xf32>
    %413 = arith.divf %411, %412 : vector<2x128xf32>
    %414 = math.tanh %393 : vector<2x128xf32>
    %415 = vector.extract_strided_slice %413 {offsets = [0, 32], sizes = [2, 32], strides = [1, 1]} : vector<2x128xf32> to vector<2x32xf32>
    %416 = arith.mulf %415, %382 : vector<2x32xf32>
    %417 = vector.extract_strided_slice %413 {offsets = [0, 0], sizes = [2, 32], strides = [1, 1]} : vector<2x128xf32> to vector<2x32xf32>
    %418 = vector.extract_strided_slice %414 {offsets = [0, 64], sizes = [2, 32], strides = [1, 1]} : vector<2x128xf32> to vector<2x32xf32>
    %419 = arith.mulf %417, %418 : vector<2x32xf32>
    %420 = arith.addf %416, %419 : vector<2x32xf32>
    %421 = vector.extract_strided_slice %413 {offsets = [0, 96], sizes = [2, 32], strides = [1, 1]} : vector<2x128xf32> to vector<2x32xf32>
    %422 = math.tanh %420 : vector<2x32xf32>
    %423 = arith.mulf %421, %422 : vector<2x32xf32>
    %424 = tpu.concatenate %408, %423 in 1 : vector<2x32xf32>, vector<2x32xf32> -> vector<2x64xf32>
    %cst_85 = arith.constant dense<0.000000e+00> : vector<2x256xf32>
    %425 = tpu.matmul %424, %343, %cst_85 {dimension_numbers = #tpu.dot_dimension_numbers<[1], [0], [0], [1], [0, 0, 1, 1], [], []>} : vector<2x64xf32>, vector<64x256xf32>, vector<2x256xf32> -> vector<2x256xf32>
    %426 = vector.extract_strided_slice %342 {offsets = [4, 0], sizes = [2, 128], strides = [1, 1]} : vector<16x256xf32> to vector<2x128xf32>
    %427 = vector.extract_strided_slice %425 {offsets = [0, 0], sizes = [2, 128], strides = [1, 1]} : vector<2x256xf32> to vector<2x128xf32>
    %428 = arith.addf %426, %427 : vector<2x128xf32>
    %429 = vector.extract_strided_slice %342 {offsets = [10, 128], sizes = [2, 128], strides = [1, 1]} : vector<16x256xf32> to vector<2x128xf32>
    %430 = vector.extract_strided_slice %425 {offsets = [0, 128], sizes = [2, 128], strides = [1, 1]} : vector<2x256xf32> to vector<2x128xf32>
    %431 = arith.addf %429, %430 : vector<2x128xf32>
    %432 = arith.negf %428 : vector<2x128xf32>
    %433 = math.exp %432 : vector<2x128xf32>
    %cst_86 = arith.constant 1.000000e+00 : f32
    %434 = vector.broadcast %cst_86 : f32 to vector<2x128xf32>
    %435 = arith.addf %434, %433 : vector<2x128xf32>
    %436 = arith.divf %434, %435 : vector<2x128xf32>
    %437 = math.tanh %428 : vector<2x128xf32>
    %438 = vector.extract_strided_slice %436 {offsets = [0, 32], sizes = [2, 32], strides = [1, 1]} : vector<2x128xf32> to vector<2x32xf32>
    %439 = arith.mulf %438, %405 : vector<2x32xf32>
    %440 = vector.extract_strided_slice %436 {offsets = [0, 0], sizes = [2, 32], strides = [1, 1]} : vector<2x128xf32> to vector<2x32xf32>
    %441 = vector.extract_strided_slice %437 {offsets = [0, 64], sizes = [2, 32], strides = [1, 1]} : vector<2x128xf32> to vector<2x32xf32>
    %442 = arith.mulf %440, %441 : vector<2x32xf32>
    %443 = arith.addf %439, %442 : vector<2x32xf32>
    %444 = vector.extract_strided_slice %436 {offsets = [0, 96], sizes = [2, 32], strides = [1, 1]} : vector<2x128xf32> to vector<2x32xf32>
    %445 = math.tanh %443 : vector<2x32xf32>
    %446 = arith.mulf %444, %445 : vector<2x32xf32>
    %447 = arith.negf %431 : vector<2x128xf32>
    %448 = math.exp %447 : vector<2x128xf32>
    %cst_87 = arith.constant 1.000000e+00 : f32
    %449 = vector.broadcast %cst_87 : f32 to vector<2x128xf32>
    %450 = arith.addf %449, %448 : vector<2x128xf32>
    %451 = arith.divf %449, %450 : vector<2x128xf32>
    %452 = math.tanh %431 : vector<2x128xf32>
    %453 = vector.extract_strided_slice %451 {offsets = [0, 32], sizes = [2, 32], strides = [1, 1]} : vector<2x128xf32> to vector<2x32xf32>
    %454 = arith.mulf %453, %420 : vector<2x32xf32>
    %455 = vector.extract_strided_slice %451 {offsets = [0, 0], sizes = [2, 32], strides = [1, 1]} : vector<2x128xf32> to vector<2x32xf32>
    %456 = vector.extract_strided_slice %452 {offsets = [0, 64], sizes = [2, 32], strides = [1, 1]} : vector<2x128xf32> to vector<2x32xf32>
    %457 = arith.mulf %455, %456 : vector<2x32xf32>
    %458 = arith.addf %454, %457 : vector<2x32xf32>
    %459 = vector.extract_strided_slice %451 {offsets = [0, 96], sizes = [2, 32], strides = [1, 1]} : vector<2x128xf32> to vector<2x32xf32>
    %460 = math.tanh %458 : vector<2x32xf32>
    %461 = arith.mulf %459, %460 : vector<2x32xf32>
    %462 = tpu.concatenate %446, %461 in 1 : vector<2x32xf32>, vector<2x32xf32> -> vector<2x64xf32>
    %cst_88 = arith.constant dense<0.000000e+00> : vector<2x256xf32>
    %463 = tpu.matmul %462, %343, %cst_88 {dimension_numbers = #tpu.dot_dimension_numbers<[1], [0], [0], [1], [0, 0, 1, 1], [], []>} : vector<2x64xf32>, vector<64x256xf32>, vector<2x256xf32> -> vector<2x256xf32>
    %464 = vector.extract_strided_slice %342 {offsets = [6, 0], sizes = [2, 128], strides = [1, 1]} : vector<16x256xf32> to vector<2x128xf32>
    %465 = vector.extract_strided_slice %463 {offsets = [0, 0], sizes = [2, 128], strides = [1, 1]} : vector<2x256xf32> to vector<2x128xf32>
    %466 = arith.addf %464, %465 : vector<2x128xf32>
    %467 = vector.extract_strided_slice %342 {offsets = [8, 128], sizes = [2, 128], strides = [1, 1]} : vector<16x256xf32> to vector<2x128xf32>
    %468 = vector.extract_strided_slice %463 {offsets = [0, 128], sizes = [2, 128], strides = [1, 1]} : vector<2x256xf32> to vector<2x128xf32>
    %469 = arith.addf %467, %468 : vector<2x128xf32>
    %470 = arith.negf %466 : vector<2x128xf32>
    %471 = math.exp %470 : vector<2x128xf32>
    %cst_89 = arith.constant 1.000000e+00 : f32
    %472 = vector.broadcast %cst_89 : f32 to vector<2x128xf32>
    %473 = arith.addf %472, %471 : vector<2x128xf32>
    %474 = arith.divf %472, %473 : vector<2x128xf32>
    %475 = math.tanh %466 : vector<2x128xf32>
    %476 = vector.extract_strided_slice %474 {offsets = [0, 32], sizes = [2, 32], strides = [1, 1]} : vector<2x128xf32> to vector<2x32xf32>
    %477 = arith.mulf %476, %443 : vector<2x32xf32>
    %478 = vector.extract_strided_slice %474 {offsets = [0, 0], sizes = [2, 32], strides = [1, 1]} : vector<2x128xf32> to vector<2x32xf32>
    %479 = vector.extract_strided_slice %475 {offsets = [0, 64], sizes = [2, 32], strides = [1, 1]} : vector<2x128xf32> to vector<2x32xf32>
    %480 = arith.mulf %478, %479 : vector<2x32xf32>
    %481 = arith.addf %477, %480 : vector<2x32xf32>
    %482 = vector.extract_strided_slice %474 {offsets = [0, 96], sizes = [2, 32], strides = [1, 1]} : vector<2x128xf32> to vector<2x32xf32>
    %483 = math.tanh %481 : vector<2x32xf32>
    %484 = arith.mulf %482, %483 : vector<2x32xf32>
    %485 = arith.negf %469 : vector<2x128xf32>
    %486 = math.exp %485 : vector<2x128xf32>
    %cst_90 = arith.constant 1.000000e+00 : f32
    %487 = vector.broadcast %cst_90 : f32 to vector<2x128xf32>
    %488 = arith.addf %487, %486 : vector<2x128xf32>
    %489 = arith.divf %487, %488 : vector<2x128xf32>
    %490 = math.tanh %469 : vector<2x128xf32>
    %491 = vector.extract_strided_slice %489 {offsets = [0, 32], sizes = [2, 32], strides = [1, 1]} : vector<2x128xf32> to vector<2x32xf32>
    %492 = arith.mulf %491, %458 : vector<2x32xf32>
    %493 = vector.extract_strided_slice %489 {offsets = [0, 0], sizes = [2, 32], strides = [1, 1]} : vector<2x128xf32> to vector<2x32xf32>
    %494 = vector.extract_strided_slice %490 {offsets = [0, 64], sizes = [2, 32], strides = [1, 1]} : vector<2x128xf32> to vector<2x32xf32>
    %495 = arith.mulf %493, %494 : vector<2x32xf32>
    %496 = arith.addf %492, %495 : vector<2x32xf32>
    %497 = vector.extract_strided_slice %489 {offsets = [0, 96], sizes = [2, 32], strides = [1, 1]} : vector<2x128xf32> to vector<2x32xf32>
    %498 = math.tanh %496 : vector<2x32xf32>
    %499 = arith.mulf %497, %498 : vector<2x32xf32>
    %500 = tpu.concatenate %484, %499 in 1 : vector<2x32xf32>, vector<2x32xf32> -> vector<2x64xf32>
    %cst_91 = arith.constant dense<0.000000e+00> : vector<2x256xf32>
    %501 = tpu.matmul %500, %343, %cst_91 {dimension_numbers = #tpu.dot_dimension_numbers<[1], [0], [0], [1], [0, 0, 1, 1], [], []>} : vector<2x64xf32>, vector<64x256xf32>, vector<2x256xf32> -> vector<2x256xf32>
    %502 = vector.extract_strided_slice %342 {offsets = [8, 0], sizes = [2, 128], strides = [1, 1]} : vector<16x256xf32> to vector<2x128xf32>
    %503 = vector.extract_strided_slice %501 {offsets = [0, 0], sizes = [2, 128], strides = [1, 1]} : vector<2x256xf32> to vector<2x128xf32>
    %504 = arith.addf %502, %503 : vector<2x128xf32>
    %505 = vector.extract_strided_slice %342 {offsets = [6, 128], sizes = [2, 128], strides = [1, 1]} : vector<16x256xf32> to vector<2x128xf32>
    %506 = vector.extract_strided_slice %501 {offsets = [0, 128], sizes = [2, 128], strides = [1, 1]} : vector<2x256xf32> to vector<2x128xf32>
    %507 = arith.addf %505, %506 : vector<2x128xf32>
    %508 = arith.negf %504 : vector<2x128xf32>
    %509 = math.exp %508 : vector<2x128xf32>
    %cst_92 = arith.constant 1.000000e+00 : f32
    %510 = vector.broadcast %cst_92 : f32 to vector<2x128xf32>
    %511 = arith.addf %510, %509 : vector<2x128xf32>
    %512 = arith.divf %510, %511 : vector<2x128xf32>
    %513 = math.tanh %504 : vector<2x128xf32>
    %514 = vector.extract_strided_slice %512 {offsets = [0, 32], sizes = [2, 32], strides = [1, 1]} : vector<2x128xf32> to vector<2x32xf32>
    %515 = arith.mulf %514, %481 : vector<2x32xf32>
    %516 = vector.extract_strided_slice %512 {offsets = [0, 0], sizes = [2, 32], strides = [1, 1]} : vector<2x128xf32> to vector<2x32xf32>
    %517 = vector.extract_strided_slice %513 {offsets = [0, 64], sizes = [2, 32], strides = [1, 1]} : vector<2x128xf32> to vector<2x32xf32>
    %518 = arith.mulf %516, %517 : vector<2x32xf32>
    %519 = arith.addf %515, %518 : vector<2x32xf32>
    %520 = vector.extract_strided_slice %512 {offsets = [0, 96], sizes = [2, 32], strides = [1, 1]} : vector<2x128xf32> to vector<2x32xf32>
    %521 = math.tanh %519 : vector<2x32xf32>
    %522 = arith.mulf %520, %521 : vector<2x32xf32>
    %523 = arith.negf %507 : vector<2x128xf32>
    %524 = math.exp %523 : vector<2x128xf32>
    %cst_93 = arith.constant 1.000000e+00 : f32
    %525 = vector.broadcast %cst_93 : f32 to vector<2x128xf32>
    %526 = arith.addf %525, %524 : vector<2x128xf32>
    %527 = arith.divf %525, %526 : vector<2x128xf32>
    %528 = math.tanh %507 : vector<2x128xf32>
    %529 = vector.extract_strided_slice %527 {offsets = [0, 32], sizes = [2, 32], strides = [1, 1]} : vector<2x128xf32> to vector<2x32xf32>
    %530 = arith.mulf %529, %496 : vector<2x32xf32>
    %531 = vector.extract_strided_slice %527 {offsets = [0, 0], sizes = [2, 32], strides = [1, 1]} : vector<2x128xf32> to vector<2x32xf32>
    %532 = vector.extract_strided_slice %528 {offsets = [0, 64], sizes = [2, 32], strides = [1, 1]} : vector<2x128xf32> to vector<2x32xf32>
    %533 = arith.mulf %531, %532 : vector<2x32xf32>
    %534 = arith.addf %530, %533 : vector<2x32xf32>
    %535 = vector.extract_strided_slice %527 {offsets = [0, 96], sizes = [2, 32], strides = [1, 1]} : vector<2x128xf32> to vector<2x32xf32>
    %536 = math.tanh %534 : vector<2x32xf32>
    %537 = arith.mulf %535, %536 : vector<2x32xf32>
    %538 = tpu.concatenate %522, %537 in 1 : vector<2x32xf32>, vector<2x32xf32> -> vector<2x64xf32>
    %cst_94 = arith.constant dense<0.000000e+00> : vector<2x256xf32>
    %539 = tpu.matmul %538, %343, %cst_94 {dimension_numbers = #tpu.dot_dimension_numbers<[1], [0], [0], [1], [0, 0, 1, 1], [], []>} : vector<2x64xf32>, vector<64x256xf32>, vector<2x256xf32> -> vector<2x256xf32>
    %540 = vector.extract_strided_slice %342 {offsets = [10, 0], sizes = [2, 128], strides = [1, 1]} : vector<16x256xf32> to vector<2x128xf32>
    %541 = vector.extract_strided_slice %539 {offsets = [0, 0], sizes = [2, 128], strides = [1, 1]} : vector<2x256xf32> to vector<2x128xf32>
    %542 = arith.addf %540, %541 : vector<2x128xf32>
    %543 = vector.extract_strided_slice %342 {offsets = [4, 128], sizes = [2, 128], strides = [1, 1]} : vector<16x256xf32> to vector<2x128xf32>
    %544 = vector.extract_strided_slice %539 {offsets = [0, 128], sizes = [2, 128], strides = [1, 1]} : vector<2x256xf32> to vector<2x128xf32>
    %545 = arith.addf %543, %544 : vector<2x128xf32>
    %546 = arith.negf %542 : vector<2x128xf32>
    %547 = math.exp %546 : vector<2x128xf32>
    %cst_95 = arith.constant 1.000000e+00 : f32
    %548 = vector.broadcast %cst_95 : f32 to vector<2x128xf32>
    %549 = arith.addf %548, %547 : vector<2x128xf32>
    %550 = arith.divf %548, %549 : vector<2x128xf32>
    %551 = math.tanh %542 : vector<2x128xf32>
    %552 = vector.extract_strided_slice %550 {offsets = [0, 32], sizes = [2, 32], strides = [1, 1]} : vector<2x128xf32> to vector<2x32xf32>
    %553 = arith.mulf %552, %519 : vector<2x32xf32>
    %554 = vector.extract_strided_slice %550 {offsets = [0, 0], sizes = [2, 32], strides = [1, 1]} : vector<2x128xf32> to vector<2x32xf32>
    %555 = vector.extract_strided_slice %551 {offsets = [0, 64], sizes = [2, 32], strides = [1, 1]} : vector<2x128xf32> to vector<2x32xf32>
    %556 = arith.mulf %554, %555 : vector<2x32xf32>
    %557 = arith.addf %553, %556 : vector<2x32xf32>
    %558 = vector.extract_strided_slice %550 {offsets = [0, 96], sizes = [2, 32], strides = [1, 1]} : vector<2x128xf32> to vector<2x32xf32>
    %559 = math.tanh %557 : vector<2x32xf32>
    %560 = arith.mulf %558, %559 : vector<2x32xf32>
    %561 = arith.negf %545 : vector<2x128xf32>
    %562 = math.exp %561 : vector<2x128xf32>
    %cst_96 = arith.constant 1.000000e+00 : f32
    %563 = vector.broadcast %cst_96 : f32 to vector<2x128xf32>
    %564 = arith.addf %563, %562 : vector<2x128xf32>
    %565 = arith.divf %563, %564 : vector<2x128xf32>
    %566 = math.tanh %545 : vector<2x128xf32>
    %567 = vector.extract_strided_slice %565 {offsets = [0, 32], sizes = [2, 32], strides = [1, 1]} : vector<2x128xf32> to vector<2x32xf32>
    %568 = arith.mulf %567, %534 : vector<2x32xf32>
    %569 = vector.extract_strided_slice %565 {offsets = [0, 0], sizes = [2, 32], strides = [1, 1]} : vector<2x128xf32> to vector<2x32xf32>
    %570 = vector.extract_strided_slice %566 {offsets = [0, 64], sizes = [2, 32], strides = [1, 1]} : vector<2x128xf32> to vector<2x32xf32>
    %571 = arith.mulf %569, %570 : vector<2x32xf32>
    %572 = arith.addf %568, %571 : vector<2x32xf32>
    %573 = vector.extract_strided_slice %565 {offsets = [0, 96], sizes = [2, 32], strides = [1, 1]} : vector<2x128xf32> to vector<2x32xf32>
    %574 = math.tanh %572 : vector<2x32xf32>
    %575 = arith.mulf %573, %574 : vector<2x32xf32>
    %576 = tpu.concatenate %560, %575 in 1 : vector<2x32xf32>, vector<2x32xf32> -> vector<2x64xf32>
    %cst_97 = arith.constant dense<0.000000e+00> : vector<2x256xf32>
    %577 = tpu.matmul %576, %343, %cst_97 {dimension_numbers = #tpu.dot_dimension_numbers<[1], [0], [0], [1], [0, 0, 1, 1], [], []>} : vector<2x64xf32>, vector<64x256xf32>, vector<2x256xf32> -> vector<2x256xf32>
    %578 = vector.extract_strided_slice %342 {offsets = [12, 0], sizes = [2, 128], strides = [1, 1]} : vector<16x256xf32> to vector<2x128xf32>
    %579 = vector.extract_strided_slice %577 {offsets = [0, 0], sizes = [2, 128], strides = [1, 1]} : vector<2x256xf32> to vector<2x128xf32>
    %580 = arith.addf %578, %579 : vector<2x128xf32>
    %581 = vector.extract_strided_slice %342 {offsets = [2, 128], sizes = [2, 128], strides = [1, 1]} : vector<16x256xf32> to vector<2x128xf32>
    %582 = vector.extract_strided_slice %577 {offsets = [0, 128], sizes = [2, 128], strides = [1, 1]} : vector<2x256xf32> to vector<2x128xf32>
    %583 = arith.addf %581, %582 : vector<2x128xf32>
    %584 = arith.negf %580 : vector<2x128xf32>
    %585 = math.exp %584 : vector<2x128xf32>
    %cst_98 = arith.constant 1.000000e+00 : f32
    %586 = vector.broadcast %cst_98 : f32 to vector<2x128xf32>
    %587 = arith.addf %586, %585 : vector<2x128xf32>
    %588 = arith.divf %586, %587 : vector<2x128xf32>
    %589 = math.tanh %580 : vector<2x128xf32>
    %590 = vector.extract_strided_slice %588 {offsets = [0, 32], sizes = [2, 32], strides = [1, 1]} : vector<2x128xf32> to vector<2x32xf32>
    %591 = arith.mulf %590, %557 : vector<2x32xf32>
    %592 = vector.extract_strided_slice %588 {offsets = [0, 0], sizes = [2, 32], strides = [1, 1]} : vector<2x128xf32> to vector<2x32xf32>
    %593 = vector.extract_strided_slice %589 {offsets = [0, 64], sizes = [2, 32], strides = [1, 1]} : vector<2x128xf32> to vector<2x32xf32>
    %594 = arith.mulf %592, %593 : vector<2x32xf32>
    %595 = arith.addf %591, %594 : vector<2x32xf32>
    %596 = vector.extract_strided_slice %588 {offsets = [0, 96], sizes = [2, 32], strides = [1, 1]} : vector<2x128xf32> to vector<2x32xf32>
    %597 = math.tanh %595 : vector<2x32xf32>
    %598 = arith.mulf %596, %597 : vector<2x32xf32>
    %599 = arith.negf %583 : vector<2x128xf32>
    %600 = math.exp %599 : vector<2x128xf32>
    %cst_99 = arith.constant 1.000000e+00 : f32
    %601 = vector.broadcast %cst_99 : f32 to vector<2x128xf32>
    %602 = arith.addf %601, %600 : vector<2x128xf32>
    %603 = arith.divf %601, %602 : vector<2x128xf32>
    %604 = math.tanh %583 : vector<2x128xf32>
    %605 = vector.extract_strided_slice %603 {offsets = [0, 32], sizes = [2, 32], strides = [1, 1]} : vector<2x128xf32> to vector<2x32xf32>
    %606 = arith.mulf %605, %572 : vector<2x32xf32>
    %607 = vector.extract_strided_slice %603 {offsets = [0, 0], sizes = [2, 32], strides = [1, 1]} : vector<2x128xf32> to vector<2x32xf32>
    %608 = vector.extract_strided_slice %604 {offsets = [0, 64], sizes = [2, 32], strides = [1, 1]} : vector<2x128xf32> to vector<2x32xf32>
    %609 = arith.mulf %607, %608 : vector<2x32xf32>
    %610 = arith.addf %606, %609 : vector<2x32xf32>
    %611 = vector.extract_strided_slice %603 {offsets = [0, 96], sizes = [2, 32], strides = [1, 1]} : vector<2x128xf32> to vector<2x32xf32>
    %612 = math.tanh %610 : vector<2x32xf32>
    %613 = arith.mulf %611, %612 : vector<2x32xf32>
    %614 = tpu.concatenate %598, %613 in 1 : vector<2x32xf32>, vector<2x32xf32> -> vector<2x64xf32>
    %cst_100 = arith.constant dense<0.000000e+00> : vector<2x256xf32>
    %615 = tpu.matmul %614, %343, %cst_100 {dimension_numbers = #tpu.dot_dimension_numbers<[1], [0], [0], [1], [0, 0, 1, 1], [], []>} : vector<2x64xf32>, vector<64x256xf32>, vector<2x256xf32> -> vector<2x256xf32>
    %616 = vector.extract_strided_slice %342 {offsets = [14, 0], sizes = [2, 128], strides = [1, 1]} : vector<16x256xf32> to vector<2x128xf32>
    %617 = vector.extract_strided_slice %615 {offsets = [0, 0], sizes = [2, 128], strides = [1, 1]} : vector<2x256xf32> to vector<2x128xf32>
    %618 = arith.addf %616, %617 : vector<2x128xf32>
    %619 = vector.extract_strided_slice %342 {offsets = [0, 128], sizes = [2, 128], strides = [1, 1]} : vector<16x256xf32> to vector<2x128xf32>
    %620 = vector.extract_strided_slice %615 {offsets = [0, 128], sizes = [2, 128], strides = [1, 1]} : vector<2x256xf32> to vector<2x128xf32>
    %621 = arith.addf %619, %620 : vector<2x128xf32>
    %622 = arith.negf %618 : vector<2x128xf32>
    %623 = math.exp %622 : vector<2x128xf32>
    %cst_101 = arith.constant 1.000000e+00 : f32
    %624 = vector.broadcast %cst_101 : f32 to vector<2x128xf32>
    %625 = arith.addf %624, %623 : vector<2x128xf32>
    %626 = arith.divf %624, %625 : vector<2x128xf32>
    %627 = math.tanh %618 : vector<2x128xf32>
    %628 = vector.extract_strided_slice %626 {offsets = [0, 32], sizes = [2, 32], strides = [1, 1]} : vector<2x128xf32> to vector<2x32xf32>
    %629 = arith.mulf %628, %595 : vector<2x32xf32>
    %630 = vector.extract_strided_slice %626 {offsets = [0, 0], sizes = [2, 32], strides = [1, 1]} : vector<2x128xf32> to vector<2x32xf32>
    %631 = vector.extract_strided_slice %627 {offsets = [0, 64], sizes = [2, 32], strides = [1, 1]} : vector<2x128xf32> to vector<2x32xf32>
    %632 = arith.mulf %630, %631 : vector<2x32xf32>
    %633 = arith.addf %629, %632 : vector<2x32xf32>
    %634 = vector.extract_strided_slice %626 {offsets = [0, 96], sizes = [2, 32], strides = [1, 1]} : vector<2x128xf32> to vector<2x32xf32>
    %635 = math.tanh %633 : vector<2x32xf32>
    %636 = arith.mulf %634, %635 : vector<2x32xf32>
    %637 = arith.negf %621 : vector<2x128xf32>
    %638 = math.exp %637 : vector<2x128xf32>
    %cst_102 = arith.constant 1.000000e+00 : f32
    %639 = vector.broadcast %cst_102 : f32 to vector<2x128xf32>
    %640 = arith.addf %639, %638 : vector<2x128xf32>
    %641 = arith.divf %639, %640 : vector<2x128xf32>
    %642 = math.tanh %621 : vector<2x128xf32>
    %643 = vector.extract_strided_slice %641 {offsets = [0, 32], sizes = [2, 32], strides = [1, 1]} : vector<2x128xf32> to vector<2x32xf32>
    %644 = arith.mulf %643, %610 : vector<2x32xf32>
    %645 = vector.extract_strided_slice %641 {offsets = [0, 0], sizes = [2, 32], strides = [1, 1]} : vector<2x128xf32> to vector<2x32xf32>
    %646 = vector.extract_strided_slice %642 {offsets = [0, 64], sizes = [2, 32], strides = [1, 1]} : vector<2x128xf32> to vector<2x32xf32>
    %647 = arith.mulf %645, %646 : vector<2x32xf32>
    %648 = arith.addf %644, %647 : vector<2x32xf32>
    %649 = vector.extract_strided_slice %641 {offsets = [0, 96], sizes = [2, 32], strides = [1, 1]} : vector<2x128xf32> to vector<2x32xf32>
    %650 = math.tanh %648 : vector<2x32xf32>
    %651 = arith.mulf %649, %650 : vector<2x32xf32>
    %652 = arith.addf %313, %328 : vector<2x32xf32>
    %653 = arith.addf %652, %636 : vector<2x32xf32>
    %654 = arith.addf %653, %651 : vector<2x32xf32>
    %c0_103 = arith.constant 0 : index
    %c0_104 = arith.constant 0 : index
    %655 = vector.load %arg7[%c0_103, %c0_104] : memref<32x32xf32, #tpu.memory_space<vmem>>, vector<32x32xf32>
    %cst_105 = arith.constant dense<0.000000e+00> : vector<2x32xf32>
    %656 = tpu.matmul %654, %655, %cst_105 {dimension_numbers = #tpu.dot_dimension_numbers<[1], [0], [0], [1], [0, 0, 1, 1], [], []>} : vector<2x32xf32>, vector<32x32xf32>, vector<2x32xf32> -> vector<2x32xf32>
    %c0_106 = arith.constant 0 : index
    %c0_107 = arith.constant 0 : index
    %657 = vector.load %arg8[%c0_106, %c0_107] : memref<1x32xf32, #tpu.memory_space<vmem>>, vector<1x32xf32>
    %658 = vector.broadcast %657 : vector<1x32xf32> to vector<2x32xf32>
    %659 = arith.addf %656, %658 : vector<2x32xf32>
    %cst_108 = arith.constant 0.000000e+00 : f32
    %660 = vector.broadcast %cst_108 : f32 to vector<2x32xf32>
    %661 = arith.maximumf %659, %660 : vector<2x32xf32>
    %662 = arith.addf %370, %651 : vector<2x32xf32>
    %663 = arith.addf %408, %613 : vector<2x32xf32>
    %664 = arith.addf %446, %575 : vector<2x32xf32>
    %665 = arith.addf %484, %537 : vector<2x32xf32>
    %666 = arith.addf %522, %499 : vector<2x32xf32>
    %667 = arith.addf %560, %461 : vector<2x32xf32>
    %668 = arith.addf %598, %423 : vector<2x32xf32>
    %669 = arith.addf %636, %385 : vector<2x32xf32>
    %670 = math.tanh %662 : vector<2x32xf32>
    %671 = arith.mulf %661, %670 : vector<2x32xf32>
    %cst_109 = arith.constant dense<0.000000e+00> : vector<2xf32>
    %672 = vector.multi_reduction <add>, %671, %cst_109 [1] : vector<2x32xf32> to vector<2xf32>
    %673 = vector.shape_cast %672 : vector<2xf32> to vector<2x1xf32>
    %674 = math.tanh %663 : vector<2x32xf32>
    %675 = arith.mulf %661, %674 : vector<2x32xf32>
    %cst_110 = arith.constant dense<0.000000e+00> : vector<2xf32>
    %676 = vector.multi_reduction <add>, %675, %cst_110 [1] : vector<2x32xf32> to vector<2xf32>
    %677 = vector.shape_cast %676 : vector<2xf32> to vector<2x1xf32>
    %678 = math.tanh %664 : vector<2x32xf32>
    %679 = arith.mulf %661, %678 : vector<2x32xf32>
    %cst_111 = arith.constant dense<0.000000e+00> : vector<2xf32>
    %680 = vector.multi_reduction <add>, %679, %cst_111 [1] : vector<2x32xf32> to vector<2xf32>
    %681 = vector.shape_cast %680 : vector<2xf32> to vector<2x1xf32>
    %682 = math.tanh %665 : vector<2x32xf32>
    %683 = arith.mulf %661, %682 : vector<2x32xf32>
    %cst_112 = arith.constant dense<0.000000e+00> : vector<2xf32>
    %684 = vector.multi_reduction <add>, %683, %cst_112 [1] : vector<2x32xf32> to vector<2xf32>
    %685 = vector.shape_cast %684 : vector<2xf32> to vector<2x1xf32>
    %686 = math.tanh %666 : vector<2x32xf32>
    %687 = arith.mulf %661, %686 : vector<2x32xf32>
    %cst_113 = arith.constant dense<0.000000e+00> : vector<2xf32>
    %688 = vector.multi_reduction <add>, %687, %cst_113 [1] : vector<2x32xf32> to vector<2xf32>
    %689 = vector.shape_cast %688 : vector<2xf32> to vector<2x1xf32>
    %690 = math.tanh %667 : vector<2x32xf32>
    %691 = arith.mulf %661, %690 : vector<2x32xf32>
    %cst_114 = arith.constant dense<0.000000e+00> : vector<2xf32>
    %692 = vector.multi_reduction <add>, %691, %cst_114 [1] : vector<2x32xf32> to vector<2xf32>
    %693 = vector.shape_cast %692 : vector<2xf32> to vector<2x1xf32>
    %694 = math.tanh %668 : vector<2x32xf32>
    %695 = arith.mulf %661, %694 : vector<2x32xf32>
    %cst_115 = arith.constant dense<0.000000e+00> : vector<2xf32>
    %696 = vector.multi_reduction <add>, %695, %cst_115 [1] : vector<2x32xf32> to vector<2xf32>
    %697 = vector.shape_cast %696 : vector<2xf32> to vector<2x1xf32>
    %698 = math.tanh %669 : vector<2x32xf32>
    %699 = arith.mulf %661, %698 : vector<2x32xf32>
    %cst_116 = arith.constant dense<0.000000e+00> : vector<2xf32>
    %700 = vector.multi_reduction <add>, %699, %cst_116 [1] : vector<2x32xf32> to vector<2xf32>
    %701 = vector.shape_cast %700 : vector<2xf32> to vector<2x1xf32>
    %702 = arith.maximumf %673, %677 : vector<2x1xf32>
    %703 = arith.maximumf %702, %681 : vector<2x1xf32>
    %704 = arith.maximumf %703, %685 : vector<2x1xf32>
    %705 = arith.maximumf %704, %689 : vector<2x1xf32>
    %706 = arith.maximumf %705, %693 : vector<2x1xf32>
    %707 = arith.maximumf %706, %697 : vector<2x1xf32>
    %708 = arith.maximumf %707, %701 : vector<2x1xf32>
    %709 = arith.subf %673, %708 : vector<2x1xf32>
    %710 = math.exp %709 : vector<2x1xf32>
    %711 = arith.subf %677, %708 : vector<2x1xf32>
    %712 = math.exp %711 : vector<2x1xf32>
    %713 = arith.subf %681, %708 : vector<2x1xf32>
    %714 = math.exp %713 : vector<2x1xf32>
    %715 = arith.subf %685, %708 : vector<2x1xf32>
    %716 = math.exp %715 : vector<2x1xf32>
    %717 = arith.subf %689, %708 : vector<2x1xf32>
    %718 = math.exp %717 : vector<2x1xf32>
    %719 = arith.subf %693, %708 : vector<2x1xf32>
    %720 = math.exp %719 : vector<2x1xf32>
    %721 = arith.subf %697, %708 : vector<2x1xf32>
    %722 = math.exp %721 : vector<2x1xf32>
    %723 = arith.subf %701, %708 : vector<2x1xf32>
    %724 = math.exp %723 : vector<2x1xf32>
    %725 = vector.broadcast %710 : vector<2x1xf32> to vector<2x32xf32>
    %726 = arith.mulf %725, %662 : vector<2x32xf32>
    %727 = arith.addf %710, %712 : vector<2x1xf32>
    %728 = vector.broadcast %712 : vector<2x1xf32> to vector<2x32xf32>
    %729 = arith.mulf %728, %663 : vector<2x32xf32>
    %730 = arith.addf %726, %729 : vector<2x32xf32>
    %731 = arith.addf %727, %714 : vector<2x1xf32>
    %732 = vector.broadcast %714 : vector<2x1xf32> to vector<2x32xf32>
    %733 = arith.mulf %732, %664 : vector<2x32xf32>
    %734 = arith.addf %730, %733 : vector<2x32xf32>
    %735 = arith.addf %731, %716 : vector<2x1xf32>
    %736 = vector.broadcast %716 : vector<2x1xf32> to vector<2x32xf32>
    %737 = arith.mulf %736, %665 : vector<2x32xf32>
    %738 = arith.addf %734, %737 : vector<2x32xf32>
    %739 = arith.addf %735, %718 : vector<2x1xf32>
    %740 = vector.broadcast %718 : vector<2x1xf32> to vector<2x32xf32>
    %741 = arith.mulf %740, %666 : vector<2x32xf32>
    %742 = arith.addf %738, %741 : vector<2x32xf32>
    %743 = arith.addf %739, %720 : vector<2x1xf32>
    %744 = vector.broadcast %720 : vector<2x1xf32> to vector<2x32xf32>
    %745 = arith.mulf %744, %667 : vector<2x32xf32>
    %746 = arith.addf %742, %745 : vector<2x32xf32>
    %747 = arith.addf %743, %722 : vector<2x1xf32>
    %748 = vector.broadcast %722 : vector<2x1xf32> to vector<2x32xf32>
    %749 = arith.mulf %748, %668 : vector<2x32xf32>
    %750 = arith.addf %746, %749 : vector<2x32xf32>
    %751 = arith.addf %747, %724 : vector<2x1xf32>
    %752 = vector.broadcast %724 : vector<2x1xf32> to vector<2x32xf32>
    %753 = arith.mulf %752, %669 : vector<2x32xf32>
    %754 = arith.addf %750, %753 : vector<2x32xf32>
    %755 = tpu.reciprocal %751 : vector<2x1xf32> -> vector<2x1xf32>
    %756 = vector.broadcast %755 : vector<2x1xf32> to vector<2x32xf32>
    %757 = arith.mulf %754, %756 : vector<2x32xf32>
    %c0_117 = arith.constant 0 : index
    %c0_118 = arith.constant 0 : index
    %758 = vector.load %arg9[%c0_117, %c0_118] : memref<32x32xf32, #tpu.memory_space<vmem>>, vector<32x32xf32>
    %cst_119 = arith.constant dense<0.000000e+00> : vector<2x32xf32>
    %759 = tpu.matmul %757, %758, %cst_119 {dimension_numbers = #tpu.dot_dimension_numbers<[1], [0], [0], [1], [0, 0, 1, 1], [], []>} : vector<2x32xf32>, vector<32x32xf32>, vector<2x32xf32> -> vector<2x32xf32>
    %c0_120 = arith.constant 0 : index
    %c0_121 = arith.constant 0 : index
    %760 = vector.load %arg10[%c0_120, %c0_121] : memref<1x32xf32, #tpu.memory_space<vmem>>, vector<1x32xf32>
    %761 = vector.broadcast %760 : vector<1x32xf32> to vector<2x32xf32>
    %762 = arith.addf %759, %761 : vector<2x32xf32>
    %cst_122 = arith.constant 0.000000e+00 : f32
    %763 = vector.broadcast %cst_122 : f32 to vector<2x32xf32>
    %764 = arith.maximumf %762, %763 : vector<2x32xf32>
    %c0_123 = arith.constant 0 : index
    %c0_124 = arith.constant 0 : index
    %765 = vector.load %arg11[%c0_123, %c0_124] : memref<32x2xf32, #tpu.memory_space<vmem>>, vector<32x2xf32>
    %cst_125 = arith.constant dense<0.000000e+00> : vector<2x2xf32>
    %766 = tpu.matmul %764, %765, %cst_125 {dimension_numbers = #tpu.dot_dimension_numbers<[1], [0], [0], [1], [0, 0, 1, 1], [], []>} : vector<2x32xf32>, vector<32x2xf32>, vector<2x2xf32> -> vector<2x2xf32>
    %c0_126 = arith.constant 0 : index
    %c0_127 = arith.constant 0 : index
    %767 = vector.load %arg12[%c0_126, %c0_127] : memref<1x2xf32, #tpu.memory_space<vmem>>, vector<1x2xf32>
    %768 = vector.broadcast %767 : vector<1x2xf32> to vector<2x2xf32>
    %769 = arith.addf %766, %768 : vector<2x2xf32>
    %cst_128 = arith.constant dense<0xFF800000> : vector<2xf32>
    %770 = vector.multi_reduction <maximumf>, %769, %cst_128 [1] : vector<2x2xf32> to vector<2xf32>
    %771 = vector.shape_cast %770 : vector<2xf32> to vector<2x1xf32>
    %772 = vector.broadcast %771 : vector<2x1xf32> to vector<2x2xf32>
    %773 = arith.subf %769, %772 : vector<2x2xf32>
    %774 = math.exp %773 : vector<2x2xf32>
    %cst_129 = arith.constant dense<0.000000e+00> : vector<2xf32>
    %775 = vector.multi_reduction <add>, %774, %cst_129 [1] : vector<2x2xf32> to vector<2xf32>
    %776 = vector.shape_cast %775 : vector<2xf32> to vector<2x1xf32>
    %777 = vector.broadcast %776 : vector<2x1xf32> to vector<2x2xf32>
    %778 = arith.divf %774, %777 : vector<2x2xf32>
    %c0_130 = arith.constant 0 : index
    %c0_131 = arith.constant 0 : index
    %779 = vector.load %arg13[%c0_130, %c0_131] : memref<2x2xf32, #tpu.memory_space<vmem>>, vector<2x2xf32>
    tpu.vector_store %arg13[%c0_130, %c0_131], %778 {strides = array<i32>} : memref<2x2xf32, #tpu.memory_space<vmem>>, vector<2x2xf32>,
    return
  }
}

</mosaic_0001>

<llo_original>
// kernel: text_bilstm_forward.1
$region0: #{text_bilstm_forward.1}
  #allocation0 [shape = 'u32[]', space=smem, size = 0x4, offset = 0x4, fixed_abs, tag = 'smem constant byte address 0x4 - core index']
  #allocation1 [shape = 'u32[144,128]{1,0:T(1,128)}', space=vmem, size = 0x12000, scoped, tag = 'internal scratch']
  #allocation2 [shape = 'f32[16,32]{1,0:T(8,128)}', space=vmem, size = 0x2000, scoped, tag = 'scratch operand']
  #allocation3 [shape = 'f32[16,32]{1,0:T(8,128)}', space=vmem, size = 0x2000, scoped, tag = 'scratch operand']
  %s0 = inlined_call_operand.vmem [shape: f32[16,64], index: 0, kind: input, shape index: {}]
  %s1 = inlined_call_operand.hbm [shape: f32[64,256], index: 1, kind: input, shape index: {}]
  %s2 = inlined_call_operand.hbm [shape: f32[64,256], index: 2, kind: input, shape index: {}]
  %s3 = inlined_call_operand.vmem [shape: f32[1,256], index: 3, kind: input, shape index: {}]
  %s4 = inlined_call_operand.hbm [shape: f32[2,32,256], index: 4, kind: input, shape index: {}]
  %s5 = inlined_call_operand.hbm [shape: f32[64,256], index: 5, kind: input, shape index: {}]
  %s6 = inlined_call_operand.vmem [shape: f32[1,256], index: 6, kind: input, shape index: {}]
  %s7 = inlined_call_operand.vmem [shape: f32[32,32], index: 7, kind: input, shape index: {}]
  %s8 = inlined_call_operand.vmem [shape: f32[1,32], index: 8, kind: input, shape index: {}]
  %s9 = inlined_call_operand.vmem [shape: f32[32,32], index: 9, kind: input, shape index: {}]
  %s10 = inlined_call_operand.vmem [shape: f32[1,32], index: 10, kind: input, shape index: {}]
  %s11 = inlined_call_operand.vmem [shape: f32[32,2], index: 11, kind: input, shape index: {}]
  %s12 = inlined_call_operand.vmem [shape: f32[1,2], index: 12, kind: input, shape index: {}]
  %s13 = inlined_call_operand.hbm [shape: f32[2,2], index: 13, kind: output, shape index: {}]
  %s14 = sld [smem:[#allocation0]]
  $region78: #{text_bilstm_forward.1} parent=0
    _
  %s16 = ssub.s32 1, %s14
  %s17 = scalar_select 0, %s16, %s14
  $region1: #{text_bilstm_forward.1} parent=0
    #allocation4 [shape = 'u8[65536]{0}', space=vmem, size = 0x10000, scoped, tag = 'input window, operand 1, single buffered']
    #allocation5 [shape = 's32[1]{0}', space=sflag, size = 0x4, scoped, tag = 'scoped memory for text_bilstm_forward.1']
    #allocation6 [shape = 's32[1]{0}', space=sflag, size = 0x4, scoped, tag = 'scoped memory for text_bilstm_forward.1']
    #allocation7 [shape = 'u8[65536]{0}', space=vmem, size = 0x10000, scoped, tag = 'input window, operand 2, single buffered']
    #allocation8 [shape = 's32[1]{0}', space=sflag, size = 0x4, scoped, tag = 'scoped memory for text_bilstm_forward.1']
    #allocation9 [shape = 'u8[65536]{0}', space=vmem, size = 0x10000, scoped, tag = 'input window, operand 4, single buffered']
    #allocation10 [shape = 'u8[65536]{0}', space=vmem, size = 0x10000, scoped, tag = 'input window, operand 5, single buffered']
    #allocation11 [shape = 's32[1]{0}', space=sflag, size = 0x4, scoped, tag = 'scoped memory for text_bilstm_forward.1']
    #allocation12 [shape = 'u8[1024]{0}', space=vmem, size = 0x400, scoped, tag = 'output window, operand 0, single buffered']
    %18 = vsyncpa [#allocation5], 0
    %19 = vsyncpa [#allocation8], 0
    %20 = vsyncpa [#allocation11], 0
    %21 = vsyncpa [#allocation6], 0
    // Predicated region
    $region2: #{text_bilstm_forward.1} parent=1 // pred_check
      _
    $region3: #{text_bilstm_forward.1} parent=1 // pred_check_branch
      %23 = sbr.rel (0) target = $region5
    $region4: #{text_bilstm_forward.1} parent=1 // pred_region
      _
    $region5: #{text_bilstm_forward.1} parent=1 // pred_fallthru
      _
    // Predicated region
    $region6: #{text_bilstm_forward.1} parent=1 // pred_check
      _
    $region7: #{text_bilstm_forward.1} parent=1 // pred_check_branch
      %25 = sbr.rel (0) target = $region9
    $region8: #{text_bilstm_forward.1} parent=1 // pred_region
      %s27 = ssub.s32 2048, 2048
      %28 = vsyncadd [#allocation5], %s27
      %s29 = sshll.u32 [#allocation4], 4
      %s30 = int_to_ptr.vmem [resolvable:$true] %s29
      %35 = dma.hbm_to_vmem [thread:$0]  %s1, 2048, %s30, [#allocation5], 256, 256, 16
    $region9: #{text_bilstm_forward.1} parent=1 // pred_fallthru
      _
    // Predicated region
    $region10: #{text_bilstm_forward.1} parent=1 // pred_check
      _
    $region11: #{text_bilstm_forward.1} parent=1 // pred_check_branch
      %37 = sbr.rel (0) target = $region13
    $region12: #{text_bilstm_forward.1} parent=1 // pred_region
      %s39 = ssub.s32 2048, 2048
      %40 = vsyncadd [#allocation8], %s39
      %s41 = sshll.u32 [#allocation7], 4
      %s42 = int_to_ptr.vmem [resolvable:$true] %s41
      %47 = dma.hbm_to_vmem [thread:$0]  %s2, 2048, %s42, [#allocation8], 256, 256, 16
    $region13: #{text_bilstm_forward.1} parent=1 // pred_fallthru
      _
    // Predicated region
    $region14: #{text_bilstm_forward.1} parent=1 // pred_check
      _
    $region15: #{text_bilstm_forward.1} parent=1 // pred_check_branch
      %49 = sbr.rel (0) target = $region17
    $region16: #{text_bilstm_forward.1} parent=1 // pred_region
      _
    $region17: #{text_bilstm_forward.1} parent=1 // pred_fallthru
      _
    // Predicated region
    $region18: #{text_bilstm_forward.1} parent=1 // pred_check
      _
    $region19: #{text_bilstm_forward.1} parent=1 // pred_check_branch
      %51 = sbr.rel (0) target = $region21
    $region20: #{text_bilstm_forward.1} parent=1 // pred_region
      %s53 = ssub.s32 2048, 2048
      %54 = vsyncadd [#allocation8], %s53
      %s55 = sshll.u32 [#allocation9], 4
      %s56 = int_to_ptr.vmem [resolvable:$true] %s55
      %61 = dma.hbm_to_vmem [thread:$0]  %s4, 2048, %s56, [#allocation8], 256, 256, 16
    $region21: #{text_bilstm_forward.1} parent=1 // pred_fallthru
      _
    // Predicated region
    $region22: #{text_bilstm_forward.1} parent=1 // pred_check
      _
    $region23: #{text_bilstm_forward.1} parent=1 // pred_check_branch
      %63 = sbr.rel (0) target = $region25
    $region24: #{text_bilstm_forward.1} parent=1 // pred_region
      %s65 = ssub.s32 2048, 2048
      %66 = vsyncadd [#allocation11], %s65
      %s67 = sshll.u32 [#allocation10], 4
      %s68 = int_to_ptr.vmem [resolvable:$true] %s67
      %73 = dma.hbm_to_vmem [thread:$0]  %s5, 2048, %s68, [#allocation11], 256, 256, 16
    $region25: #{text_bilstm_forward.1} parent=1 // pred_fallthru
      _
    // Predicated region
    $region26: #{text_bilstm_forward.1} parent=1 // pred_check
      _
    $region27: #{text_bilstm_forward.1} parent=1 // pred_check_branch
      %75 = sbr.rel (0) target = $region29
    $region28: #{text_bilstm_forward.1} parent=1 // pred_region
      _
    $region29: #{text_bilstm_forward.1} parent=1 // pred_fallthru
      _
    // Predicated region
    $region30: #{text_bilstm_forward.1} parent=1 // pred_check
      _
    $region31: #{text_bilstm_forward.1} parent=1 // pred_check_branch
      %77 = sbr.rel (0) target = $region33
    $region32: #{text_bilstm_forward.1} parent=1 // pred_region
      _
    $region33: #{text_bilstm_forward.1} parent=1 // pred_fallthru
      _
    // Predicated region
    $region34: #{text_bilstm_forward.1} parent=1 // pred_check
      _
    $region35: #{text_bilstm_forward.1} parent=1 // pred_check_branch
      %79 = sbr.rel (0) target = $region37
    $region36: #{text_bilstm_forward.1} parent=1 // pred_region
      _
    $region37: #{text_bilstm_forward.1} parent=1 // pred_fallthru
      _
    // Predicated region
    $region38: #{text_bilstm_forward.1} parent=1 // pred_check
      _
    $region39: #{text_bilstm_forward.1} parent=1 // pred_check_branch
      %81 = sbr.rel (0) target = $region41
    $region40: #{text_bilstm_forward.1} parent=1 // pred_region
      _
    $region41: #{text_bilstm_forward.1} parent=1 // pred_fallthru
      _
    // Predicated region
    $region42: #{text_bilstm_forward.1} parent=1 // pred_check
      _
    $region43: #{text_bilstm_forward.1} parent=1 // pred_check_branch
      %83 = sbr.rel (0) target = $region45
    $region44: #{text_bilstm_forward.1} parent=1 // pred_region
      _
    $region45: #{text_bilstm_forward.1} parent=1 // pred_fallthru
      _
    // Predicated region
    $region46: #{text_bilstm_forward.1} parent=1 // pred_check
      _
    $region47: #{text_bilstm_forward.1} parent=1 // pred_check_branch
      %85 = sbr.rel (0) target = $region49
    $region48: #{text_bilstm_forward.1} parent=1 // pred_region
      _
    $region49: #{text_bilstm_forward.1} parent=1 // pred_fallthru
      _
    // Predicated region
    $region50: #{text_bilstm_forward.1} parent=1 // pred_check
      _
    $region51: #{text_bilstm_forward.1} parent=1 // pred_check_branch
      %87 = sbr.rel (0) target = $region53
    $region52: #{text_bilstm_forward.1} parent=1 // pred_region
      _
    $region53: #{text_bilstm_forward.1} parent=1 // pred_fallthru
      _
    // Predicated region
    $region54: #{text_bilstm_forward.1} parent=1 // pred_check
      _
    $region55: #{text_bilstm_forward.1} parent=1 // pred_check_branch
      %89 = sbr.rel (0) target = $region57
    $region56: #{text_bilstm_forward.1} parent=1 // pred_region
      %90 = dma.done [#allocation5], 2048
    $region57: #{text_bilstm_forward.1} parent=1 // pred_fallthru
      _
    // Predicated region
    $region58: #{text_bilstm_forward.1} parent=1 // pred_check
      _
    $region59: #{text_bilstm_forward.1} parent=1 // pred_check_branch
      %92 = sbr.rel (0) target = $region61
    $region60: #{text_bilstm_forward.1} parent=1 // pred_region
      %93 = dma.done [#allocation8], 2048
    $region61: #{text_bilstm_forward.1} parent=1 // pred_fallthru
      _
    // Predicated region
    $region62: #{text_bilstm_forward.1} parent=1 // pred_check
      _
    $region63: #{text_bilstm_forward.1} parent=1 // pred_check_branch
      %95 = sbr.rel (0) target = $region65
    $region64: #{text_bilstm_forward.1} parent=1 // pred_region
      %96 = dma.done [#allocation8], 2048
    $region65: #{text_bilstm_forward.1} parent=1 // pred_fallthru
      _
    // Predicated region
    $region66: #{text_bilstm_forward.1} parent=1 // pred_check
      _
    $region67: #{text_bilstm_forward.1} parent=1 // pred_check_branch
      %98 = sbr.rel (0) target = $region69
    $region68: #{text_bilstm_forward.1} parent=1 // pred_region
      %99 = dma.done [#allocation11], 2048
    $region69: #{text_bilstm_forward.1} parent=1 // pred_fallthru
      _
    %v100 = vld [vmem:[%s0] sm:$0xff]
    %v101 = vld [vmem:[%s0 + $0x8] sm:$0xff]
    %v102 = vld [vmem:[#allocation4] sm:$0xff]
    %v103 = vld [vmem:[#allocation4 + $0x8] sm:$0xff]
    %v104 = vld [vmem:[#allocation4 + $0x10] sm:$0xff]
    %v105 = vld [vmem:[#allocation4 + $0x18] sm:$0xff]
    %v106 = vld [vmem:[#allocation4 + $0x20] sm:$0xff]
    %v107 = vld [vmem:[#allocation4 + $0x28] sm:$0xff]
    %v108 = vld [vmem:[#allocation4 + $0x30] sm:$0xff]
    %v109 = vld [vmem:[#allocation4 + $0x38] sm:$0xff]
    %v110 = vld [vmem:[#allocation4 + $0x40] sm:$0xff]
    %v111 = vld [vmem:[#allocation4 + $0x48] sm:$0xff]
    %v112 = vld [vmem:[#allocation4 + $0x50] sm:$0xff]
    %v113 = vld [vmem:[#allocation4 + $0x58] sm:$0xff]
    %v114 = vld [vmem:[#allocation4 + $0x60] sm:$0xff]
    %v115 = vld [vmem:[#allocation4 + $0x68] sm:$0xff]
    %v116 = vld [vmem:[#allocation4 + $0x70] sm:$0xff]
    %v117 = vld [vmem:[#allocation4 + $0x78] sm:$0xff]
    %v118 = vld [vmem:[%s3] sm:$0x3]
    %v120 = vlaneseq
    %v121 = vshrl.u32 %v120, 7
    %v122 = vsub.s32 0, %v121
    %v123 = vrot.slane %v118, %v122
    %v124 = vlaneseq
    %v125 = vshrl.u32 %v124, 7
    %v126 = vsub.s32 1, %v125
    %v127 = vrot.slane %v118, %v126
    %vm130 = vcmask 523264
    %v132 = vsel %vm130, %v100, 0
    %v135 = vsel %vm130, %v101, 0
    %137 = vmatprep.subr.mxu0 %v103
    %138 = vmatpush1.msra.mxu0 %v102
    %139 = vmatprep.subr.mxu0 %v105
    %140 = vmatpush1.msra.mxu0 %v104
    %141 = vmatprep.subr.mxu0 %v107
    %142 = vmatpush1.msra.mxu0 %v106
    %143 = vmatprep.subr.mxu0 %v109
    %144 = vmatpush1.msra.mxu0 %v108
    %145 = vmatprep.subr.mxu0 %v111
    %146 = vmatpush1.msra.mxu0 %v110
    %147 = vmatprep.subr.mxu0 %v113
    %148 = vmatpush1.msra.mxu0 %v112
    %149 = vmatprep.subr.mxu0 %v115
    %150 = vmatpush1.msra.mxu0 %v114
    %151 = vmatprep.subr.mxu0 %v117
    %152 = vmatpush1.msra.mxu0 %v116
    %153 = vmatprep.subr.mxu0 0.0
    %154 = vmatpush1.msra.mxu0 0.0
    %155 = vmatprep.subr.mxu0 0.0
    %156 = vmatpush1.msra.mxu0 0.0
    %157 = vmatprep.subr.mxu0 0.0
    %158 = vmatpush1.msra.mxu0 0.0
    %159 = vmatprep.subr.mxu0 0.0
    %160 = vmatpush1.msra.mxu0 0.0
    %161 = vmatprep.subr.mxu0 0.0
    %162 = vmatpush1.msra.mxu0 0.0
    %163 = vmatprep.subr.mxu0 0.0
    %164 = vmatpush1.msra.mxu0 0.0
    %165 = vmatprep.subr.mxu0 0.0
    %166 = vmatpush1.msra.mxu0 0.0
    %167 = vmatprep.subr.mxu0 0.0
    %168 = vmatpush1.msra.mxu0 0.0
    %169 = vmatprep.subr.mxu0 0.0
    %170 = vmatpush1.msra.mxu0 0.0
    %171 = vmatprep.subr.mxu0 0.0
    %172 = vmatpush1.msra.mxu0 0.0
    %173 = vmatprep.subr.mxu0 0.0
    %174 = vmatpush1.msra.mxu0 0.0
    %175 = vmatprep.subr.mxu0 0.0
    %176 = vmatpush1.msra.mxu0 0.0
    %177 = vmatprep.subr.mxu0 0.0
    %178 = vmatpush1.msra.mxu0 0.0
    %179 = vmatprep.subr.mxu0 0.0
    %180 = vmatpush1.msra.mxu0 0.0
    %181 = vmatprep.subr.mxu0 0.0
    %182 = vmatpush1.msra.mxu0 0.0
    %183 = vmatprep.subr.mxu0 0.0
    %184 = vmatpush1.msra.mxu0 0.0
    %185 = vmatprep.subr.mxu0 0.0
    %186 = vmatpush1.msra.mxu0 0.0
    %187 = vmatprep.subr.mxu0 0.0
    %188 = vmatpush1.msra.mxu0 0.0
    %189 = vmatprep.subr.mxu0 0.0
    %190 = vmatpush1.msra.mxu0 0.0
    %191 = vmatprep.subr.mxu0 0.0
    %192 = vmatpush1.msra.mxu0 0.0
    %193 = vmatprep.subr.mxu0 0.0
    %194 = vmatpush1.msra.mxu0 0.0
    %195 = vmatprep.subr.mxu0 0.0
    %196 = vmatpush1.msra.mxu0 0.0
    %197 = vmatprep.subr.mxu0 0.0
    %198 = vmatpush1.msra.mxu0 0.0
    %199 = vmatprep.subr.mxu0 0.0
    %200 = vmatpush1.msra.mxu0 0.0
    %201 = vmatprep.mubr.f32.mxu0 0.0
    %202 = vmatmul.mubr.f32.gmra.mrb[0].mxu0 %v132
    %v203 = vpop.f32.mrb[0].mxu0
    %v204 = vadd.f32 %v123, %v203
    %v205 = vpop.f32.mrb[0].mxu0
    %v206 = vadd.f32 %v127, %v205
    %207 = vmatprep.mubr.f32.mxu0 0.0
    %208 = vmatmul.mubr.f32.gmra.mrb[0].mxu0 %v135
    %v209 = vpop.f32.mrb[0].mxu0
    %v210 = vadd.f32 %v123, %v209
    %v211 = vpop.f32.mrb[0].mxu0
    %v212 = vadd.f32 %v127, %v211
    %213 = vdwg.mxu0
    %v214 = vld [vmem:[#allocation7] sm:$0xff]
    %v215 = vld [vmem:[#allocation7 + $0x8] sm:$0xff]
    %v216 = vld [vmem:[#allocation7 + $0x10] sm:$0xff]
    %v217 = vld [vmem:[#allocation7 + $0x18] sm:$0xff]
    %v218 = vld [vmem:[#allocation7 + $0x20] sm:$0xff]
    %v219 = vld [vmem:[#allocation7 + $0x28] sm:$0xff]
    %v220 = vld [vmem:[#allocation7 + $0x30] sm:$0xff]
    %v221 = vld [vmem:[#allocation7 + $0x38] sm:$0xff]
    %v222 = vld [vmem:[#allocation7 + $0x40] sm:$0xff]
    %v223 = vld [vmem:[#allocation7 + $0x48] sm:$0xff]
    %v224 = vld [vmem:[#allocation7 + $0x50] sm:$0xff]
    %v225 = vld [vmem:[#allocation7 + $0x58] sm:$0xff]
    %v226 = vld [vmem:[#allocation7 + $0x60] sm:$0xff]
    %v227 = vld [vmem:[#allocation7 + $0x68] sm:$0xff]
    %v228 = vld [vmem:[#allocation7 + $0x70] sm:$0xff]
    %v229 = vld [vmem:[#allocation7 + $0x78] sm:$0xff]
    %v231 = vsel %vm130, 0.0, 0
    %233 = vmatprep.subr.mxu0 %v215
    %234 = vmatpush1.msra.mxu0 %v214
    %235 = vmatprep.subr.mxu0 %v217
    %236 = vmatpush1.msra.mxu0 %v216
    %237 = vmatprep.subr.mxu0 %v219
    %238 = vmatpush1.msra.mxu0 %v218
    %239 = vmatprep.subr.mxu0 %v221
    %240 = vmatpush1.msra.mxu0 %v220
    %241 = vmatprep.subr.mxu0 %v223
    %242 = vmatpush1.msra.mxu0 %v222
    %243 = vmatprep.subr.mxu0 %v225
    %244 = vmatpush1.msra.mxu0 %v224
    %245 = vmatprep.subr.mxu0 %v227
    %246 = vmatpush1.msra.mxu0 %v226
    %247 = vmatprep.subr.mxu0 %v229
    %248 = vmatpush1.msra.mxu0 %v228
    %249 = vmatprep.subr.mxu0 0.0
    %250 = vmatpush1.msra.mxu0 0.0
    %251 = vmatprep.subr.mxu0 0.0
    %252 = vmatpush1.msra.mxu0 0.0
    %253 = vmatprep.subr.mxu0 0.0
    %254 = vmatpush1.msra.mxu0 0.0
    %255 = vmatprep.subr.mxu0 0.0
    %256 = vmatpush1.msra.mxu0 0.0
    %257 = vmatprep.subr.mxu0 0.0
    %258 = vmatpush1.msra.mxu0 0.0
    %259 = vmatprep.subr.mxu0 0.0
    %260 = vmatpush1.msra.mxu0 0.0
    %261 = vmatprep.subr.mxu0 0.0
    %262 = vmatpush1.msra.mxu0 0.0
    %263 = vmatprep.subr.mxu0 0.0
    %264 = vmatpush1.msra.mxu0 0.0
    %265 = vmatprep.subr.mxu0 0.0
    %266 = vmatpush1.msra.mxu0 0.0
    %267 = vmatprep.subr.mxu0 0.0
    %268 = vmatpush1.msra.mxu0 0.0
    %269 = vmatprep.subr.mxu0 0.0
    %270 = vmatpush1.msra.mxu0 0.0
    %271 = vmatprep.subr.mxu0 0.0
    %272 = vmatpush1.msra.mxu0 0.0
    %273 = vmatprep.subr.mxu0 0.0
    %274 = vmatpush1.msra.mxu0 0.0
    %275 = vmatprep.subr.mxu0 0.0
    %276 = vmatpush1.msra.mxu0 0.0
    %277 = vmatprep.subr.mxu0 0.0
    %278 = vmatpush1.msra.mxu0 0.0
    %279 = vmatprep.subr.mxu0 0.0
    %280 = vmatpush1.msra.mxu0 0.0
    %281 = vmatprep.subr.mxu0 0.0
    %282 = vmatpush1.msra.mxu0 0.0
    %283 = vmatprep.subr.mxu0 0.0
    %284 = vmatpush1.msra.mxu0 0.0
    %285 = vmatprep.subr.mxu0 0.0
    %286 = vmatpush1.msra.mxu0 0.0
    %287 = vmatprep.subr.mxu0 0.0
    %288 = vmatpush1.msra.mxu0 0.0
    %289 = vmatprep.subr.mxu0 0.0
    %290 = vmatpush1.msra.mxu0 0.0
    %291 = vmatprep.subr.mxu0 0.0
    %292 = vmatpush1.msra.mxu0 0.0
    %293 = vmatprep.subr.mxu0 0.0
    %294 = vmatpush1.msra.mxu0 0.0
    %295 = vmatprep.subr.mxu0 0.0
    %296 = vmatpush1.msra.mxu0 0.0
    %297 = vmatprep.mubr.f32.mxu0 0.0
    %298 = vmatmul.mubr.f32.gmra.mrb[0].mxu0 %v231
    %v299 = vpop.f32.mrb[0].mxu0
    %v300 = vadd.f32 0.0, %v299
    %v301 = vpop.f32.mrb[0].mxu0
    %v302 = vadd.f32 0.0, %v301
    %303 = vdwg.mxu0
    %v304 = vadd.f32 %v204, %v300
    %v306 = vrot.slane %v302, 2
    %v308 = vadd.f32 %v212, %v306
    %v309 = vxor.u32 %v304, 2147483648
    %v310 = vmul.f32 %v309, 1.442695
    %v311 = vpow.pop %v310
    %v312 = vadd.f32 %v311, 1.0
    %v313 = vrcp.pop %v312
    %v314 = vmul.f32 1.0, %v313
    %v315 = vtanh.pop %v304
    %v316 = vmul.f32 %v314, 0.0
    %318 = vrot.lane.b32.xlu0 %v315, 64
    %v319 = vpop.permute.xlu0 %318
    %v321 = vmul.f32 %v314, %v319
    %323 = vrot.lane.b32.xlu0 %v321, 32
    %v324 = vpop.permute.xlu0 %323
    %v326 = vadd.f32 %v316, %v324
    %v327 = vtanh.pop %v326
    %329 = vrot.lane.b32.xlu0 %v327, 64
    %v330 = vpop.permute.xlu0 %329
    %v332 = vmul.f32 %v314, %v330
    %v333 = vxor.u32 %v308, 2147483648
    %v334 = vmul.f32 %v333, 1.442695
    %v335 = vpow.pop %v334
    %v336 = vadd.f32 %v335, 1.0
    %v337 = vrcp.pop %v336
    %v338 = vmul.f32 1.0, %v337
    %v339 = vtanh.pop %v308
    %v340 = vmul.f32 %v338, 0.0
    %342 = vrot.lane.b32.xlu0 %v339, 64
    %v343 = vpop.permute.xlu0 %342
    %v345 = vmul.f32 %v338, %v343
    %347 = vrot.lane.b32.xlu0 %v345, 32
    %v348 = vpop.permute.xlu0 %347
    %v350 = vadd.f32 %v340, %v348
    %v351 = vtanh.pop %v350
    %353 = vrot.lane.b32.xlu0 %v351, 64
    %v354 = vpop.permute.xlu0 %353
    %v356 = vmul.f32 %v338, %v354
    %358 = vrot.lane.b32.xlu0 %v332, 32
    %v359 = vpop.permute.xlu0 %358
    %vm361 = vcmask 254976
    %362 = vst.msk [vmem:[#allocation2] sm:$0x3] %vm361, %v359
    %364 = vrot.lane.b32.xlu0 %v356, 32
    %v365 = vpop.permute.xlu0 %364
    %vm367 = vcmask 261126
    %368 = vst.msk [vmem:[#allocation3 + $0x8] sm:$0xc0] %vm367, %v365
    %v369 = vrot.slane %v356, 6
    %370 = vrot.lane.b32.xlu0 %v369, 64
    %v371 = vpop.permute.xlu0 %370
    %vm373 = vcmask 261120
    %v374 = vsel %vm373, %v359, %v371
    %v376 = vsel %vm130, %v374, 0
    %378 = vmatprep.subr.mxu0 %v215
    %379 = vmatpush1.msra.mxu0 %v214
    %380 = vmatprep.subr.mxu0 %v217
    %381 = vmatpush1.msra.mxu0 %v216
    %382 = vmatprep.subr.mxu0 %v219
    %383 = vmatpush1.msra.mxu0 %v218
    %384 = vmatprep.subr.mxu0 %v221
    %385 = vmatpush1.msra.mxu0 %v220
    %386 = vmatprep.subr.mxu0 %v223
    %387 = vmatpush1.msra.mxu0 %v222
    %388 = vmatprep.subr.mxu0 %v225
    %389 = vmatpush1.msra.mxu0 %v224
    %390 = vmatprep.subr.mxu0 %v227
    %391 = vmatpush1.msra.mxu0 %v226
    %392 = vmatprep.subr.mxu0 %v229
    %393 = vmatpush1.msra.mxu0 %v228
    %394 = vmatprep.subr.mxu0 0.0
    %395 = vmatpush1.msra.mxu0 0.0
    %396 = vmatprep.subr.mxu0 0.0
    %397 = vmatpush1.msra.mxu0 0.0
    %398 = vmatprep.subr.mxu0 0.0
    %399 = vmatpush1.msra.mxu0 0.0
    %400 = vmatprep.subr.mxu0 0.0
    %401 = vmatpush1.msra.mxu0 0.0
    %402 = vmatprep.subr.mxu0 0.0
    %403 = vmatpush1.msra.mxu0 0.0
    %404 = vmatprep.subr.mxu0 0.0
    %405 = vmatpush1.msra.mxu0 0.0
    %406 = vmatprep.subr.mxu0 0.0
    %407 = vmatpush1.msra.mxu0 0.0
    %408 = vmatprep.subr.mxu0 0.0
    %409 = vmatpush1.msra.mxu0 0.0
    %410 = vmatprep.subr.mxu0 0.0
    %411 = vmatpush1.msra.mxu0 0.0
    %412 = vmatprep.subr.mxu0 0.0
    %413 = vmatpush1.msra.mxu0 0.0
    %414 = vmatprep.subr.mxu0 0.0
    %415 = vmatpush1.msra.mxu0 0.0
    %416 = vmatprep.subr.mxu0 0.0
    %417 = vmatpush1.msra.mxu0 0.0
    %418 = vmatprep.subr.mxu0 0.0
    %419 = vmatpush1.msra.mxu0 0.0
    %420 = vmatprep.subr.mxu0 0.0
    %421 = vmatpush1.msra.mxu0 0.0
    %422 = vmatprep.subr.mxu0 0.0
    %423 = vmatpush1.msra.mxu0 0.0
    %424 = vmatprep.subr.mxu0 0.0
    %425 = vmatpush1.msra.mxu0 0.0
    %426 = vmatprep.subr.mxu0 0.0
    %427 = vmatpush1.msra.mxu0 0.0
    %428 = vmatprep.subr.mxu0 0.0
    %429 = vmatpush1.msra.mxu0 0.0
    %430 = vmatprep.subr.mxu0 0.0
    %431 = vmatpush1.msra.mxu0 0.0
    %432 = vmatprep.subr.mxu0 0.0
    %433 = vmatpush1.msra.mxu0 0.0
    %434 = vmatprep.subr.mxu0 0.0
    %435 = vmatpush1.msra.mxu0 0.0
    %436 = vmatprep.subr.mxu0 0.0
    %437 = vmatpush1.msra.mxu0 0.0
    %438 = vmatprep.subr.mxu0 0.0
    %439 = vmatpush1.msra.mxu0 0.0
    %440 = vmatprep.subr.mxu0 0.0
    %441 = vmatpush1.msra.mxu0 0.0
    %442 = vmatprep.mubr.f32.mxu0 0.0
    %443 = vmatmul.mubr.f32.gmra.mrb[0].mxu0 %v376
    %v444 = vpop.f32.mrb[0].mxu0
    %v445 = vadd.f32 0.0, %v444
    %v446 = vpop.f32.mrb[0].mxu0
    %v447 = vadd.f32 0.0, %v446
    %448 = vdwg.mxu0
    %v450 = vrot.slane %v445, 6
    %v452 = vadd.f32 %v204, %v450
    %v454 = vrot.slane %v447, 4
    %v456 = vadd.f32 %v212, %v454
    %v457 = vxor.u32 %v452, 2147483648
    %v458 = vmul.f32 %v457, 1.442695
    %v459 = vpow.pop %v458
    %v460 = vadd.f32 %v459, 1.0
    %v461 = vrcp.pop %v460
    %v462 = vmul.f32 1.0, %v461
    %v463 = vtanh.pop %v452
    %v465 = vrot.slane %v326, 6
    %v467 = vmul.f32 %v462, %v465
    %469 = vrot.lane.b32.xlu0 %v463, 64
    %v470 = vpop.permute.xlu0 %469
    %v472 = vmul.f32 %v462, %v470
    %474 = vrot.lane.b32.xlu0 %v472, 32
    %v475 = vpop.permute.xlu0 %474
    %v477 = vadd.f32 %v467, %v475
    %v478 = vtanh.pop %v477
    %480 = vrot.lane.b32.xlu0 %v478, 64
    %v481 = vpop.permute.xlu0 %480
    %v483 = vmul.f32 %v462, %v481
    %v484 = vxor.u32 %v456, 2147483648
    %v485 = vmul.f32 %v484, 1.442695
    %v486 = vpow.pop %v485
    %v487 = vadd.f32 %v486, 1.0
    %v488 = vrcp.pop %v487
    %v489 = vmul.f32 1.0, %v488
    %v490 = vtanh.pop %v456
    %v492 = vrot.slane %v350, 2
    %v494 = vmul.f32 %v489, %v492
    %496 = vrot.lane.b32.xlu0 %v490, 64
    %v497 = vpop.permute.xlu0 %496
    %v499 = vmul.f32 %v489, %v497
    %501 = vrot.lane.b32.xlu0 %v499, 32
    %v502 = vpop.permute.xlu0 %501
    %v504 = vadd.f32 %v494, %v502
    %v505 = vtanh.pop %v504
    %507 = vrot.lane.b32.xlu0 %v505, 64
    %v508 = vpop.permute.xlu0 %507
    %v510 = vmul.f32 %v489, %v508
    %512 = vrot.lane.b32.xlu0 %v483, 32
    %v513 = vpop.permute.xlu0 %512
    %vm515 = vcmask 257026
    %516 = vst.msk [vmem:[#allocation2] sm:$0xc] %vm515, %v513
    %518 = vrot.lane.b32.xlu0 %v510, 32
    %v519 = vpop.permute.xlu0 %518
    %vm521 = vcmask 259076
    %522 = vst.msk [vmem:[#allocation3 + $0x8] sm:$0x30] %vm521, %v519
    %v523 = vrot.slane %v510, 2
    %524 = vrot.lane.b32.xlu0 %v523, 64
    %v525 = vpop.permute.xlu0 %524
    %v527 = vsel %vm373, %v513, %v525
    %v529 = vrot.slane %v527, 2
    %v530 = vsel %vm130, %v529, 0
    %532 = vmatprep.subr.mxu0 %v215
    %533 = vmatpush1.msra.mxu0 %v214
    %534 = vmatprep.subr.mxu0 %v217
    %535 = vmatpush1.msra.mxu0 %v216
    %536 = vmatprep.subr.mxu0 %v219
    %537 = vmatpush1.msra.mxu0 %v218
    %538 = vmatprep.subr.mxu0 %v221
    %539 = vmatpush1.msra.mxu0 %v220
    %540 = vmatprep.subr.mxu0 %v223
    %541 = vmatpush1.msra.mxu0 %v222
    %542 = vmatprep.subr.mxu0 %v225
    %543 = vmatpush1.msra.mxu0 %v224
    %544 = vmatprep.subr.mxu0 %v227
    %545 = vmatpush1.msra.mxu0 %v226
    %546 = vmatprep.subr.mxu0 %v229
    %547 = vmatpush1.msra.mxu0 %v228
    %548 = vmatprep.subr.mxu0 0.0
    %549 = vmatpush1.msra.mxu0 0.0
    %550 = vmatprep.subr.mxu0 0.0
    %551 = vmatpush1.msra.mxu0 0.0
    %552 = vmatprep.subr.mxu0 0.0
    %553 = vmatpush1.msra.mxu0 0.0
    %554 = vmatprep.subr.mxu0 0.0
    %555 = vmatpush1.msra.mxu0 0.0
    %556 = vmatprep.subr.mxu0 0.0
    %557 = vmatpush1.msra.mxu0 0.0
    %558 = vmatprep.subr.mxu0 0.0
    %559 = vmatpush1.msra.mxu0 0.0
    %560 = vmatprep.subr.mxu0 0.0
    %561 = vmatpush1.msra.mxu0 0.0
    %562 = vmatprep.subr.mxu0 0.0
    %563 = vmatpush1.msra.mxu0 0.0
    %564 = vmatprep.subr.mxu0 0.0
    %565 = vmatpush1.msra.mxu0 0.0
    %566 = vmatprep.subr.mxu0 0.0
    %567 = vmatpush1.msra.mxu0 0.0
    %568 = vmatprep.subr.mxu0 0.0
    %569 = vmatpush1.msra.mxu0 0.0
    %570 = vmatprep.subr.mxu0 0.0
    %571 = vmatpush1.msra.mxu0 0.0
    %572 = vmatprep.subr.mxu0 0.0
    %573 = vmatpush1.msra.mxu0 0.0
    %574 = vmatprep.subr.mxu0 0.0
    %575 = vmatpush1.msra.mxu0 0.0
    %576 = vmatprep.subr.mxu0 0.0
    %577 = vmatpush1.msra.mxu0 0.0
    %578 = vmatprep.subr.mxu0 0.0
    %579 = vmatpush1.msra.mxu0 0.0
    %580 = vmatprep.subr.mxu0 0.0
    %581 = vmatpush1.msra.mxu0 0.0
    %582 = vmatprep.subr.mxu0 0.0
    %583 = vmatpush1.msra.mxu0 0.0
    %584 = vmatprep.subr.mxu0 0.0
    %585 = vmatpush1.msra.mxu0 0.0
    %586 = vmatprep.subr.mxu0 0.0
    %587 = vmatpush1.msra.mxu0 0.0
    %588 = vmatprep.subr.mxu0 0.0
    %589 = vmatpush1.msra.mxu0 0.0
    %590 = vmatprep.subr.mxu0 0.0
    %591 = vmatpush1.msra.mxu0 0.0
    %592 = vmatprep.subr.mxu0 0.0
    %593 = vmatpush1.msra.mxu0 0.0
    %594 = vmatprep.subr.mxu0 0.0
    %595 = vmatpush1.msra.mxu0 0.0
    %596 = vmatprep.mubr.f32.mxu0 0.0
    %597 = vmatmul.mubr.f32.gmra.mrb[0].mxu0 %v530
    %v598 = vpop.f32.mrb[0].mxu0
    %v599 = vadd.f32 0.0, %v598
    %v600 = vpop.f32.mrb[0].mxu0
    %v601 = vadd.f32 0.0, %v600
    %602 = vdwg.mxu0
    %v604 = vrot.slane %v599, 4
    %v606 = vadd.f32 %v204, %v604
    %v608 = vrot.slane %v601, 6
    %v610 = vadd.f32 %v212, %v608
    %v611 = vxor.u32 %v606, 2147483648
    %v612 = vmul.f32 %v611, 1.442695
    %v613 = vpow.pop %v612
    %v614 = vadd.f32 %v613, 1.0
    %v615 = vrcp.pop %v614
    %v616 = vmul.f32 1.0, %v615
    %v617 = vtanh.pop %v606
    %v619 = vrot.slane %v477, 6
    %v621 = vmul.f32 %v616, %v619
    %623 = vrot.lane.b32.xlu0 %v617, 64
    %v624 = vpop.permute.xlu0 %623
    %v626 = vmul.f32 %v616, %v624
    %628 = vrot.lane.b32.xlu0 %v626, 32
    %v629 = vpop.permute.xlu0 %628
    %v631 = vadd.f32 %v621, %v629
    %v632 = vtanh.pop %v631
    %634 = vrot.lane.b32.xlu0 %v632, 64
    %v635 = vpop.permute.xlu0 %634
    %v637 = vmul.f32 %v616, %v635
    %v638 = vxor.u32 %v610, 2147483648
    %v639 = vmul.f32 %v638, 1.442695
    %v640 = vpow.pop %v639
    %v641 = vadd.f32 %v640, 1.0
    %v642 = vrcp.pop %v641
    %v643 = vmul.f32 1.0, %v642
    %v644 = vtanh.pop %v610
    %v646 = vrot.slane %v504, 2
    %v648 = vmul.f32 %v643, %v646
    %650 = vrot.lane.b32.xlu0 %v644, 64
    %v651 = vpop.permute.xlu0 %650
    %v653 = vmul.f32 %v643, %v651
    %655 = vrot.lane.b32.xlu0 %v653, 32
    %v656 = vpop.permute.xlu0 %655
    %v658 = vadd.f32 %v648, %v656
    %v659 = vtanh.pop %v658
    %661 = vrot.lane.b32.xlu0 %v659, 64
    %v662 = vpop.permute.xlu0 %661
    %v664 = vmul.f32 %v643, %v662
    %666 = vrot.lane.b32.xlu0 %v637, 32
    %v667 = vpop.permute.xlu0 %666
    %669 = vst.msk [vmem:[#allocation2] sm:$0x30] %vm521, %v667
    %671 = vrot.lane.b32.xlu0 %v664, 32
    %v672 = vpop.permute.xlu0 %671
    %674 = vst.msk [vmem:[#allocation3 + $0x8] sm:$0xc] %vm515, %v672
    %v675 = vrot.slane %v664, 6
    %676 = vrot.lane.b32.xlu0 %v675, 64
    %v677 = vpop.permute.xlu0 %676
    %v679 = vsel %vm373, %v667, %v677
    %v681 = vrot.slane %v679, 4
    %v682 = vsel %vm130, %v681, 0
    %684 = vmatprep.subr.mxu0 %v215
    %685 = vmatpush1.msra.mxu0 %v214
    %686 = vmatprep.subr.mxu0 %v217
    %687 = vmatpush1.msra.mxu0 %v216
    %688 = vmatprep.subr.mxu0 %v219
    %689 = vmatpush1.msra.mxu0 %v218
    %690 = vmatprep.subr.mxu0 %v221
    %691 = vmatpush1.msra.mxu0 %v220
    %692 = vmatprep.subr.mxu0 %v223
    %693 = vmatpush1.msra.mxu0 %v222
    %694 = vmatprep.subr.mxu0 %v225
    %695 = vmatpush1.msra.mxu0 %v224
    %696 = vmatprep.subr.mxu0 %v227
    %697 = vmatpush1.msra.mxu0 %v226
    %698 = vmatprep.subr.mxu0 %v229
    %699 = vmatpush1.msra.mxu0 %v228
    %700 = vmatprep.subr.mxu0 0.0
    %701 = vmatpush1.msra.mxu0 0.0
    %702 = vmatprep.subr.mxu0 0.0
    %703 = vmatpush1.msra.mxu0 0.0
    %704 = vmatprep.subr.mxu0 0.0
    %705 = vmatpush1.msra.mxu0 0.0
    %706 = vmatprep.subr.mxu0 0.0
    %707 = vmatpush1.msra.mxu0 0.0
    %708 = vmatprep.subr.mxu0 0.0
    %709 = vmatpush1.msra.mxu0 0.0
    %710 = vmatprep.subr.mxu0 0.0
    %711 = vmatpush1.msra.mxu0 0.0
    %712 = vmatprep.subr.mxu0 0.0
    %713 = vmatpush1.msra.mxu0 0.0
    %714 = vmatprep.subr.mxu0 0.0
    %715 = vmatpush1.msra.mxu0 0.0
    %716 = vmatprep.subr.mxu0 0.0
    %717 = vmatpush1.msra.mxu0 0.0
    %718 = vmatprep.subr.mxu0 0.0
    %719 = vmatpush1.msra.mxu0 0.0
    %720 = vmatprep.subr.mxu0 0.0
    %721 = vmatpush1.msra.mxu0 0.0
    %722 = vmatprep.subr.mxu0 0.0
    %723 = vmatpush1.msra.mxu0 0.0
    %724 = vmatprep.subr.mxu0 0.0
    %725 = vmatpush1.msra.mxu0 0.0
    %726 = vmatprep.subr.mxu0 0.0
    %727 = vmatpush1.msra.mxu0 0.0
    %728 = vmatprep.subr.mxu0 0.0
    %729 = vmatpush1.msra.mxu0 0.0
    %730 = vmatprep.subr.mxu0 0.0
    %731 = vmatpush1.msra.mxu0 0.0
    %732 = vmatprep.subr.mxu0 0.0
    %733 = vmatpush1.msra.mxu0 0.0
    %734 = vmatprep.subr.mxu0 0.0
    %735 = vmatpush1.msra.mxu0 0.0
    %736 = vmatprep.subr.mxu0 0.0
    %737 = vmatpush1.msra.mxu0 0.0
    %738 = vmatprep.subr.mxu0 0.0
    %739 = vmatpush1.msra.mxu0 0.0
    %740 = vmatprep.subr.mxu0 0.0
    %741 = vmatpush1.msra.mxu0 0.0
    %742 = vmatprep.subr.mxu0 0.0
    %743 = vmatpush1.msra.mxu0 0.0
    %744 = vmatprep.subr.mxu0 0.0
    %745 = vmatpush1.msra.mxu0 0.0
    %746 = vmatprep.subr.mxu0 0.0
    %747 = vmatpush1.msra.mxu0 0.0
    %748 = vmatprep.mubr.f32.mxu0 0.0
    %749 = vmatmul.mubr.f32.gmra.mrb[0].mxu0 %v682
    %v750 = vpop.f32.mrb[0].mxu0
    %v751 = vadd.f32 0.0, %v750
    %v752 = vpop.f32.mrb[0].mxu0
    %v753 = vadd.f32 0.0, %v752
    %754 = vdwg.mxu0
    %v756 = vrot.slane %v751, 2
    %v758 = vadd.f32 %v204, %v756
    %v759 = vadd.f32 %v212, %v753
    %v760 = vxor.u32 %v758, 2147483648
    %v761 = vmul.f32 %v760, 1.442695
    %v762 = vpow.pop %v761
    %v763 = vadd.f32 %v762, 1.0
    %v764 = vrcp.pop %v763
    %v765 = vmul.f32 1.0, %v764
    %v766 = vtanh.pop %v758
    %v768 = vrot.slane %v631, 6
    %v770 = vmul.f32 %v765, %v768
    %772 = vrot.lane.b32.xlu0 %v766, 64
    %v773 = vpop.permute.xlu0 %772
    %v775 = vmul.f32 %v765, %v773
    %777 = vrot.lane.b32.xlu0 %v775, 32
    %v778 = vpop.permute.xlu0 %777
    %v780 = vadd.f32 %v770, %v778
    %v781 = vtanh.pop %v780
    %783 = vrot.lane.b32.xlu0 %v781, 64
    %v784 = vpop.permute.xlu0 %783
    %v786 = vmul.f32 %v765, %v784
    %v787 = vxor.u32 %v759, 2147483648
    %v788 = vmul.f32 %v787, 1.442695
    %v789 = vpow.pop %v788
    %v790 = vadd.f32 %v789, 1.0
    %v791 = vrcp.pop %v790
    %v792 = vmul.f32 1.0, %v791
    %v793 = vtanh.pop %v759
    %v795 = vrot.slane %v658, 2
    %v797 = vmul.f32 %v792, %v795
    %799 = vrot.lane.b32.xlu0 %v793, 64
    %v800 = vpop.permute.xlu0 %799
    %v802 = vmul.f32 %v792, %v800
    %804 = vrot.lane.b32.xlu0 %v802, 32
    %v805 = vpop.permute.xlu0 %804
    %v807 = vadd.f32 %v797, %v805
    %v808 = vtanh.pop %v807
    %810 = vrot.lane.b32.xlu0 %v808, 64
    %v811 = vpop.permute.xlu0 %810
    %v813 = vmul.f32 %v792, %v811
    %815 = vrot.lane.b32.xlu0 %v786, 32
    %v816 = vpop.permute.xlu0 %815
    %818 = vst.msk [vmem:[#allocation2] sm:$0xc0] %vm367, %v816
    %820 = vrot.lane.b32.xlu0 %v813, 32
    %v821 = vpop.permute.xlu0 %820
    %823 = vst.msk [vmem:[#allocation3 + $0x8] sm:$0x3] %vm361, %v821
    %v824 = vrot.slane %v813, 2
    %825 = vrot.lane.b32.xlu0 %v824, 64
    %v826 = vpop.permute.xlu0 %825
    %v828 = vsel %vm373, %v816, %v826
    %v830 = vrot.slane %v828, 6
    %v831 = vsel %vm130, %v830, 0
    %833 = vmatprep.subr.mxu0 %v215
    %834 = vmatpush1.msra.mxu0 %v214
    %835 = vmatprep.subr.mxu0 %v217
    %836 = vmatpush1.msra.mxu0 %v216
    %837 = vmatprep.subr.mxu0 %v219
    %838 = vmatpush1.msra.mxu0 %v218
    %839 = vmatprep.subr.mxu0 %v221
    %840 = vmatpush1.msra.mxu0 %v220
    %841 = vmatprep.subr.mxu0 %v223
    %842 = vmatpush1.msra.mxu0 %v222
    %843 = vmatprep.subr.mxu0 %v225
    %844 = vmatpush1.msra.mxu0 %v224
    %845 = vmatprep.subr.mxu0 %v227
    %846 = vmatpush1.msra.mxu0 %v226
    %847 = vmatprep.subr.mxu0 %v229
    %848 = vmatpush1.msra.mxu0 %v228
    %849 = vmatprep.subr.mxu0 0.0
    %850 = vmatpush1.msra.mxu0 0.0
    %851 = vmatprep.subr.mxu0 0.0
    %852 = vmatpush1.msra.mxu0 0.0
    %853 = vmatprep.subr.mxu0 0.0
    %854 = vmatpush1.msra.mxu0 0.0
    %855 = vmatprep.subr.mxu0 0.0
    %856 = vmatpush1.msra.mxu0 0.0
    %857 = vmatprep.subr.mxu0 0.0
    %858 = vmatpush1.msra.mxu0 0.0
    %859 = vmatprep.subr.mxu0 0.0
    %860 = vmatpush1.msra.mxu0 0.0
    %861 = vmatprep.subr.mxu0 0.0
    %862 = vmatpush1.msra.mxu0 0.0
    %863 = vmatprep.subr.mxu0 0.0
    %864 = vmatpush1.msra.mxu0 0.0
    %865 = vmatprep.subr.mxu0 0.0
    %866 = vmatpush1.msra.mxu0 0.0
    %867 = vmatprep.subr.mxu0 0.0
    %868 = vmatpush1.msra.mxu0 0.0
    %869 = vmatprep.subr.mxu0 0.0
    %870 = vmatpush1.msra.mxu0 0.0
    %871 = vmatprep.subr.mxu0 0.0
    %872 = vmatpush1.msra.mxu0 0.0
    %873 = vmatprep.subr.mxu0 0.0
    %874 = vmatpush1.msra.mxu0 0.0
    %875 = vmatprep.subr.mxu0 0.0
    %876 = vmatpush1.msra.mxu0 0.0
    %877 = vmatprep.subr.mxu0 0.0
    %878 = vmatpush1.msra.mxu0 0.0
    %879 = vmatprep.subr.mxu0 0.0
    %880 = vmatpush1.msra.mxu0 0.0
    %881 = vmatprep.subr.mxu0 0.0
    %882 = vmatpush1.msra.mxu0 0.0
    %883 = vmatprep.subr.mxu0 0.0
    %884 = vmatpush1.msra.mxu0 0.0
    %885 = vmatprep.subr.mxu0 0.0
    %886 = vmatpush1.msra.mxu0 0.0
    %887 = vmatprep.subr.mxu0 0.0
    %888 = vmatpush1.msra.mxu0 0.0
    %889 = vmatprep.subr.mxu0 0.0
    %890 = vmatpush1.msra.mxu0 0.0
    %891 = vmatprep.subr.mxu0 0.0
    %892 = vmatpush1.msra.mxu0 0.0
    %893 = vmatprep.subr.mxu0 0.0
    %894 = vmatpush1.msra.mxu0 0.0
    %895 = vmatprep.subr.mxu0 0.0
    %896 = vmatpush1.msra.mxu0 0.0
    %897 = vmatprep.mubr.f32.mxu0 0.0
    %898 = vmatmul.mubr.f32.gmra.mrb[0].mxu0 %v831
    %v899 = vpop.f32.mrb[0].mxu0
    %v900 = vadd.f32 0.0, %v899
    %v901 = vpop.f32.mrb[0].mxu0
    %v902 = vadd.f32 0.0, %v901
    %903 = vdwg.mxu0
    %v904 = vadd.f32 %v210, %v900
    %v906 = vrot.slane %v902, 2
    %v908 = vadd.f32 %v206, %v906
    %v909 = vxor.u32 %v904, 2147483648
    %v910 = vmul.f32 %v909, 1.442695
    %v911 = vpow.pop %v910
    %v912 = vadd.f32 %v911, 1.0
    %v913 = vrcp.pop %v912
    %v914 = vmul.f32 1.0, %v913
    %v915 = vtanh.pop %v904
    %v917 = vrot.slane %v780, 6
    %v919 = vmul.f32 %v914, %v917
    %921 = vrot.lane.b32.xlu0 %v915, 64
    %v922 = vpop.permute.xlu0 %921
    %v924 = vmul.f32 %v914, %v922
    %926 = vrot.lane.b32.xlu0 %v924, 32
    %v927 = vpop.permute.xlu0 %926
    %v929 = vadd.f32 %v919, %v927
    %v930 = vtanh.pop %v929
    %932 = vrot.lane.b32.xlu0 %v930, 64
    %v933 = vpop.permute.xlu0 %932
    %v935 = vmul.f32 %v914, %v933
    %v936 = vxor.u32 %v908, 2147483648
    %v937 = vmul.f32 %v936, 1.442695
    %v938 = vpow.pop %v937
    %v939 = vadd.f32 %v938, 1.0
    %v940 = vrcp.pop %v939
    %v941 = vmul.f32 1.0, %v940
    %v942 = vtanh.pop %v908
    %v944 = vrot.slane %v807, 2
    %v946 = vmul.f32 %v941, %v944
    %948 = vrot.lane.b32.xlu0 %v942, 64
    %v949 = vpop.permute.xlu0 %948
    %v951 = vmul.f32 %v941, %v949
    %953 = vrot.lane.b32.xlu0 %v951, 32
    %v954 = vpop.permute.xlu0 %953
    %v956 = vadd.f32 %v946, %v954
    %v957 = vtanh.pop %v956
    %959 = vrot.lane.b32.xlu0 %v957, 64
    %v960 = vpop.permute.xlu0 %959
    %v962 = vmul.f32 %v941, %v960
    %964 = vrot.lane.b32.xlu0 %v935, 32
    %v965 = vpop.permute.xlu0 %964
    %967 = vst.msk [vmem:[#allocation2 + $0x8] sm:$0x3] %vm361, %v965
    %969 = vrot.lane.b32.xlu0 %v962, 32
    %v970 = vpop.permute.xlu0 %969
    %972 = vst.msk [vmem:[#allocation3] sm:$0xc0] %vm367, %v970
    %v973 = vrot.slane %v962, 6
    %974 = vrot.lane.b32.xlu0 %v973, 64
    %v975 = vpop.permute.xlu0 %974
    %v977 = vsel %vm373, %v965, %v975
    %v979 = vsel %vm130, %v977, 0
    %981 = vmatprep.subr.mxu0 %v215
    %982 = vmatpush1.msra.mxu0 %v214
    %983 = vmatprep.subr.mxu0 %v217
    %984 = vmatpush1.msra.mxu0 %v216
    %985 = vmatprep.subr.mxu0 %v219
    %986 = vmatpush1.msra.mxu0 %v218
    %987 = vmatprep.subr.mxu0 %v221
    %988 = vmatpush1.msra.mxu0 %v220
    %989 = vmatprep.subr.mxu0 %v223
    %990 = vmatpush1.msra.mxu0 %v222
    %991 = vmatprep.subr.mxu0 %v225
    %992 = vmatpush1.msra.mxu0 %v224
    %993 = vmatprep.subr.mxu0 %v227
    %994 = vmatpush1.msra.mxu0 %v226
    %995 = vmatprep.subr.mxu0 %v229
    %996 = vmatpush1.msra.mxu0 %v228
    %997 = vmatprep.subr.mxu0 0.0
    %998 = vmatpush1.msra.mxu0 0.0
    %999 = vmatprep.subr.mxu0 0.0
    %1000 = vmatpush1.msra.mxu0 0.0
    %1001 = vmatprep.subr.mxu0 0.0
    %1002 = vmatpush1.msra.mxu0 0.0
    %1003 = vmatprep.subr.mxu0 0.0
    %1004 = vmatpush1.msra.mxu0 0.0
    %1005 = vmatprep.subr.mxu0 0.0
    %1006 = vmatpush1.msra.mxu0 0.0
    %1007 = vmatprep.subr.mxu0 0.0
    %1008 = vmatpush1.msra.mxu0 0.0
    %1009 = vmatprep.subr.mxu0 0.0
    %1010 = vmatpush1.msra.mxu0 0.0
    %1011 = vmatprep.subr.mxu0 0.0
    %1012 = vmatpush1.msra.mxu0 0.0
    %1013 = vmatprep.subr.mxu0 0.0
    %1014 = vmatpush1.msra.mxu0 0.0
    %1015 = vmatprep.subr.mxu0 0.0
    %1016 = vmatpush1.msra.mxu0 0.0
    %1017 = vmatprep.subr.mxu0 0.0
    %1018 = vmatpush1.msra.mxu0 0.0
    %1019 = vmatprep.subr.mxu0 0.0
    %1020 = vmatpush1.msra.mxu0 0.0
    %1021 = vmatprep.subr.mxu0 0.0
    %1022 = vmatpush1.msra.mxu0 0.0
    %1023 = vmatprep.subr.mxu0 0.0
    %1024 = vmatpush1.msra.mxu0 0.0
    %1025 = vmatprep.subr.mxu0 0.0
    %1026 = vmatpush1.msra.mxu0 0.0
    %1027 = vmatprep.subr.mxu0 0.0
    %1028 = vmatpush1.msra.mxu0 0.0
    %1029 = vmatprep.subr.mxu0 0.0
    %1030 = vmatpush1.msra.mxu0 0.0
    %1031 = vmatprep.subr.mxu0 0.0
    %1032 = vmatpush1.msra.mxu0 0.0
    %1033 = vmatprep.subr.mxu0 0.0
    %1034 = vmatpush1.msra.mxu0 0.0
    %1035 = vmatprep.subr.mxu0 0.0
    %1036 = vmatpush1.msra.mxu0 0.0
    %1037 = vmatprep.subr.mxu0 0.0
    %1038 = vmatpush1.msra.mxu0 0.0
    %1039 = vmatprep.subr.mxu0 0.0
    %1040 = vmatpush1.msra.mxu0 0.0
    %1041 = vmatprep.subr.mxu0 0.0
    %1042 = vmatpush1.msra.mxu0 0.0
    %1043 = vmatprep.subr.mxu0 0.0
    %1044 = vmatpush1.msra.mxu0 0.0
    %1045 = vmatprep.mubr.f32.mxu0 0.0
    %1046 = vmatmul.mubr.f32.gmra.mrb[0].mxu0 %v979
    %v1047 = vpop.f32.mrb[0].mxu0
    %v1048 = vadd.f32 0.0, %v1047
    %v1049 = vpop.f32.mrb[0].mxu0
    %v1050 = vadd.f32 0.0, %v1049
    %1051 = vdwg.mxu0
    %v1053 = vrot.slane %v1048, 6
    %v1055 = vadd.f32 %v210, %v1053
    %v1057 = vrot.slane %v1050, 4
    %v1059 = vadd.f32 %v206, %v1057
    %v1060 = vxor.u32 %v1055, 2147483648
    %v1061 = vmul.f32 %v1060, 1.442695
    %v1062 = vpow.pop %v1061
    %v1063 = vadd.f32 %v1062, 1.0
    %v1064 = vrcp.pop %v1063
    %v1065 = vmul.f32 1.0, %v1064
    %v1066 = vtanh.pop %v1055
    %v1068 = vrot.slane %v929, 6
    %v1070 = vmul.f32 %v1065, %v1068
    %1072 = vrot.lane.b32.xlu0 %v1066, 64
    %v1073 = vpop.permute.xlu0 %1072
    %v1075 = vmul.f32 %v1065, %v1073
    %1077 = vrot.lane.b32.xlu0 %v1075, 32
    %v1078 = vpop.permute.xlu0 %1077
    %v1080 = vadd.f32 %v1070, %v1078
    %v1081 = vtanh.pop %v1080
    %1083 = vrot.lane.b32.xlu0 %v1081, 64
    %v1084 = vpop.permute.xlu0 %1083
    %v1086 = vmul.f32 %v1065, %v1084
    %v1087 = vxor.u32 %v1059, 2147483648
    %v1088 = vmul.f32 %v1087, 1.442695
    %v1089 = vpow.pop %v1088
    %v1090 = vadd.f32 %v1089, 1.0
    %v1091 = vrcp.pop %v1090
    %v1092 = vmul.f32 1.0, %v1091
    %v1093 = vtanh.pop %v1059
    %v1095 = vrot.slane %v956, 2
    %v1097 = vmul.f32 %v1092, %v1095
    %1099 = vrot.lane.b32.xlu0 %v1093, 64
    %v1100 = vpop.permute.xlu0 %1099
    %v1102 = vmul.f32 %v1092, %v1100
    %1104 = vrot.lane.b32.xlu0 %v1102, 32
    %v1105 = vpop.permute.xlu0 %1104
    %v1107 = vadd.f32 %v1097, %v1105
    %v1108 = vtanh.pop %v1107
    %1110 = vrot.lane.b32.xlu0 %v1108, 64
    %v1111 = vpop.permute.xlu0 %1110
    %v1113 = vmul.f32 %v1092, %v1111
    %1115 = vrot.lane.b32.xlu0 %v1086, 32
    %v1116 = vpop.permute.xlu0 %1115
    %1118 = vst.msk [vmem:[#allocation2 + $0x8] sm:$0xc] %vm515, %v1116
    %1120 = vrot.lane.b32.xlu0 %v1113, 32
    %v1121 = vpop.permute.xlu0 %1120
    %1123 = vst.msk [vmem:[#allocation3] sm:$0x30] %vm521, %v1121
    %v1124 = vrot.slane %v1113, 2
    %1125 = vrot.lane.b32.xlu0 %v1124, 64
    %v1126 = vpop.permute.xlu0 %1125
    %v1128 = vsel %vm373, %v1116, %v1126
    %v1130 = vrot.slane %v1128, 2
    %v1131 = vsel %vm130, %v1130, 0
    %1133 = vmatprep.subr.mxu0 %v215
    %1134 = vmatpush1.msra.mxu0 %v214
    %1135 = vmatprep.subr.mxu0 %v217
    %1136 = vmatpush1.msra.mxu0 %v216
    %1137 = vmatprep.subr.mxu0 %v219
    %1138 = vmatpush1.msra.mxu0 %v218
    %1139 = vmatprep.subr.mxu0 %v221
    %1140 = vmatpush1.msra.mxu0 %v220
    %1141 = vmatprep.subr.mxu0 %v223
    %1142 = vmatpush1.msra.mxu0 %v222
    %1143 = vmatprep.subr.mxu0 %v225
    %1144 = vmatpush1.msra.mxu0 %v224
    %1145 = vmatprep.subr.mxu0 %v227
    %1146 = vmatpush1.msra.mxu0 %v226
    %1147 = vmatprep.subr.mxu0 %v229
    %1148 = vmatpush1.msra.mxu0 %v228
    %1149 = vmatprep.subr.mxu0 0.0
    %1150 = vmatpush1.msra.mxu0 0.0
    %1151 = vmatprep.subr.mxu0 0.0
    %1152 = vmatpush1.msra.mxu0 0.0
    %1153 = vmatprep.subr.mxu0 0.0
    %1154 = vmatpush1.msra.mxu0 0.0
    %1155 = vmatprep.subr.mxu0 0.0
    %1156 = vmatpush1.msra.mxu0 0.0
    %1157 = vmatprep.subr.mxu0 0.0
    %1158 = vmatpush1.msra.mxu0 0.0
    %1159 = vmatprep.subr.mxu0 0.0
    %1160 = vmatpush1.msra.mxu0 0.0
    %1161 = vmatprep.subr.mxu0 0.0
    %1162 = vmatpush1.msra.mxu0 0.0
    %1163 = vmatprep.subr.mxu0 0.0
    %1164 = vmatpush1.msra.mxu0 0.0
    %1165 = vmatprep.subr.mxu0 0.0
    %1166 = vmatpush1.msra.mxu0 0.0
    %1167 = vmatprep.subr.mxu0 0.0
    %1168 = vmatpush1.msra.mxu0 0.0
    %1169 = vmatprep.subr.mxu0 0.0
    %1170 = vmatpush1.msra.mxu0 0.0
    %1171 = vmatprep.subr.mxu0 0.0
    %1172 = vmatpush1.msra.mxu0 0.0
    %1173 = vmatprep.subr.mxu0 0.0
    %1174 = vmatpush1.msra.mxu0 0.0
    %1175 = vmatprep.subr.mxu0 0.0
    %1176 = vmatpush1.msra.mxu0 0.0
    %1177 = vmatprep.subr.mxu0 0.0
    %1178 = vmatpush1.msra.mxu0 0.0
    %1179 = vmatprep.subr.mxu0 0.0
    %1180 = vmatpush1.msra.mxu0 0.0
    %1181 = vmatprep.subr.mxu0 0.0
    %1182 = vmatpush1.msra.mxu0 0.0
    %1183 = vmatprep.subr.mxu0 0.0
    %1184 = vmatpush1.msra.mxu0 0.0
    %1185 = vmatprep.subr.mxu0 0.0
    %1186 = vmatpush1.msra.mxu0 0.0
    %1187 = vmatprep.subr.mxu0 0.0
    %1188 = vmatpush1.msra.mxu0 0.0
    %1189 = vmatprep.subr.mxu0 0.0
    %1190 = vmatpush1.msra.mxu0 0.0
    %1191 = vmatprep.subr.mxu0 0.0
    %1192 = vmatpush1.msra.mxu0 0.0
    %1193 = vmatprep.subr.mxu0 0.0
    %1194 = vmatpush1.msra.mxu0 0.0
    %1195 = vmatprep.subr.mxu0 0.0
    %1196 = vmatpush1.msra.mxu0 0.0
    %1197 = vmatprep.mubr.f32.mxu0 0.0
    %1198 = vmatmul.mubr.f32.gmra.mrb[0].mxu0 %v1131
    %v1199 = vpop.f32.mrb[0].mxu0
    %v1200 = vadd.f32 0.0, %v1199
    %v1201 = vpop.f32.mrb[0].mxu0
    %v1202 = vadd.f32 0.0, %v1201
    %1203 = vdwg.mxu0
    %v1205 = vrot.slane %v1200, 4
    %v1207 = vadd.f32 %v210, %v1205
    %v1209 = vrot.slane %v1202, 6
    %v1211 = vadd.f32 %v206, %v1209
    %v1212 = vxor.u32 %v1207, 2147483648
    %v1213 = vmul.f32 %v1212, 1.442695
    %v1214 = vpow.pop %v1213
    %v1215 = vadd.f32 %v1214, 1.0
    %v1216 = vrcp.pop %v1215
    %v1217 = vmul.f32 1.0, %v1216
    %v1218 = vtanh.pop %v1207
    %v1220 = vrot.slane %v1080, 6
    %v1222 = vmul.f32 %v1217, %v1220
    %1224 = vrot.lane.b32.xlu0 %v1218, 64
    %v1225 = vpop.permute.xlu0 %1224
    %v1227 = vmul.f32 %v1217, %v1225
    %1229 = vrot.lane.b32.xlu0 %v1227, 32
    %v1230 = vpop.permute.xlu0 %1229
    %v1232 = vadd.f32 %v1222, %v1230
    %v1233 = vtanh.pop %v1232
    %1235 = vrot.lane.b32.xlu0 %v1233, 64
    %v1236 = vpop.permute.xlu0 %1235
    %v1238 = vmul.f32 %v1217, %v1236
    %v1239 = vxor.u32 %v1211, 2147483648
    %v1240 = vmul.f32 %v1239, 1.442695
    %v1241 = vpow.pop %v1240
    %v1242 = vadd.f32 %v1241, 1.0
    %v1243 = vrcp.pop %v1242
    %v1244 = vmul.f32 1.0, %v1243
    %v1245 = vtanh.pop %v1211
    %v1247 = vrot.slane %v1107, 2
    %v1249 = vmul.f32 %v1244, %v1247
    %1251 = vrot.lane.b32.xlu0 %v1245, 64
    %v1252 = vpop.permute.xlu0 %1251
    %v1254 = vmul.f32 %v1244, %v1252
    %1256 = vrot.lane.b32.xlu0 %v1254, 32
    %v1257 = vpop.permute.xlu0 %1256
    %v1259 = vadd.f32 %v1249, %v1257
    %v1260 = vtanh.pop %v1259
    %1262 = vrot.lane.b32.xlu0 %v1260, 64
    %v1263 = vpop.permute.xlu0 %1262
    %v1265 = vmul.f32 %v1244, %v1263
    %1267 = vrot.lane.b32.xlu0 %v1238, 32
    %v1268 = vpop.permute.xlu0 %1267
    %1270 = vst.msk [vmem:[#allocation2 + $0x8] sm:$0x30] %vm521, %v1268
    %1272 = vrot.lane.b32.xlu0 %v1265, 32
    %v1273 = vpop.permute.xlu0 %1272
    %1275 = vst.msk [vmem:[#allocation3] sm:$0xc] %vm515, %v1273
    %v1276 = vrot.slane %v1265, 6
    %1277 = vrot.lane.b32.xlu0 %v1276, 64
    %v1278 = vpop.permute.xlu0 %1277
    %v1280 = vsel %vm373, %v1268, %v1278
    %v1282 = vrot.slane %v1280, 4
    %v1283 = vsel %vm130, %v1282, 0
    %1285 = vmatprep.subr.mxu0 %v215
    %1286 = vmatpush1.msra.mxu0 %v214
    %1287 = vmatprep.subr.mxu0 %v217
    %1288 = vmatpush1.msra.mxu0 %v216
    %1289 = vmatprep.subr.mxu0 %v219
    %1290 = vmatpush1.msra.mxu0 %v218
    %1291 = vmatprep.subr.mxu0 %v221
    %1292 = vmatpush1.msra.mxu0 %v220
    %1293 = vmatprep.subr.mxu0 %v223
    %1294 = vmatpush1.msra.mxu0 %v222
    %1295 = vmatprep.subr.mxu0 %v225
    %1296 = vmatpush1.msra.mxu0 %v224
    %1297 = vmatprep.subr.mxu0 %v227
    %1298 = vmatpush1.msra.mxu0 %v226
    %1299 = vmatprep.subr.mxu0 %v229
    %1300 = vmatpush1.msra.mxu0 %v228
    %1301 = vmatprep.subr.mxu0 0.0
    %1302 = vmatpush1.msra.mxu0 0.0
    %1303 = vmatprep.subr.mxu0 0.0
    %1304 = vmatpush1.msra.mxu0 0.0
    %1305 = vmatprep.subr.mxu0 0.0
    %1306 = vmatpush1.msra.mxu0 0.0
    %1307 = vmatprep.subr.mxu0 0.0
    %1308 = vmatpush1.msra.mxu0 0.0
    %1309 = vmatprep.subr.mxu0 0.0
    %1310 = vmatpush1.msra.mxu0 0.0
    %1311 = vmatprep.subr.mxu0 0.0
    %1312 = vmatpush1.msra.mxu0 0.0
    %1313 = vmatprep.subr.mxu0 0.0
    %1314 = vmatpush1.msra.mxu0 0.0
    %1315 = vmatprep.subr.mxu0 0.0
    %1316 = vmatpush1.msra.mxu0 0.0
    %1317 = vmatprep.subr.mxu0 0.0
    %1318 = vmatpush1.msra.mxu0 0.0
    %1319 = vmatprep.subr.mxu0 0.0
    %1320 = vmatpush1.msra.mxu0 0.0
    %1321 = vmatprep.subr.mxu0 0.0
    %1322 = vmatpush1.msra.mxu0 0.0
    %1323 = vmatprep.subr.mxu0 0.0
    %1324 = vmatpush1.msra.mxu0 0.0
    %1325 = vmatprep.subr.mxu0 0.0
    %1326 = vmatpush1.msra.mxu0 0.0
    %1327 = vmatprep.subr.mxu0 0.0
    %1328 = vmatpush1.msra.mxu0 0.0
    %1329 = vmatprep.subr.mxu0 0.0
    %1330 = vmatpush1.msra.mxu0 0.0
    %1331 = vmatprep.subr.mxu0 0.0
    %1332 = vmatpush1.msra.mxu0 0.0
    %1333 = vmatprep.subr.mxu0 0.0
    %1334 = vmatpush1.msra.mxu0 0.0
    %1335 = vmatprep.subr.mxu0 0.0
    %1336 = vmatpush1.msra.mxu0 0.0
    %1337 = vmatprep.subr.mxu0 0.0
    %1338 = vmatpush1.msra.mxu0 0.0
    %1339 = vmatprep.subr.mxu0 0.0
    %1340 = vmatpush1.msra.mxu0 0.0
    %1341 = vmatprep.subr.mxu0 0.0
    %1342 = vmatpush1.msra.mxu0 0.0
    %1343 = vmatprep.subr.mxu0 0.0
    %1344 = vmatpush1.msra.mxu0 0.0
    %1345 = vmatprep.subr.mxu0 0.0
    %1346 = vmatpush1.msra.mxu0 0.0
    %1347 = vmatprep.subr.mxu0 0.0
    %1348 = vmatpush1.msra.mxu0 0.0
    %1349 = vmatprep.mubr.f32.mxu0 0.0
    %1350 = vmatmul.mubr.f32.gmra.mrb[0].mxu0 %v1283
    %v1351 = vpop.f32.mrb[0].mxu0
    %v1352 = vadd.f32 0.0, %v1351
    %v1353 = vpop.f32.mrb[0].mxu0
    %v1354 = vadd.f32 0.0, %v1353
    %1355 = vdwg.mxu0
    %v1357 = vrot.slane %v1352, 2
    %v1359 = vadd.f32 %v210, %v1357
    %v1360 = vadd.f32 %v206, %v1354
    %v1361 = vxor.u32 %v1359, 2147483648
    %v1362 = vmul.f32 %v1361, 1.442695
    %v1363 = vpow.pop %v1362
    %v1364 = vadd.f32 %v1363, 1.0
    %v1365 = vrcp.pop %v1364
    %v1366 = vmul.f32 1.0, %v1365
    %v1367 = vtanh.pop %v1359
    %v1369 = vrot.slane %v1232, 6
    %v1371 = vmul.f32 %v1366, %v1369
    %1373 = vrot.lane.b32.xlu0 %v1367, 64
    %v1374 = vpop.permute.xlu0 %1373
    %v1376 = vmul.f32 %v1366, %v1374
    %1378 = vrot.lane.b32.xlu0 %v1376, 32
    %v1379 = vpop.permute.xlu0 %1378
    %v1381 = vadd.f32 %v1371, %v1379
    %v1382 = vtanh.pop %v1381
    %1384 = vrot.lane.b32.xlu0 %v1382, 64
    %v1385 = vpop.permute.xlu0 %1384
    %v1387 = vmul.f32 %v1366, %v1385
    %v1388 = vxor.u32 %v1360, 2147483648
    %v1389 = vmul.f32 %v1388, 1.442695
    %v1390 = vpow.pop %v1389
    %v1391 = vadd.f32 %v1390, 1.0
    %v1392 = vrcp.pop %v1391
    %v1393 = vmul.f32 1.0, %v1392
    %v1394 = vtanh.pop %v1360
    %v1396 = vrot.slane %v1259, 2
    %v1398 = vmul.f32 %v1393, %v1396
    %1400 = vrot.lane.b32.xlu0 %v1394, 64
    %v1401 = vpop.permute.xlu0 %1400
    %v1403 = vmul.f32 %v1393, %v1401
    %1405 = vrot.lane.b32.xlu0 %v1403, 32
    %v1406 = vpop.permute.xlu0 %1405
    %v1408 = vadd.f32 %v1398, %v1406
    %v1409 = vtanh.pop %v1408
    %1411 = vrot.lane.b32.xlu0 %v1409, 64
    %v1412 = vpop.permute.xlu0 %1411
    %v1414 = vmul.f32 %v1393, %v1412
    %1416 = vrot.lane.b32.xlu0 %v1387, 32
    %v1417 = vpop.permute.xlu0 %1416
    %1419 = vst.msk [vmem:[#allocation2 + $0x8] sm:$0xc0] %vm367, %v1417
    %1421 = vrot.lane.b32.xlu0 %v1414, 32
    %v1422 = vpop.permute.xlu0 %1421
    %1424 = vst.msk [vmem:[#allocation3] sm:$0x3] %vm361, %v1422
    %v1425 = vld [vmem:[#allocation2] sm:$0xff]
    %v1426 = vld [vmem:[#allocation2 + $0x8] sm:$0xff]
    %v1427 = vld [vmem:[#allocation9] sm:$0xff]
    %v1428 = vld [vmem:[#allocation9 + $0x8] sm:$0xff]
    %v1429 = vld [vmem:[#allocation9 + $0x10] sm:$0xff]
    %v1430 = vld [vmem:[#allocation9 + $0x18] sm:$0xff]
    %v1431 = vld [vmem:[#allocation9 + $0x20] sm:$0xff]
    %v1432 = vld [vmem:[#allocation9 + $0x28] sm:$0xff]
    %v1433 = vld [vmem:[#allocation9 + $0x30] sm:$0xff]
    %v1434 = vld [vmem:[#allocation9 + $0x38] sm:$0xff]
    %v1435 = vld [vmem:[#allocation3] sm:$0xff]
    %v1436 = vld [vmem:[#allocation3 + $0x8] sm:$0xff]
    %s1437 = scalar_lea.vmem [#allocation9], 64
    %v1438 = vld [vmem:[%s1437] sm:$0xff]
    %v1439 = vld [vmem:[%s1437 + $0x8] sm:$0xff]
    %v1440 = vld [vmem:[%s1437 + $0x10] sm:$0xff]
    %v1441 = vld [vmem:[%s1437 + $0x18] sm:$0xff]
    %v1442 = vld [vmem:[%s1437 + $0x20] sm:$0xff]
    %v1443 = vld [vmem:[%s1437 + $0x28] sm:$0xff]
    %v1444 = vld [vmem:[%s1437 + $0x30] sm:$0xff]
    %v1445 = vld [vmem:[%s1437 + $0x38] sm:$0xff]
    %v1447 = vsel %vm373, %v1435, 0
    %v1450 = vsel %vm373, %v1436, 0
    %1452 = vmatprep.subr.mxu0 %v1439
    %1453 = vmatpush1.msra.mxu0 %v1438
    %1454 = vmatprep.subr.mxu0 %v1441
    %1455 = vmatpush1.msra.mxu0 %v1440
    %1456 = vmatprep.subr.mxu0 %v1443
    %1457 = vmatpush1.msra.mxu0 %v1442
    %1458 = vmatprep.subr.mxu0 %v1445
    %1459 = vmatpush1.msra.mxu0 %v1444
    %1460 = vmatprep.subr.mxu0 0.0
    %1461 = vmatpush1.msra.mxu0 0.0
    %1462 = vmatprep.subr.mxu0 0.0
    %1463 = vmatpush1.msra.mxu0 0.0
    %1464 = vmatprep.subr.mxu0 0.0
    %1465 = vmatpush1.msra.mxu0 0.0
    %1466 = vmatprep.subr.mxu0 0.0
    %1467 = vmatpush1.msra.mxu0 0.0
    %1468 = vmatprep.subr.mxu0 0.0
    %1469 = vmatpush1.msra.mxu0 0.0
    %1470 = vmatprep.subr.mxu0 0.0
    %1471 = vmatpush1.msra.mxu0 0.0
    %1472 = vmatprep.subr.mxu0 0.0
    %1473 = vmatpush1.msra.mxu0 0.0
    %1474 = vmatprep.subr.mxu0 0.0
    %1475 = vmatpush1.msra.mxu0 0.0
    %1476 = vmatprep.subr.mxu0 0.0
    %1477 = vmatpush1.msra.mxu0 0.0
    %1478 = vmatprep.subr.mxu0 0.0
    %1479 = vmatpush1.msra.mxu0 0.0
    %1480 = vmatprep.subr.mxu0 0.0
    %1481 = vmatpush1.msra.mxu0 0.0
    %1482 = vmatprep.subr.mxu0 0.0
    %1483 = vmatpush1.msra.mxu0 0.0
    %1484 = vmatprep.subr.mxu0 0.0
    %1485 = vmatpush1.msra.mxu0 0.0
    %1486 = vmatprep.subr.mxu0 0.0
    %1487 = vmatpush1.msra.mxu0 0.0
    %1488 = vmatprep.subr.mxu0 0.0
    %1489 = vmatpush1.msra.mxu0 0.0
    %1490 = vmatprep.subr.mxu0 0.0
    %1491 = vmatpush1.msra.mxu0 0.0
    %1492 = vmatprep.subr.mxu0 0.0
    %1493 = vmatpush1.msra.mxu0 0.0
    %1494 = vmatprep.subr.mxu0 0.0
    %1495 = vmatpush1.msra.mxu0 0.0
    %1496 = vmatprep.subr.mxu0 0.0
    %1497 = vmatpush1.msra.mxu0 0.0
    %1498 = vmatprep.subr.mxu0 0.0
    %1499 = vmatpush1.msra.mxu0 0.0
    %1500 = vmatprep.subr.mxu0 0.0
    %1501 = vmatpush1.msra.mxu0 0.0
    %1502 = vmatprep.subr.mxu0 0.0
    %1503 = vmatpush1.msra.mxu0 0.0
    %1504 = vmatprep.subr.mxu0 0.0
    %1505 = vmatpush1.msra.mxu0 0.0
    %1506 = vmatprep.subr.mxu0 0.0
    %1507 = vmatpush1.msra.mxu0 0.0
    %1508 = vmatprep.subr.mxu0 0.0
    %1509 = vmatpush1.msra.mxu0 0.0
    %1510 = vmatprep.subr.mxu0 0.0
    %1511 = vmatpush1.msra.mxu0 0.0
    %1512 = vmatprep.subr.mxu0 0.0
    %1513 = vmatpush1.msra.mxu0 0.0
    %1514 = vmatprep.subr.mxu0 0.0
    %1515 = vmatpush1.msra.mxu0 0.0
    %1516 = vmatprep.mubr.f32.mxu0 0.0
    %1517 = vmatmul.mubr.f32.gmra.mrb[0].mxu0 %v1447
    %v1518 = vpop.f32.mrb[0].mxu0
    %v1519 = vadd.f32 0.0, %v1518
    %v1520 = vpop.f32.mrb[0].mxu0
    %v1521 = vadd.f32 0.0, %v1520
    %1522 = vmatprep.mubr.f32.mxu0 0.0
    %1523 = vmatmul.mubr.f32.gmra.mrb[0].mxu0 %v1450
    %v1524 = vpop.f32.mrb[0].mxu0
    %v1525 = vadd.f32 0.0, %v1524
    %v1526 = vpop.f32.mrb[0].mxu0
    %v1527 = vadd.f32 0.0, %v1526
    %1528 = vdwg.mxu0
    %v1530 = vsel %vm373, %v1425, 0
    %v1533 = vsel %vm373, %v1426, 0
    %1535 = vmatprep.subr.mxu0 %v1428
    %1536 = vmatpush1.msra.mxu0 %v1427
    %1537 = vmatprep.subr.mxu0 %v1430
    %1538 = vmatpush1.msra.mxu0 %v1429
    %1539 = vmatprep.subr.mxu0 %v1432
    %1540 = vmatpush1.msra.mxu0 %v1431
    %1541 = vmatprep.subr.mxu0 %v1434
    %1542 = vmatpush1.msra.mxu0 %v1433
    %1543 = vmatprep.subr.mxu0 0.0
    %1544 = vmatpush1.msra.mxu0 0.0
    %1545 = vmatprep.subr.mxu0 0.0
    %1546 = vmatpush1.msra.mxu0 0.0
    %1547 = vmatprep.subr.mxu0 0.0
    %1548 = vmatpush1.msra.mxu0 0.0
    %1549 = vmatprep.subr.mxu0 0.0
    %1550 = vmatpush1.msra.mxu0 0.0
    %1551 = vmatprep.subr.mxu0 0.0
    %1552 = vmatpush1.msra.mxu0 0.0
    %1553 = vmatprep.subr.mxu0 0.0
    %1554 = vmatpush1.msra.mxu0 0.0
    %1555 = vmatprep.subr.mxu0 0.0
    %1556 = vmatpush1.msra.mxu0 0.0
    %1557 = vmatprep.subr.mxu0 0.0
    %1558 = vmatpush1.msra.mxu0 0.0
    %1559 = vmatprep.subr.mxu0 0.0
    %1560 = vmatpush1.msra.mxu0 0.0
    %1561 = vmatprep.subr.mxu0 0.0
    %1562 = vmatpush1.msra.mxu0 0.0
    %1563 = vmatprep.subr.mxu0 0.0
    %1564 = vmatpush1.msra.mxu0 0.0
    %1565 = vmatprep.subr.mxu0 0.0
    %1566 = vmatpush1.msra.mxu0 0.0
    %1567 = vmatprep.subr.mxu0 0.0
    %1568 = vmatpush1.msra.mxu0 0.0
    %1569 = vmatprep.subr.mxu0 0.0
    %1570 = vmatpush1.msra.mxu0 0.0
    %1571 = vmatprep.subr.mxu0 0.0
    %1572 = vmatpush1.msra.mxu0 0.0
    %1573 = vmatprep.subr.mxu0 0.0
    %1574 = vmatpush1.msra.mxu0 0.0
    %1575 = vmatprep.subr.mxu0 0.0
    %1576 = vmatpush1.msra.mxu0 0.0
    %1577 = vmatprep.subr.mxu0 0.0
    %1578 = vmatpush1.msra.mxu0 0.0
    %1579 = vmatprep.subr.mxu0 0.0
    %1580 = vmatpush1.msra.mxu0 0.0
    %1581 = vmatprep.subr.mxu0 0.0
    %1582 = vmatpush1.msra.mxu0 0.0
    %1583 = vmatprep.subr.mxu0 0.0
    %1584 = vmatpush1.msra.mxu0 0.0
    %1585 = vmatprep.subr.mxu0 0.0
    %1586 = vmatpush1.msra.mxu0 0.0
    %1587 = vmatprep.subr.mxu0 0.0
    %1588 = vmatpush1.msra.mxu0 0.0
    %1589 = vmatprep.subr.mxu0 0.0
    %1590 = vmatpush1.msra.mxu0 0.0
    %1591 = vmatprep.subr.mxu0 0.0
    %1592 = vmatpush1.msra.mxu0 0.0
    %1593 = vmatprep.subr.mxu0 0.0
    %1594 = vmatpush1.msra.mxu0 0.0
    %1595 = vmatprep.subr.mxu0 0.0
    %1596 = vmatpush1.msra.mxu0 0.0
    %1597 = vmatprep.subr.mxu0 0.0
    %1598 = vmatpush1.msra.mxu0 0.0
    %1599 = vmatprep.mubr.f32.mxu0 0.0
    %1600 = vmatmul.mubr.f32.gmra.mrb[0].mxu0 %v1530
    %v1601 = vpop.f32.mrb[0].mxu0
    %v1602 = vadd.f32 %v1519, %v1601
    %v1603 = vpop.f32.mrb[0].mxu0
    %v1604 = vadd.f32 %v1521, %v1603
    %1605 = vmatprep.mubr.f32.mxu0 0.0
    %1606 = vmatmul.mubr.f32.gmra.mrb[0].mxu0 %v1533
    %v1607 = vpop.f32.mrb[0].mxu0
    %v1608 = vadd.f32 %v1525, %v1607
    %v1609 = vpop.f32.mrb[0].mxu0
    %v1610 = vadd.f32 %v1527, %v1609
    %1611 = vdwg.mxu0
    %v1612 = vld [vmem:[%s6] sm:$0x3]
    %v1614 = vlaneseq
    %v1615 = vshrl.u32 %v1614, 7
    %v1616 = vsub.s32 0, %v1615
    %v1617 = vrot.slane %v1612, %v1616
    %v1618 = vlaneseq
    %v1619 = vshrl.u32 %v1618, 7
    %v1620 = vsub.s32 1, %v1619
    %v1621 = vrot.slane %v1612, %v1620
    %v1624 = vadd.f32 %v1602, %v1617
    %v1625 = vadd.f32 %v1604, %v1621
    %v1626 = vadd.f32 %v1608, %v1617
    %v1627 = vadd.f32 %v1610, %v1621
    %v1628 = vld [vmem:[#allocation10] sm:$0xff]
    %v1629 = vld [vmem:[#allocation10 + $0x8] sm:$0xff]
    %v1630 = vld [vmem:[#allocation10 + $0x10] sm:$0xff]
    %v1631 = vld [vmem:[#allocation10 + $0x18] sm:$0xff]
    %v1632 = vld [vmem:[#allocation10 + $0x20] sm:$0xff]
    %v1633 = vld [vmem:[#allocation10 + $0x28] sm:$0xff]
    %v1634 = vld [vmem:[#allocation10 + $0x30] sm:$0xff]
    %v1635 = vld [vmem:[#allocation10 + $0x38] sm:$0xff]
    %v1636 = vld [vmem:[#allocation10 + $0x40] sm:$0xff]
    %v1637 = vld [vmem:[#allocation10 + $0x48] sm:$0xff]
    %v1638 = vld [vmem:[#allocation10 + $0x50] sm:$0xff]
    %v1639 = vld [vmem:[#allocation10 + $0x58] sm:$0xff]
    %v1640 = vld [vmem:[#allocation10 + $0x60] sm:$0xff]
    %v1641 = vld [vmem:[#allocation10 + $0x68] sm:$0xff]
    %v1642 = vld [vmem:[#allocation10 + $0x70] sm:$0xff]
    %v1643 = vld [vmem:[#allocation10 + $0x78] sm:$0xff]
    %1644 = vmatprep.subr.mxu0 %v1629
    %1645 = vmatpush1.msra.mxu0 %v1628
    %1646 = vmatprep.subr.mxu0 %v1631
    %1647 = vmatpush1.msra.mxu0 %v1630
    %1648 = vmatprep.subr.mxu0 %v1633
    %1649 = vmatpush1.msra.mxu0 %v1632
    %1650 = vmatprep.subr.mxu0 %v1635
    %1651 = vmatpush1.msra.mxu0 %v1634
    %1652 = vmatprep.subr.mxu0 %v1637
    %1653 = vmatpush1.msra.mxu0 %v1636
    %1654 = vmatprep.subr.mxu0 %v1639
    %1655 = vmatpush1.msra.mxu0 %v1638
    %1656 = vmatprep.subr.mxu0 %v1641
    %1657 = vmatpush1.msra.mxu0 %v1640
    %1658 = vmatprep.subr.mxu0 %v1643
    %1659 = vmatpush1.msra.mxu0 %v1642
    %1660 = vmatprep.subr.mxu0 0.0
    %1661 = vmatpush1.msra.mxu0 0.0
    %1662 = vmatprep.subr.mxu0 0.0
    %1663 = vmatpush1.msra.mxu0 0.0
    %1664 = vmatprep.subr.mxu0 0.0
    %1665 = vmatpush1.msra.mxu0 0.0
    %1666 = vmatprep.subr.mxu0 0.0
    %1667 = vmatpush1.msra.mxu0 0.0
    %1668 = vmatprep.subr.mxu0 0.0
    %1669 = vmatpush1.msra.mxu0 0.0
    %1670 = vmatprep.subr.mxu0 0.0
    %1671 = vmatpush1.msra.mxu0 0.0
    %1672 = vmatprep.subr.mxu0 0.0
    %1673 = vmatpush1.msra.mxu0 0.0
    %1674 = vmatprep.subr.mxu0 0.0
    %1675 = vmatpush1.msra.mxu0 0.0
    %1676 = vmatprep.subr.mxu0 0.0
    %1677 = vmatpush1.msra.mxu0 0.0
    %1678 = vmatprep.subr.mxu0 0.0
    %1679 = vmatpush1.msra.mxu0 0.0
    %1680 = vmatprep.subr.mxu0 0.0
    %1681 = vmatpush1.msra.mxu0 0.0
    %1682 = vmatprep.subr.mxu0 0.0
    %1683 = vmatpush1.msra.mxu0 0.0
    %1684 = vmatprep.subr.mxu0 0.0
    %1685 = vmatpush1.msra.mxu0 0.0
    %1686 = vmatprep.subr.mxu0 0.0
    %1687 = vmatpush1.msra.mxu0 0.0
    %1688 = vmatprep.subr.mxu0 0.0
    %1689 = vmatpush1.msra.mxu0 0.0
    %1690 = vmatprep.subr.mxu0 0.0
    %1691 = vmatpush1.msra.mxu0 0.0
    %1692 = vmatprep.subr.mxu0 0.0
    %1693 = vmatpush1.msra.mxu0 0.0
    %1694 = vmatprep.subr.mxu0 0.0
    %1695 = vmatpush1.msra.mxu0 0.0
    %1696 = vmatprep.subr.mxu0 0.0
    %1697 = vmatpush1.msra.mxu0 0.0
    %1698 = vmatprep.subr.mxu0 0.0
    %1699 = vmatpush1.msra.mxu0 0.0
    %1700 = vmatprep.subr.mxu0 0.0
    %1701 = vmatpush1.msra.mxu0 0.0
    %1702 = vmatprep.subr.mxu0 0.0
    %1703 = vmatpush1.msra.mxu0 0.0
    %1704 = vmatprep.subr.mxu0 0.0
    %1705 = vmatpush1.msra.mxu0 0.0
    %1706 = vmatprep.subr.mxu0 0.0
    %1707 = vmatpush1.msra.mxu0 0.0
    %1708 = vmatprep.mubr.f32.mxu0 0.0
    %1709 = vmatmul.mubr.f32.gmra.mrb[0].mxu0 %v231
    %v1710 = vpop.f32.mrb[0].mxu0
    %v1711 = vadd.f32 0.0, %v1710
    %v1712 = vpop.f32.mrb[0].mxu0
    %v1713 = vadd.f32 0.0, %v1712
    %1714 = vdwg.mxu0
    %v1715 = vadd.f32 %v1624, %v1711
    %v1717 = vrot.slane %v1713, 2
    %v1719 = vadd.f32 %v1627, %v1717
    %v1720 = vxor.u32 %v1715, 2147483648
    %v1721 = vmul.f32 %v1720, 1.442695
    %v1722 = vpow.pop %v1721
    %v1723 = vadd.f32 %v1722, 1.0
    %v1724 = vrcp.pop %v1723
    %v1725 = vmul.f32 1.0, %v1724
    %v1726 = vtanh.pop %v1715
    %v1727 = vmul.f32 %v1725, 0.0
    %1729 = vrot.lane.b32.xlu0 %v1726, 64
    %v1730 = vpop.permute.xlu0 %1729
    %v1732 = vmul.f32 %v1725, %v1730
    %1734 = vrot.lane.b32.xlu0 %v1732, 32
    %v1735 = vpop.permute.xlu0 %1734
    %v1737 = vadd.f32 %v1727, %v1735
    %v1738 = vtanh.pop %v1737
    %1740 = vrot.lane.b32.xlu0 %v1738, 64
    %v1741 = vpop.permute.xlu0 %1740
    %v1743 = vmul.f32 %v1725, %v1741
    %v1744 = vxor.u32 %v1719, 2147483648
    %v1745 = vmul.f32 %v1744, 1.442695
    %v1746 = vpow.pop %v1745
    %v1747 = vadd.f32 %v1746, 1.0
    %v1748 = vrcp.pop %v1747
    %v1749 = vmul.f32 1.0, %v1748
    %v1750 = vtanh.pop %v1719
    %v1751 = vmul.f32 %v1749, 0.0
    %1753 = vrot.lane.b32.xlu0 %v1750, 64
    %v1754 = vpop.permute.xlu0 %1753
    %v1756 = vmul.f32 %v1749, %v1754
    %1758 = vrot.lane.b32.xlu0 %v1756, 32
    %v1759 = vpop.permute.xlu0 %1758
    %v1761 = vadd.f32 %v1751, %v1759
    %v1762 = vtanh.pop %v1761
    %1764 = vrot.lane.b32.xlu0 %v1762, 64
    %v1765 = vpop.permute.xlu0 %1764
    %v1767 = vmul.f32 %v1749, %v1765
    %1769 = vrot.lane.b32.xlu0 %v1743, 32
    %v1770 = vpop.permute.xlu0 %1769
    %v1773 = vrot.slane %v1767, 6
    %1774 = vrot.lane.b32.xlu0 %v1773, 64
    %v1775 = vpop.permute.xlu0 %1774
    %v1777 = vsel %vm373, %v1770, %v1775
    %v1779 = vsel %vm130, %v1777, 0
    %1781 = vmatprep.subr.mxu0 %v1629
    %1782 = vmatpush1.msra.mxu0 %v1628
    %1783 = vmatprep.subr.mxu0 %v1631
    %1784 = vmatpush1.msra.mxu0 %v1630
    %1785 = vmatprep.subr.mxu0 %v1633
    %1786 = vmatpush1.msra.mxu0 %v1632
    %1787 = vmatprep.subr.mxu0 %v1635
    %1788 = vmatpush1.msra.mxu0 %v1634
    %1789 = vmatprep.subr.mxu0 %v1637
    %1790 = vmatpush1.msra.mxu0 %v1636
    %1791 = vmatprep.subr.mxu0 %v1639
    %1792 = vmatpush1.msra.mxu0 %v1638
    %1793 = vmatprep.subr.mxu0 %v1641
    %1794 = vmatpush1.msra.mxu0 %v1640
    %1795 = vmatprep.subr.mxu0 %v1643
    %1796 = vmatpush1.msra.mxu0 %v1642
    %1797 = vmatprep.subr.mxu0 0.0
    %1798 = vmatpush1.msra.mxu0 0.0
    %1799 = vmatprep.subr.mxu0 0.0
    %1800 = vmatpush1.msra.mxu0 0.0
    %1801 = vmatprep.subr.mxu0 0.0
    %1802 = vmatpush1.msra.mxu0 0.0
    %1803 = vmatprep.subr.mxu0 0.0
    %1804 = vmatpush1.msra.mxu0 0.0
    %1805 = vmatprep.subr.mxu0 0.0
    %1806 = vmatpush1.msra.mxu0 0.0
    %1807 = vmatprep.subr.mxu0 0.0
    %1808 = vmatpush1.msra.mxu0 0.0
    %1809 = vmatprep.subr.mxu0 0.0
    %1810 = vmatpush1.msra.mxu0 0.0
    %1811 = vmatprep.subr.mxu0 0.0
    %1812 = vmatpush1.msra.mxu0 0.0
    %1813 = vmatprep.subr.mxu0 0.0
    %1814 = vmatpush1.msra.mxu0 0.0
    %1815 = vmatprep.subr.mxu0 0.0
    %1816 = vmatpush1.msra.mxu0 0.0
    %1817 = vmatprep.subr.mxu0 0.0
    %1818 = vmatpush1.msra.mxu0 0.0
    %1819 = vmatprep.subr.mxu0 0.0
    %1820 = vmatpush1.msra.mxu0 0.0
    %1821 = vmatprep.subr.mxu0 0.0
    %1822 = vmatpush1.msra.mxu0 0.0
    %1823 = vmatprep.subr.mxu0 0.0
    %1824 = vmatpush1.msra.mxu0 0.0
    %1825 = vmatprep.subr.mxu0 0.0
    %1826 = vmatpush1.msra.mxu0 0.0
    %1827 = vmatprep.subr.mxu0 0.0
    %1828 = vmatpush1.msra.mxu0 0.0
    %1829 = vmatprep.subr.mxu0 0.0
    %1830 = vmatpush1.msra.mxu0 0.0
    %1831 = vmatprep.subr.mxu0 0.0
    %1832 = vmatpush1.msra.mxu0 0.0
    %1833 = vmatprep.subr.mxu0 0.0
    %1834 = vmatpush1.msra.mxu0 0.0
    %1835 = vmatprep.subr.mxu0 0.0
    %1836 = vmatpush1.msra.mxu0 0.0
    %1837 = vmatprep.subr.mxu0 0.0
    %1838 = vmatpush1.msra.mxu0 0.0
    %1839 = vmatprep.subr.mxu0 0.0
    %1840 = vmatpush1.msra.mxu0 0.0
    %1841 = vmatprep.subr.mxu0 0.0
    %1842 = vmatpush1.msra.mxu0 0.0
    %1843 = vmatprep.subr.mxu0 0.0
    %1844 = vmatpush1.msra.mxu0 0.0
    %1845 = vmatprep.mubr.f32.mxu0 0.0
    %1846 = vmatmul.mubr.f32.gmra.mrb[0].mxu0 %v1779
    %v1847 = vpop.f32.mrb[0].mxu0
    %v1848 = vadd.f32 0.0, %v1847
    %v1849 = vpop.f32.mrb[0].mxu0
    %v1850 = vadd.f32 0.0, %v1849
    %1851 = vdwg.mxu0
    %v1853 = vrot.slane %v1848, 6
    %v1855 = vadd.f32 %v1624, %v1853
    %v1857 = vrot.slane %v1850, 4
    %v1859 = vadd.f32 %v1627, %v1857
    %v1860 = vxor.u32 %v1855, 2147483648
    %v1861 = vmul.f32 %v1860, 1.442695
    %v1862 = vpow.pop %v1861
    %v1863 = vadd.f32 %v1862, 1.0
    %v1864 = vrcp.pop %v1863
    %v1865 = vmul.f32 1.0, %v1864
    %v1866 = vtanh.pop %v1855
    %v1868 = vrot.slane %v1737, 6
    %v1870 = vmul.f32 %v1865, %v1868
    %1872 = vrot.lane.b32.xlu0 %v1866, 64
    %v1873 = vpop.permute.xlu0 %1872
    %v1875 = vmul.f32 %v1865, %v1873
    %1877 = vrot.lane.b32.xlu0 %v1875, 32
    %v1878 = vpop.permute.xlu0 %1877
    %v1880 = vadd.f32 %v1870, %v1878
    %v1881 = vtanh.pop %v1880
    %1883 = vrot.lane.b32.xlu0 %v1881, 64
    %v1884 = vpop.permute.xlu0 %1883
    %v1886 = vmul.f32 %v1865, %v1884
    %v1887 = vxor.u32 %v1859, 2147483648
    %v1888 = vmul.f32 %v1887, 1.442695
    %v1889 = vpow.pop %v1888
    %v1890 = vadd.f32 %v1889, 1.0
    %v1891 = vrcp.pop %v1890
    %v1892 = vmul.f32 1.0, %v1891
    %v1893 = vtanh.pop %v1859
    %v1895 = vrot.slane %v1761, 2
    %v1897 = vmul.f32 %v1892, %v1895
    %1899 = vrot.lane.b32.xlu0 %v1893, 64
    %v1900 = vpop.permute.xlu0 %1899
    %v1902 = vmul.f32 %v1892, %v1900
    %1904 = vrot.lane.b32.xlu0 %v1902, 32
    %v1905 = vpop.permute.xlu0 %1904
    %v1907 = vadd.f32 %v1897, %v1905
    %v1908 = vtanh.pop %v1907
    %1910 = vrot.lane.b32.xlu0 %v1908, 64
    %v1911 = vpop.permute.xlu0 %1910
    %v1913 = vmul.f32 %v1892, %v1911
    %1915 = vrot.lane.b32.xlu0 %v1886, 32
    %v1916 = vpop.permute.xlu0 %1915
    %v1919 = vrot.slane %v1913, 2
    %1920 = vrot.lane.b32.xlu0 %v1919, 64
    %v1921 = vpop.permute.xlu0 %1920
    %v1923 = vsel %vm373, %v1916, %v1921
    %v1925 = vrot.slane %v1923, 2
    %v1926 = vsel %vm130, %v1925, 0
    %1928 = vmatprep.subr.mxu0 %v1629
    %1929 = vmatpush1.msra.mxu0 %v1628
    %1930 = vmatprep.subr.mxu0 %v1631
    %1931 = vmatpush1.msra.mxu0 %v1630
    %1932 = vmatprep.subr.mxu0 %v1633
    %1933 = vmatpush1.msra.mxu0 %v1632
    %1934 = vmatprep.subr.mxu0 %v1635
    %1935 = vmatpush1.msra.mxu0 %v1634
    %1936 = vmatprep.subr.mxu0 %v1637
    %1937 = vmatpush1.msra.mxu0 %v1636
    %1938 = vmatprep.subr.mxu0 %v1639
    %1939 = vmatpush1.msra.mxu0 %v1638
    %1940 = vmatprep.subr.mxu0 %v1641
    %1941 = vmatpush1.msra.mxu0 %v1640
    %1942 = vmatprep.subr.mxu0 %v1643
    %1943 = vmatpush1.msra.mxu0 %v1642
    %1944 = vmatprep.subr.mxu0 0.0
    %1945 = vmatpush1.msra.mxu0 0.0
    %1946 = vmatprep.subr.mxu0 0.0
    %1947 = vmatpush1.msra.mxu0 0.0
    %1948 = vmatprep.subr.mxu0 0.0
    %1949 = vmatpush1.msra.mxu0 0.0
    %1950 = vmatprep.subr.mxu0 0.0
    %1951 = vmatpush1.msra.mxu0 0.0
    %1952 = vmatprep.subr.mxu0 0.0
    %1953 = vmatpush1.msra.mxu0 0.0
    %1954 = vmatprep.subr.mxu0 0.0
    %1955 = vmatpush1.msra.mxu0 0.0
    %1956 = vmatprep.subr.mxu0 0.0
    %1957 = vmatpush1.msra.mxu0 0.0
    %1958 = vmatprep.subr.mxu0 0.0
    %1959 = vmatpush1.msra.mxu0 0.0
    %1960 = vmatprep.subr.mxu0 0.0
    %1961 = vmatpush1.msra.mxu0 0.0
    %1962 = vmatprep.subr.mxu0 0.0
    %1963 = vmatpush1.msra.mxu0 0.0
    %1964 = vmatprep.subr.mxu0 0.0
    %1965 = vmatpush1.msra.mxu0 0.0
    %1966 = vmatprep.subr.mxu0 0.0
    %1967 = vmatpush1.msra.mxu0 0.0
    %1968 = vmatprep.subr.mxu0 0.0
    %1969 = vmatpush1.msra.mxu0 0.0
    %1970 = vmatprep.subr.mxu0 0.0
    %1971 = vmatpush1.msra.mxu0 0.0
    %1972 = vmatprep.subr.mxu0 0.0
    %1973 = vmatpush1.msra.mxu0 0.0
    %1974 = vmatprep.subr.mxu0 0.0
    %1975 = vmatpush1.msra.mxu0 0.0
    %1976 = vmatprep.subr.mxu0 0.0
    %1977 = vmatpush1.msra.mxu0 0.0
    %1978 = vmatprep.subr.mxu0 0.0
    %1979 = vmatpush1.msra.mxu0 0.0
    %1980 = vmatprep.subr.mxu0 0.0
    %1981 = vmatpush1.msra.mxu0 0.0
    %1982 = vmatprep.subr.mxu0 0.0
    %1983 = vmatpush1.msra.mxu0 0.0
    %1984 = vmatprep.subr.mxu0 0.0
    %1985 = vmatpush1.msra.mxu0 0.0
    %1986 = vmatprep.subr.mxu0 0.0
    %1987 = vmatpush1.msra.mxu0 0.0
    %1988 = vmatprep.subr.mxu0 0.0
    %1989 = vmatpush1.msra.mxu0 0.0
    %1990 = vmatprep.subr.mxu0 0.0
    %1991 = vmatpush1.msra.mxu0 0.0
    %1992 = vmatprep.mubr.f32.mxu0 0.0
    %1993 = vmatmul.mubr.f32.gmra.mrb[0].mxu0 %v1926
    %v1994 = vpop.f32.mrb[0].mxu0
    %v1995 = vadd.f32 0.0, %v1994
    %v1996 = vpop.f32.mrb[0].mxu0
    %v1997 = vadd.f32 0.0, %v1996
    %1998 = vdwg.mxu0
    %v2000 = vrot.slane %v1995, 4
    %v2002 = vadd.f32 %v1624, %v2000
    %v2004 = vrot.slane %v1997, 6
    %v2006 = vadd.f32 %v1627, %v2004
    %v2007 = vxor.u32 %v2002, 2147483648
    %v2008 = vmul.f32 %v2007, 1.442695
    %v2009 = vpow.pop %v2008
    %v2010 = vadd.f32 %v2009, 1.0
    %v2011 = vrcp.pop %v2010
    %v2012 = vmul.f32 1.0, %v2011
    %v2013 = vtanh.pop %v2002
    %v2015 = vrot.slane %v1880, 6
    %v2017 = vmul.f32 %v2012, %v2015
    %2019 = vrot.lane.b32.xlu0 %v2013, 64
    %v2020 = vpop.permute.xlu0 %2019
    %v2022 = vmul.f32 %v2012, %v2020
    %2024 = vrot.lane.b32.xlu0 %v2022, 32
    %v2025 = vpop.permute.xlu0 %2024
    %v2027 = vadd.f32 %v2017, %v2025
    %v2028 = vtanh.pop %v2027
    %2030 = vrot.lane.b32.xlu0 %v2028, 64
    %v2031 = vpop.permute.xlu0 %2030
    %v2033 = vmul.f32 %v2012, %v2031
    %v2034 = vxor.u32 %v2006, 2147483648
    %v2035 = vmul.f32 %v2034, 1.442695
    %v2036 = vpow.pop %v2035
    %v2037 = vadd.f32 %v2036, 1.0
    %v2038 = vrcp.pop %v2037
    %v2039 = vmul.f32 1.0, %v2038
    %v2040 = vtanh.pop %v2006
    %v2042 = vrot.slane %v1907, 2
    %v2044 = vmul.f32 %v2039, %v2042
    %2046 = vrot.lane.b32.xlu0 %v2040, 64
    %v2047 = vpop.permute.xlu0 %2046
    %v2049 = vmul.f32 %v2039, %v2047
    %2051 = vrot.lane.b32.xlu0 %v2049, 32
    %v2052 = vpop.permute.xlu0 %2051
    %v2054 = vadd.f32 %v2044, %v2052
    %v2055 = vtanh.pop %v2054
    %2057 = vrot.lane.b32.xlu0 %v2055, 64
    %v2058 = vpop.permute.xlu0 %2057
    %v2060 = vmul.f32 %v2039, %v2058
    %2062 = vrot.lane.b32.xlu0 %v2033, 32
    %v2063 = vpop.permute.xlu0 %2062
    %v2066 = vrot.slane %v2060, 6
    %2067 = vrot.lane.b32.xlu0 %v2066, 64
    %v2068 = vpop.permute.xlu0 %2067
    %v2070 = vsel %vm373, %v2063, %v2068
    %v2072 = vrot.slane %v2070, 4
    %v2073 = vsel %vm130, %v2072, 0
    %2075 = vmatprep.subr.mxu0 %v1629
    %2076 = vmatpush1.msra.mxu0 %v1628
    %2077 = vmatprep.subr.mxu0 %v1631
    %2078 = vmatpush1.msra.mxu0 %v1630
    %2079 = vmatprep.subr.mxu0 %v1633
    %2080 = vmatpush1.msra.mxu0 %v1632
    %2081 = vmatprep.subr.mxu0 %v1635
    %2082 = vmatpush1.msra.mxu0 %v1634
    %2083 = vmatprep.subr.mxu0 %v1637
    %2084 = vmatpush1.msra.mxu0 %v1636
    %2085 = vmatprep.subr.mxu0 %v1639
    %2086 = vmatpush1.msra.mxu0 %v1638
    %2087 = vmatprep.subr.mxu0 %v1641
    %2088 = vmatpush1.msra.mxu0 %v1640
    %2089 = vmatprep.subr.mxu0 %v1643
    %2090 = vmatpush1.msra.mxu0 %v1642
    %2091 = vmatprep.subr.mxu0 0.0
    %2092 = vmatpush1.msra.mxu0 0.0
    %2093 = vmatprep.subr.mxu0 0.0
    %2094 = vmatpush1.msra.mxu0 0.0
    %2095 = vmatprep.subr.mxu0 0.0
    %2096 = vmatpush1.msra.mxu0 0.0
    %2097 = vmatprep.subr.mxu0 0.0
    %2098 = vmatpush1.msra.mxu0 0.0
    %2099 = vmatprep.subr.mxu0 0.0
    %2100 = vmatpush1.msra.mxu0 0.0
    %2101 = vmatprep.subr.mxu0 0.0
    %2102 = vmatpush1.msra.mxu0 0.0
    %2103 = vmatprep.subr.mxu0 0.0
    %2104 = vmatpush1.msra.mxu0 0.0
    %2105 = vmatprep.subr.mxu0 0.0
    %2106 = vmatpush1.msra.mxu0 0.0
    %2107 = vmatprep.subr.mxu0 0.0
    %2108 = vmatpush1.msra.mxu0 0.0
    %2109 = vmatprep.subr.mxu0 0.0
    %2110 = vmatpush1.msra.mxu0 0.0
    %2111 = vmatprep.subr.mxu0 0.0
    %2112 = vmatpush1.msra.mxu0 0.0
    %2113 = vmatprep.subr.mxu0 0.0
    %2114 = vmatpush1.msra.mxu0 0.0
    %2115 = vmatprep.subr.mxu0 0.0
    %2116 = vmatpush1.msra.mxu0 0.0
    %2117 = vmatprep.subr.mxu0 0.0
    %2118 = vmatpush1.msra.mxu0 0.0
    %2119 = vmatprep.subr.mxu0 0.0
    %2120 = vmatpush1.msra.mxu0 0.0
    %2121 = vmatprep.subr.mxu0 0.0
    %2122 = vmatpush1.msra.mxu0 0.0
    %2123 = vmatprep.subr.mxu0 0.0
    %2124 = vmatpush1.msra.mxu0 0.0
    %2125 = vmatprep.subr.mxu0 0.0
    %2126 = vmatpush1.msra.mxu0 0.0
    %2127 = vmatprep.subr.mxu0 0.0
    %2128 = vmatpush1.msra.mxu0 0.0
    %2129 = vmatprep.subr.mxu0 0.0
    %2130 = vmatpush1.msra.mxu0 0.0
    %2131 = vmatprep.subr.mxu0 0.0
    %2132 = vmatpush1.msra.mxu0 0.0
    %2133 = vmatprep.subr.mxu0 0.0
    %2134 = vmatpush1.msra.mxu0 0.0
    %2135 = vmatprep.subr.mxu0 0.0
    %2136 = vmatpush1.msra.mxu0 0.0
    %2137 = vmatprep.subr.mxu0 0.0
    %2138 = vmatpush1.msra.mxu0 0.0
    %2139 = vmatprep.mubr.f32.mxu0 0.0
    %2140 = vmatmul.mubr.f32.gmra.mrb[0].mxu0 %v2073
    %v2141 = vpop.f32.mrb[0].mxu0
    %v2142 = vadd.f32 0.0, %v2141
    %v2143 = vpop.f32.mrb[0].mxu0
    %v2144 = vadd.f32 0.0, %v2143
    %2145 = vdwg.mxu0
    %v2147 = vrot.slane %v2142, 2
    %v2149 = vadd.f32 %v1624, %v2147
    %v2150 = vadd.f32 %v1627, %v2144
    %v2151 = vxor.u32 %v2149, 2147483648
    %v2152 = vmul.f32 %v2151, 1.442695
    %v2153 = vpow.pop %v2152
    %v2154 = vadd.f32 %v2153, 1.0
    %v2155 = vrcp.pop %v2154
    %v2156 = vmul.f32 1.0, %v2155
    %v2157 = vtanh.pop %v2149
    %v2159 = vrot.slane %v2027, 6
    %v2161 = vmul.f32 %v2156, %v2159
    %2163 = vrot.lane.b32.xlu0 %v2157, 64
    %v2164 = vpop.permute.xlu0 %2163
    %v2166 = vmul.f32 %v2156, %v2164
    %2168 = vrot.lane.b32.xlu0 %v2166, 32
    %v2169 = vpop.permute.xlu0 %2168
    %v2171 = vadd.f32 %v2161, %v2169
    %v2172 = vtanh.pop %v2171
    %2174 = vrot.lane.b32.xlu0 %v2172, 64
    %v2175 = vpop.permute.xlu0 %2174
    %v2177 = vmul.f32 %v2156, %v2175
    %v2178 = vxor.u32 %v2150, 2147483648
    %v2179 = vmul.f32 %v2178, 1.442695
    %v2180 = vpow.pop %v2179
    %v2181 = vadd.f32 %v2180, 1.0
    %v2182 = vrcp.pop %v2181
    %v2183 = vmul.f32 1.0, %v2182
    %v2184 = vtanh.pop %v2150
    %v2186 = vrot.slane %v2054, 2
    %v2188 = vmul.f32 %v2183, %v2186
    %2190 = vrot.lane.b32.xlu0 %v2184, 64
    %v2191 = vpop.permute.xlu0 %2190
    %v2193 = vmul.f32 %v2183, %v2191
    %2195 = vrot.lane.b32.xlu0 %v2193, 32
    %v2196 = vpop.permute.xlu0 %2195
    %v2198 = vadd.f32 %v2188, %v2196
    %v2199 = vtanh.pop %v2198
    %2201 = vrot.lane.b32.xlu0 %v2199, 64
    %v2202 = vpop.permute.xlu0 %2201
    %v2204 = vmul.f32 %v2183, %v2202
    %2206 = vrot.lane.b32.xlu0 %v2177, 32
    %v2207 = vpop.permute.xlu0 %2206
    %v2210 = vrot.slane %v2204, 2
    %2211 = vrot.lane.b32.xlu0 %v2210, 64
    %v2212 = vpop.permute.xlu0 %2211
    %v2214 = vsel %vm373, %v2207, %v2212
    %v2216 = vrot.slane %v2214, 6
    %v2217 = vsel %vm130, %v2216, 0
    %2219 = vmatprep.subr.mxu0 %v1629
    %2220 = vmatpush1.msra.mxu0 %v1628
    %2221 = vmatprep.subr.mxu0 %v1631
    %2222 = vmatpush1.msra.mxu0 %v1630
    %2223 = vmatprep.subr.mxu0 %v1633
    %2224 = vmatpush1.msra.mxu0 %v1632
    %2225 = vmatprep.subr.mxu0 %v1635
    %2226 = vmatpush1.msra.mxu0 %v1634
    %2227 = vmatprep.subr.mxu0 %v1637
    %2228 = vmatpush1.msra.mxu0 %v1636
    %2229 = vmatprep.subr.mxu0 %v1639
    %2230 = vmatpush1.msra.mxu0 %v1638
    %2231 = vmatprep.subr.mxu0 %v1641
    %2232 = vmatpush1.msra.mxu0 %v1640
    %2233 = vmatprep.subr.mxu0 %v1643
    %2234 = vmatpush1.msra.mxu0 %v1642
    %2235 = vmatprep.subr.mxu0 0.0
    %2236 = vmatpush1.msra.mxu0 0.0
    %2237 = vmatprep.subr.mxu0 0.0
    %2238 = vmatpush1.msra.mxu0 0.0
    %2239 = vmatprep.subr.mxu0 0.0
    %2240 = vmatpush1.msra.mxu0 0.0
    %2241 = vmatprep.subr.mxu0 0.0
    %2242 = vmatpush1.msra.mxu0 0.0
    %2243 = vmatprep.subr.mxu0 0.0
    %2244 = vmatpush1.msra.mxu0 0.0
    %2245 = vmatprep.subr.mxu0 0.0
    %2246 = vmatpush1.msra.mxu0 0.0
    %2247 = vmatprep.subr.mxu0 0.0
    %2248 = vmatpush1.msra.mxu0 0.0
    %2249 = vmatprep.subr.mxu0 0.0
    %2250 = vmatpush1.msra.mxu0 0.0
    %2251 = vmatprep.subr.mxu0 0.0
    %2252 = vmatpush1.msra.mxu0 0.0
    %2253 = vmatprep.subr.mxu0 0.0
    %2254 = vmatpush1.msra.mxu0 0.0
    %2255 = vmatprep.subr.mxu0 0.0
    %2256 = vmatpush1.msra.mxu0 0.0
    %2257 = vmatprep.subr.mxu0 0.0
    %2258 = vmatpush1.msra.mxu0 0.0
    %2259 = vmatprep.subr.mxu0 0.0
    %2260 = vmatpush1.msra.mxu0 0.0
    %2261 = vmatprep.subr.mxu0 0.0
    %2262 = vmatpush1.msra.mxu0 0.0
    %2263 = vmatprep.subr.mxu0 0.0
    %2264 = vmatpush1.msra.mxu0 0.0
    %2265 = vmatprep.subr.mxu0 0.0
    %2266 = vmatpush1.msra.mxu0 0.0
    %2267 = vmatprep.subr.mxu0 0.0
    %2268 = vmatpush1.msra.mxu0 0.0
    %2269 = vmatprep.subr.mxu0 0.0
    %2270 = vmatpush1.msra.mxu0 0.0
    %2271 = vmatprep.subr.mxu0 0.0
    %2272 = vmatpush1.msra.mxu0 0.0
    %2273 = vmatprep.subr.mxu0 0.0
    %2274 = vmatpush1.msra.mxu0 0.0
    %2275 = vmatprep.subr.mxu0 0.0
    %2276 = vmatpush1.msra.mxu0 0.0
    %2277 = vmatprep.subr.mxu0 0.0
    %2278 = vmatpush1.msra.mxu0 0.0
    %2279 = vmatprep.subr.mxu0 0.0
    %2280 = vmatpush1.msra.mxu0 0.0
    %2281 = vmatprep.subr.mxu0 0.0
    %2282 = vmatpush1.msra.mxu0 0.0
    %2283 = vmatprep.mubr.f32.mxu0 0.0
    %2284 = vmatmul.mubr.f32.gmra.mrb[0].mxu0 %v2217
    %v2285 = vpop.f32.mrb[0].mxu0
    %v2286 = vadd.f32 0.0, %v2285
    %v2287 = vpop.f32.mrb[0].mxu0
    %v2288 = vadd.f32 0.0, %v2287
    %2289 = vdwg.mxu0
    %v2290 = vadd.f32 %v1626, %v2286
    %v2292 = vrot.slane %v2288, 2
    %v2294 = vadd.f32 %v1625, %v2292
    %v2295 = vxor.u32 %v2290, 2147483648
    %v2296 = vmul.f32 %v2295, 1.442695
    %v2297 = vpow.pop %v2296
    %v2298 = vadd.f32 %v2297, 1.0
    %v2299 = vrcp.pop %v2298
    %v2300 = vmul.f32 1.0, %v2299
    %v2301 = vtanh.pop %v2290
    %v2303 = vrot.slane %v2171, 6
    %v2305 = vmul.f32 %v2300, %v2303
    %2307 = vrot.lane.b32.xlu0 %v2301, 64
    %v2308 = vpop.permute.xlu0 %2307
    %v2310 = vmul.f32 %v2300, %v2308
    %2312 = vrot.lane.b32.xlu0 %v2310, 32
    %v2313 = vpop.permute.xlu0 %2312
    %v2315 = vadd.f32 %v2305, %v2313
    %v2316 = vtanh.pop %v2315
    %2318 = vrot.lane.b32.xlu0 %v2316, 64
    %v2319 = vpop.permute.xlu0 %2318
    %v2321 = vmul.f32 %v2300, %v2319
    %v2322 = vxor.u32 %v2294, 2147483648
    %v2323 = vmul.f32 %v2322, 1.442695
    %v2324 = vpow.pop %v2323
    %v2325 = vadd.f32 %v2324, 1.0
    %v2326 = vrcp.pop %v2325
    %v2327 = vmul.f32 1.0, %v2326
    %v2328 = vtanh.pop %v2294
    %v2330 = vrot.slane %v2198, 2
    %v2332 = vmul.f32 %v2327, %v2330
    %2334 = vrot.lane.b32.xlu0 %v2328, 64
    %v2335 = vpop.permute.xlu0 %2334
    %v2337 = vmul.f32 %v2327, %v2335
    %2339 = vrot.lane.b32.xlu0 %v2337, 32
    %v2340 = vpop.permute.xlu0 %2339
    %v2342 = vadd.f32 %v2332, %v2340
    %v2343 = vtanh.pop %v2342
    %2345 = vrot.lane.b32.xlu0 %v2343, 64
    %v2346 = vpop.permute.xlu0 %2345
    %v2348 = vmul.f32 %v2327, %v2346
    %2350 = vrot.lane.b32.xlu0 %v2321, 32
    %v2351 = vpop.permute.xlu0 %2350
    %v2354 = vrot.slane %v2348, 6
    %2355 = vrot.lane.b32.xlu0 %v2354, 64
    %v2356 = vpop.permute.xlu0 %2355
    %v2358 = vsel %vm373, %v2351, %v2356
    %v2360 = vsel %vm130, %v2358, 0
    %2362 = vmatprep.subr.mxu0 %v1629
    %2363 = vmatpush1.msra.mxu0 %v1628
    %2364 = vmatprep.subr.mxu0 %v1631
    %2365 = vmatpush1.msra.mxu0 %v1630
    %2366 = vmatprep.subr.mxu0 %v1633
    %2367 = vmatpush1.msra.mxu0 %v1632
    %2368 = vmatprep.subr.mxu0 %v1635
    %2369 = vmatpush1.msra.mxu0 %v1634
    %2370 = vmatprep.subr.mxu0 %v1637
    %2371 = vmatpush1.msra.mxu0 %v1636
    %2372 = vmatprep.subr.mxu0 %v1639
    %2373 = vmatpush1.msra.mxu0 %v1638
    %2374 = vmatprep.subr.mxu0 %v1641
    %2375 = vmatpush1.msra.mxu0 %v1640
    %2376 = vmatprep.subr.mxu0 %v1643
    %2377 = vmatpush1.msra.mxu0 %v1642
    %2378 = vmatprep.subr.mxu0 0.0
    %2379 = vmatpush1.msra.mxu0 0.0
    %2380 = vmatprep.subr.mxu0 0.0
    %2381 = vmatpush1.msra.mxu0 0.0
    %2382 = vmatprep.subr.mxu0 0.0
    %2383 = vmatpush1.msra.mxu0 0.0
    %2384 = vmatprep.subr.mxu0 0.0
    %2385 = vmatpush1.msra.mxu0 0.0
    %2386 = vmatprep.subr.mxu0 0.0
    %2387 = vmatpush1.msra.mxu0 0.0
    %2388 = vmatprep.subr.mxu0 0.0
    %2389 = vmatpush1.msra.mxu0 0.0
    %2390 = vmatprep.subr.mxu0 0.0
    %2391 = vmatpush1.msra.mxu0 0.0
    %2392 = vmatprep.subr.mxu0 0.0
    %2393 = vmatpush1.msra.mxu0 0.0
    %2394 = vmatprep.subr.mxu0 0.0
    %2395 = vmatpush1.msra.mxu0 0.0
    %2396 = vmatprep.subr.mxu0 0.0
    %2397 = vmatpush1.msra.mxu0 0.0
    %2398 = vmatprep.subr.mxu0 0.0
    %2399 = vmatpush1.msra.mxu0 0.0
    %2400 = vmatprep.subr.mxu0 0.0
    %2401 = vmatpush1.msra.mxu0 0.0
    %2402 = vmatprep.subr.mxu0 0.0
    %2403 = vmatpush1.msra.mxu0 0.0
    %2404 = vmatprep.subr.mxu0 0.0
    %2405 = vmatpush1.msra.mxu0 0.0
    %2406 = vmatprep.subr.mxu0 0.0
    %2407 = vmatpush1.msra.mxu0 0.0
    %2408 = vmatprep.subr.mxu0 0.0
    %2409 = vmatpush1.msra.mxu0 0.0
    %2410 = vmatprep.subr.mxu0 0.0
    %2411 = vmatpush1.msra.mxu0 0.0
    %2412 = vmatprep.subr.mxu0 0.0
    %2413 = vmatpush1.msra.mxu0 0.0
    %2414 = vmatprep.subr.mxu0 0.0
    %2415 = vmatpush1.msra.mxu0 0.0
    %2416 = vmatprep.subr.mxu0 0.0
    %2417 = vmatpush1.msra.mxu0 0.0
    %2418 = vmatprep.subr.mxu0 0.0
    %2419 = vmatpush1.msra.mxu0 0.0
    %2420 = vmatprep.subr.mxu0 0.0
    %2421 = vmatpush1.msra.mxu0 0.0
    %2422 = vmatprep.subr.mxu0 0.0
    %2423 = vmatpush1.msra.mxu0 0.0
    %2424 = vmatprep.subr.mxu0 0.0
    %2425 = vmatpush1.msra.mxu0 0.0
    %2426 = vmatprep.mubr.f32.mxu0 0.0
    %2427 = vmatmul.mubr.f32.gmra.mrb[0].mxu0 %v2360
    %v2428 = vpop.f32.mrb[0].mxu0
    %v2429 = vadd.f32 0.0, %v2428
    %v2430 = vpop.f32.mrb[0].mxu0
    %v2431 = vadd.f32 0.0, %v2430
    %2432 = vdwg.mxu0
    %v2434 = vrot.slane %v2429, 6
    %v2436 = vadd.f32 %v1626, %v2434
    %v2438 = vrot.slane %v2431, 4
    %v2440 = vadd.f32 %v1625, %v2438
    %v2441 = vxor.u32 %v2436, 2147483648
    %v2442 = vmul.f32 %v2441, 1.442695
    %v2443 = vpow.pop %v2442
    %v2444 = vadd.f32 %v2443, 1.0
    %v2445 = vrcp.pop %v2444
    %v2446 = vmul.f32 1.0, %v2445
    %v2447 = vtanh.pop %v2436
    %v2449 = vrot.slane %v2315, 6
    %v2451 = vmul.f32 %v2446, %v2449
    %2453 = vrot.lane.b32.xlu0 %v2447, 64
    %v2454 = vpop.permute.xlu0 %2453
    %v2456 = vmul.f32 %v2446, %v2454
    %2458 = vrot.lane.b32.xlu0 %v2456, 32
    %v2459 = vpop.permute.xlu0 %2458
    %v2461 = vadd.f32 %v2451, %v2459
    %v2462 = vtanh.pop %v2461
    %2464 = vrot.lane.b32.xlu0 %v2462, 64
    %v2465 = vpop.permute.xlu0 %2464
    %v2467 = vmul.f32 %v2446, %v2465
    %v2468 = vxor.u32 %v2440, 2147483648
    %v2469 = vmul.f32 %v2468, 1.442695
    %v2470 = vpow.pop %v2469
    %v2471 = vadd.f32 %v2470, 1.0
    %v2472 = vrcp.pop %v2471
    %v2473 = vmul.f32 1.0, %v2472
    %v2474 = vtanh.pop %v2440
    %v2476 = vrot.slane %v2342, 2
    %v2478 = vmul.f32 %v2473, %v2476
    %2480 = vrot.lane.b32.xlu0 %v2474, 64
    %v2481 = vpop.permute.xlu0 %2480
    %v2483 = vmul.f32 %v2473, %v2481
    %2485 = vrot.lane.b32.xlu0 %v2483, 32
    %v2486 = vpop.permute.xlu0 %2485
    %v2488 = vadd.f32 %v2478, %v2486
    %v2489 = vtanh.pop %v2488
    %2491 = vrot.lane.b32.xlu0 %v2489, 64
    %v2492 = vpop.permute.xlu0 %2491
    %v2494 = vmul.f32 %v2473, %v2492
    %2496 = vrot.lane.b32.xlu0 %v2467, 32
    %v2497 = vpop.permute.xlu0 %2496
    %v2500 = vrot.slane %v2494, 2
    %2501 = vrot.lane.b32.xlu0 %v2500, 64
    %v2502 = vpop.permute.xlu0 %2501
    %v2504 = vsel %vm373, %v2497, %v2502
    %v2506 = vrot.slane %v2504, 2
    %v2507 = vsel %vm130, %v2506, 0
    %2509 = vmatprep.subr.mxu0 %v1629
    %2510 = vmatpush1.msra.mxu0 %v1628
    %2511 = vmatprep.subr.mxu0 %v1631
    %2512 = vmatpush1.msra.mxu0 %v1630
    %2513 = vmatprep.subr.mxu0 %v1633
    %2514 = vmatpush1.msra.mxu0 %v1632
    %2515 = vmatprep.subr.mxu0 %v1635
    %2516 = vmatpush1.msra.mxu0 %v1634
    %2517 = vmatprep.subr.mxu0 %v1637
    %2518 = vmatpush1.msra.mxu0 %v1636
    %2519 = vmatprep.subr.mxu0 %v1639
    %2520 = vmatpush1.msra.mxu0 %v1638
    %2521 = vmatprep.subr.mxu0 %v1641
    %2522 = vmatpush1.msra.mxu0 %v1640
    %2523 = vmatprep.subr.mxu0 %v1643
    %2524 = vmatpush1.msra.mxu0 %v1642
    %2525 = vmatprep.subr.mxu0 0.0
    %2526 = vmatpush1.msra.mxu0 0.0
    %2527 = vmatprep.subr.mxu0 0.0
    %2528 = vmatpush1.msra.mxu0 0.0
    %2529 = vmatprep.subr.mxu0 0.0
    %2530 = vmatpush1.msra.mxu0 0.0
    %2531 = vmatprep.subr.mxu0 0.0
    %2532 = vmatpush1.msra.mxu0 0.0
    %2533 = vmatprep.subr.mxu0 0.0
    %2534 = vmatpush1.msra.mxu0 0.0
    %2535 = vmatprep.subr.mxu0 0.0
    %2536 = vmatpush1.msra.mxu0 0.0
    %2537 = vmatprep.subr.mxu0 0.0
    %2538 = vmatpush1.msra.mxu0 0.0
    %2539 = vmatprep.subr.mxu0 0.0
    %2540 = vmatpush1.msra.mxu0 0.0
    %2541 = vmatprep.subr.mxu0 0.0
    %2542 = vmatpush1.msra.mxu0 0.0
    %2543 = vmatprep.subr.mxu0 0.0
    %2544 = vmatpush1.msra.mxu0 0.0
    %2545 = vmatprep.subr.mxu0 0.0
    %2546 = vmatpush1.msra.mxu0 0.0
    %2547 = vmatprep.subr.mxu0 0.0
    %2548 = vmatpush1.msra.mxu0 0.0
    %2549 = vmatprep.subr.mxu0 0.0
    %2550 = vmatpush1.msra.mxu0 0.0
    %2551 = vmatprep.subr.mxu0 0.0
    %2552 = vmatpush1.msra.mxu0 0.0
    %2553 = vmatprep.subr.mxu0 0.0
    %2554 = vmatpush1.msra.mxu0 0.0
    %2555 = vmatprep.subr.mxu0 0.0
    %2556 = vmatpush1.msra.mxu0 0.0
    %2557 = vmatprep.subr.mxu0 0.0
    %2558 = vmatpush1.msra.mxu0 0.0
    %2559 = vmatprep.subr.mxu0 0.0
    %2560 = vmatpush1.msra.mxu0 0.0
    %2561 = vmatprep.subr.mxu0 0.0
    %2562 = vmatpush1.msra.mxu0 0.0
    %2563 = vmatprep.subr.mxu0 0.0
    %2564 = vmatpush1.msra.mxu0 0.0
    %2565 = vmatprep.subr.mxu0 0.0
    %2566 = vmatpush1.msra.mxu0 0.0
    %2567 = vmatprep.subr.mxu0 0.0
    %2568 = vmatpush1.msra.mxu0 0.0
    %2569 = vmatprep.subr.mxu0 0.0
    %2570 = vmatpush1.msra.mxu0 0.0
    %2571 = vmatprep.subr.mxu0 0.0
    %2572 = vmatpush1.msra.mxu0 0.0
    %2573 = vmatprep.mubr.f32.mxu0 0.0
    %2574 = vmatmul.mubr.f32.gmra.mrb[0].mxu0 %v2507
    %v2575 = vpop.f32.mrb[0].mxu0
    %v2576 = vadd.f32 0.0, %v2575
    %v2577 = vpop.f32.mrb[0].mxu0
    %v2578 = vadd.f32 0.0, %v2577
    %2579 = vdwg.mxu0
    %v2581 = vrot.slane %v2576, 4
    %v2583 = vadd.f32 %v1626, %v2581
    %v2585 = vrot.slane %v2578, 6
    %v2587 = vadd.f32 %v1625, %v2585
    %v2588 = vxor.u32 %v2583, 2147483648
    %v2589 = vmul.f32 %v2588, 1.442695
    %v2590 = vpow.pop %v2589
    %v2591 = vadd.f32 %v2590, 1.0
    %v2592 = vrcp.pop %v2591
    %v2593 = vmul.f32 1.0, %v2592
    %v2594 = vtanh.pop %v2583
    %v2596 = vrot.slane %v2461, 6
    %v2598 = vmul.f32 %v2593, %v2596
    %2600 = vrot.lane.b32.xlu0 %v2594, 64
    %v2601 = vpop.permute.xlu0 %2600
    %v2603 = vmul.f32 %v2593, %v2601
    %2605 = vrot.lane.b32.xlu0 %v2603, 32
    %v2606 = vpop.permute.xlu0 %2605
    %v2608 = vadd.f32 %v2598, %v2606
    %v2609 = vtanh.pop %v2608
    %2611 = vrot.lane.b32.xlu0 %v2609, 64
    %v2612 = vpop.permute.xlu0 %2611
    %v2614 = vmul.f32 %v2593, %v2612
    %v2615 = vxor.u32 %v2587, 2147483648
    %v2616 = vmul.f32 %v2615, 1.442695
    %v2617 = vpow.pop %v2616
    %v2618 = vadd.f32 %v2617, 1.0
    %v2619 = vrcp.pop %v2618
    %v2620 = vmul.f32 1.0, %v2619
    %v2621 = vtanh.pop %v2587
    %v2623 = vrot.slane %v2488, 2
    %v2625 = vmul.f32 %v2620, %v2623
    %2627 = vrot.lane.b32.xlu0 %v2621, 64
    %v2628 = vpop.permute.xlu0 %2627
    %v2630 = vmul.f32 %v2620, %v2628
    %2632 = vrot.lane.b32.xlu0 %v2630, 32
    %v2633 = vpop.permute.xlu0 %2632
    %v2635 = vadd.f32 %v2625, %v2633
    %v2636 = vtanh.pop %v2635
    %2638 = vrot.lane.b32.xlu0 %v2636, 64
    %v2639 = vpop.permute.xlu0 %2638
    %v2641 = vmul.f32 %v2620, %v2639
    %2643 = vrot.lane.b32.xlu0 %v2614, 32
    %v2644 = vpop.permute.xlu0 %2643
    %v2647 = vrot.slane %v2641, 6
    %2648 = vrot.lane.b32.xlu0 %v2647, 64
    %v2649 = vpop.permute.xlu0 %2648
    %v2651 = vsel %vm373, %v2644, %v2649
    %v2653 = vrot.slane %v2651, 4
    %v2654 = vsel %vm130, %v2653, 0
    %2656 = vmatprep.subr.mxu0 %v1629
    %2657 = vmatpush1.msra.mxu0 %v1628
    %2658 = vmatprep.subr.mxu0 %v1631
    %2659 = vmatpush1.msra.mxu0 %v1630
    %2660 = vmatprep.subr.mxu0 %v1633
    %2661 = vmatpush1.msra.mxu0 %v1632
    %2662 = vmatprep.subr.mxu0 %v1635
    %2663 = vmatpush1.msra.mxu0 %v1634
    %2664 = vmatprep.subr.mxu0 %v1637
    %2665 = vmatpush1.msra.mxu0 %v1636
    %2666 = vmatprep.subr.mxu0 %v1639
    %2667 = vmatpush1.msra.mxu0 %v1638
    %2668 = vmatprep.subr.mxu0 %v1641
    %2669 = vmatpush1.msra.mxu0 %v1640
    %2670 = vmatprep.subr.mxu0 %v1643
    %2671 = vmatpush1.msra.mxu0 %v1642
    %2672 = vmatprep.subr.mxu0 0.0
    %2673 = vmatpush1.msra.mxu0 0.0
    %2674 = vmatprep.subr.mxu0 0.0
    %2675 = vmatpush1.msra.mxu0 0.0
    %2676 = vmatprep.subr.mxu0 0.0
    %2677 = vmatpush1.msra.mxu0 0.0
    %2678 = vmatprep.subr.mxu0 0.0
    %2679 = vmatpush1.msra.mxu0 0.0
    %2680 = vmatprep.subr.mxu0 0.0
    %2681 = vmatpush1.msra.mxu0 0.0
    %2682 = vmatprep.subr.mxu0 0.0
    %2683 = vmatpush1.msra.mxu0 0.0
    %2684 = vmatprep.subr.mxu0 0.0
    %2685 = vmatpush1.msra.mxu0 0.0
    %2686 = vmatprep.subr.mxu0 0.0
    %2687 = vmatpush1.msra.mxu0 0.0
    %2688 = vmatprep.subr.mxu0 0.0
    %2689 = vmatpush1.msra.mxu0 0.0
    %2690 = vmatprep.subr.mxu0 0.0
    %2691 = vmatpush1.msra.mxu0 0.0
    %2692 = vmatprep.subr.mxu0 0.0
    %2693 = vmatpush1.msra.mxu0 0.0
    %2694 = vmatprep.subr.mxu0 0.0
    %2695 = vmatpush1.msra.mxu0 0.0
    %2696 = vmatprep.subr.mxu0 0.0
    %2697 = vmatpush1.msra.mxu0 0.0
    %2698 = vmatprep.subr.mxu0 0.0
    %2699 = vmatpush1.msra.mxu0 0.0
    %2700 = vmatprep.subr.mxu0 0.0
    %2701 = vmatpush1.msra.mxu0 0.0
    %2702 = vmatprep.subr.mxu0 0.0
    %2703 = vmatpush1.msra.mxu0 0.0
    %2704 = vmatprep.subr.mxu0 0.0
    %2705 = vmatpush1.msra.mxu0 0.0
    %2706 = vmatprep.subr.mxu0 0.0
    %2707 = vmatpush1.msra.mxu0 0.0
    %2708 = vmatprep.subr.mxu0 0.0
    %2709 = vmatpush1.msra.mxu0 0.0
    %2710 = vmatprep.subr.mxu0 0.0
    %2711 = vmatpush1.msra.mxu0 0.0
    %2712 = vmatprep.subr.mxu0 0.0
    %2713 = vmatpush1.msra.mxu0 0.0
    %2714 = vmatprep.subr.mxu0 0.0
    %2715 = vmatpush1.msra.mxu0 0.0
    %2716 = vmatprep.subr.mxu0 0.0
    %2717 = vmatpush1.msra.mxu0 0.0
    %2718 = vmatprep.subr.mxu0 0.0
    %2719 = vmatpush1.msra.mxu0 0.0
    %2720 = vmatprep.mubr.f32.mxu0 0.0
    %2721 = vmatmul.mubr.f32.gmra.mrb[0].mxu0 %v2654
    %v2722 = vpop.f32.mrb[0].mxu0
    %v2723 = vadd.f32 0.0, %v2722
    %v2724 = vpop.f32.mrb[0].mxu0
    %v2725 = vadd.f32 0.0, %v2724
    %2726 = vdwg.mxu0
    %v2728 = vrot.slane %v2723, 2
    %v2730 = vadd.f32 %v1626, %v2728
    %v2731 = vadd.f32 %v1625, %v2725
    %v2732 = vxor.u32 %v2730, 2147483648
    %v2733 = vmul.f32 %v2732, 1.442695
    %v2734 = vpow.pop %v2733
    %v2735 = vadd.f32 %v2734, 1.0
    %v2736 = vrcp.pop %v2735
    %v2737 = vmul.f32 1.0, %v2736
    %v2738 = vtanh.pop %v2730
    %v2740 = vrot.slane %v2608, 6
    %v2742 = vmul.f32 %v2737, %v2740
    %2744 = vrot.lane.b32.xlu0 %v2738, 64
    %v2745 = vpop.permute.xlu0 %2744
    %v2747 = vmul.f32 %v2737, %v2745
    %2749 = vrot.lane.b32.xlu0 %v2747, 32
    %v2750 = vpop.permute.xlu0 %2749
    %v2752 = vadd.f32 %v2742, %v2750
    %v2753 = vtanh.pop %v2752
    %2755 = vrot.lane.b32.xlu0 %v2753, 64
    %v2756 = vpop.permute.xlu0 %2755
    %v2758 = vmul.f32 %v2737, %v2756
    %v2759 = vxor.u32 %v2731, 2147483648
    %v2760 = vmul.f32 %v2759, 1.442695
    %v2761 = vpow.pop %v2760
    %v2762 = vadd.f32 %v2761, 1.0
    %v2763 = vrcp.pop %v2762
    %v2764 = vmul.f32 1.0, %v2763
    %v2765 = vtanh.pop %v2731
    %v2767 = vrot.slane %v2635, 2
    %v2769 = vmul.f32 %v2764, %v2767
    %2771 = vrot.lane.b32.xlu0 %v2765, 64
    %v2772 = vpop.permute.xlu0 %2771
    %v2774 = vmul.f32 %v2764, %v2772
    %2776 = vrot.lane.b32.xlu0 %v2774, 32
    %v2777 = vpop.permute.xlu0 %2776
    %v2779 = vadd.f32 %v2769, %v2777
    %v2780 = vtanh.pop %v2779
    %2782 = vrot.lane.b32.xlu0 %v2780, 64
    %v2783 = vpop.permute.xlu0 %2782
    %v2785 = vmul.f32 %v2764, %v2783
    %v2786 = vrot.slane %v1414, 2
    %v2788 = vadd.f32 %v1387, %v2786
    %v2789 = vadd.f32 %v2788, %v2758
    %v2791 = vrot.slane %v2785, 2
    %v2793 = vadd.f32 %v2789, %v2791
    %v2794 = vld [vmem:[%s7] sm:$0xff]
    %v2795 = vld [vmem:[%s7 + $0x8] sm:$0xff]
    %v2796 = vld [vmem:[%s7 + $0x10] sm:$0xff]
    %v2797 = vld [vmem:[%s7 + $0x18] sm:$0xff]
    %v2798 = vld [vmem:[%s8] sm:$0x1]
    %v2800 = vlaneseq
    %v2801 = vshrl.u32 %v2800, 7
    %v2802 = vsub.s32 0, %v2801
    %v2803 = vrot.slane %v2798, %v2802
    %v2806 = vrot.slane %v2793, 6
    %2807 = vrot.lane.b32.xlu0 %v2806, 32
    %v2808 = vpop.permute.xlu0 %2807
    %v2809 = vsel %vm373, %v2808, 0
    %2811 = vmatprep.subr.mxu0 0.0
    %2812 = vmatpush1.msra.mxu0 %v2794
    %2813 = vmatprep.subr.mxu0 0.0
    %2814 = vmatpush1.msra.mxu0 %v2795
    %2815 = vmatprep.subr.mxu0 0.0
    %2816 = vmatpush1.msra.mxu0 %v2796
    %2817 = vmatprep.subr.mxu0 0.0
    %2818 = vmatpush1.msra.mxu0 %v2797
    %2819 = vmatprep.subr.mxu0 0.0
    %2820 = vmatpush1.msra.mxu0 0.0
    %2821 = vmatprep.subr.mxu0 0.0
    %2822 = vmatpush1.msra.mxu0 0.0
    %2823 = vmatprep.subr.mxu0 0.0
    %2824 = vmatpush1.msra.mxu0 0.0
    %2825 = vmatprep.subr.mxu0 0.0
    %2826 = vmatpush1.msra.mxu0 0.0
    %2827 = vmatprep.subr.mxu0 0.0
    %2828 = vmatpush1.msra.mxu0 0.0
    %2829 = vmatprep.subr.mxu0 0.0
    %2830 = vmatpush1.msra.mxu0 0.0
    %2831 = vmatprep.subr.mxu0 0.0
    %2832 = vmatpush1.msra.mxu0 0.0
    %2833 = vmatprep.subr.mxu0 0.0
    %2834 = vmatpush1.msra.mxu0 0.0
    %2835 = vmatprep.subr.mxu0 0.0
    %2836 = vmatpush1.msra.mxu0 0.0
    %2837 = vmatprep.subr.mxu0 0.0
    %2838 = vmatpush1.msra.mxu0 0.0
    %2839 = vmatprep.subr.mxu0 0.0
    %2840 = vmatpush1.msra.mxu0 0.0
    %2841 = vmatprep.subr.mxu0 0.0
    %2842 = vmatpush1.msra.mxu0 0.0
    %2843 = vmatprep.subr.mxu0 0.0
    %2844 = vmatpush1.msra.mxu0 0.0
    %2845 = vmatprep.subr.mxu0 0.0
    %2846 = vmatpush1.msra.mxu0 0.0
    %2847 = vmatprep.subr.mxu0 0.0
    %2848 = vmatpush1.msra.mxu0 0.0
    %2849 = vmatprep.subr.mxu0 0.0
    %2850 = vmatpush1.msra.mxu0 0.0
    %2851 = vmatprep.subr.mxu0 0.0
    %2852 = vmatpush1.msra.mxu0 0.0
    %2853 = vmatprep.subr.mxu0 0.0
    %2854 = vmatpush1.msra.mxu0 0.0
    %2855 = vmatprep.subr.mxu0 0.0
    %2856 = vmatpush1.msra.mxu0 0.0
    %2857 = vmatprep.subr.mxu0 0.0
    %2858 = vmatpush1.msra.mxu0 0.0
    %2859 = vmatprep.subr.mxu0 0.0
    %2860 = vmatpush1.msra.mxu0 0.0
    %2861 = vmatprep.subr.mxu0 0.0
    %2862 = vmatpush1.msra.mxu0 0.0
    %2863 = vmatprep.subr.mxu0 0.0
    %2864 = vmatpush1.msra.mxu0 0.0
    %2865 = vmatprep.subr.mxu0 0.0
    %2866 = vmatpush1.msra.mxu0 0.0
    %2867 = vmatprep.subr.mxu0 0.0
    %2868 = vmatpush1.msra.mxu0 0.0
    %2869 = vmatprep.subr.mxu0 0.0
    %2870 = vmatpush1.msra.mxu0 0.0
    %2871 = vmatprep.subr.mxu0 0.0
    %2872 = vmatpush1.msra.mxu0 0.0
    %2873 = vmatprep.subr.mxu0 0.0
    %2874 = vmatpush1.msra.mxu0 0.0
    %2875 = vmatprep.mubr.f32.mxu0 0.0
    %2876 = vmatmul.mubr.f32.gmra.mrb[0].mxu0 %v2809
    %v2877 = vpop.f32.mrb[0].mxu0
    %v2878 = vadd.f32 %v2803, %v2877
    %v2879 = vpop.f32.mrb[0].mxu0
    %2880 = vdwg.mxu0
    %v2881 = vmax.f32 %v2878, 0.0
    %v2882 = vadd.f32 %v1743, %v2785
    %v2883 = vadd.f32 %v1886, %v2641
    %v2884 = vadd.f32 %v2033, %v2494
    %v2885 = vadd.f32 %v2177, %v2348
    %v2886 = vadd.f32 %v2321, %v2204
    %v2887 = vadd.f32 %v2467, %v2060
    %v2888 = vadd.f32 %v2614, %v1913
    %v2889 = vadd.f32 %v2758, %v1767
    %v2890 = vtanh.pop %v2882
    %2892 = vrot.lane.b32.xlu0 %v2890, 32
    %v2893 = vpop.permute.xlu0 %2892
    %v2895 = vmul.f32 %v2881, %v2893
    %v2896 = vsel %vm361, %v2895, 0.0
    %2897 = vadd.xlane.f32.xlu0 %v2896
    %v2898 = vpop.xlane.xlu0 %2897
    %v2899 = vtanh.pop %v2883
    %v2901 = vrot.slane %v2899, 2
    %2902 = vrot.lane.b32.xlu0 %v2901, 32
    %v2903 = vpop.permute.xlu0 %2902
    %v2905 = vmul.f32 %v2881, %v2903
    %v2906 = vsel %vm361, %v2905, 0.0
    %2907 = vadd.xlane.f32.xlu0 %v2906
    %v2908 = vpop.xlane.xlu0 %2907
    %v2909 = vtanh.pop %v2884
    %v2911 = vrot.slane %v2909, 4
    %2912 = vrot.lane.b32.xlu0 %v2911, 32
    %v2913 = vpop.permute.xlu0 %2912
    %v2915 = vmul.f32 %v2881, %v2913
    %v2916 = vsel %vm361, %v2915, 0.0
    %2917 = vadd.xlane.f32.xlu0 %v2916
    %v2918 = vpop.xlane.xlu0 %2917
    %v2919 = vtanh.pop %v2885
    %v2921 = vrot.slane %v2919, 6
    %2922 = vrot.lane.b32.xlu0 %v2921, 32
    %v2923 = vpop.permute.xlu0 %2922
    %v2925 = vmul.f32 %v2881, %v2923
    %v2926 = vsel %vm361, %v2925, 0.0
    %2927 = vadd.xlane.f32.xlu0 %v2926
    %v2928 = vpop.xlane.xlu0 %2927
    %v2929 = vtanh.pop %v2886
    %2931 = vrot.lane.b32.xlu0 %v2929, 32
    %v2932 = vpop.permute.xlu0 %2931
    %v2934 = vmul.f32 %v2881, %v2932
    %v2935 = vsel %vm361, %v2934, 0.0
    %2936 = vadd.xlane.f32.xlu0 %v2935
    %v2937 = vpop.xlane.xlu0 %2936
    %v2938 = vtanh.pop %v2887
    %v2940 = vrot.slane %v2938, 2
    %2941 = vrot.lane.b32.xlu0 %v2940, 32
    %v2942 = vpop.permute.xlu0 %2941
    %v2944 = vmul.f32 %v2881, %v2942
    %v2945 = vsel %vm361, %v2944, 0.0
    %2946 = vadd.xlane.f32.xlu0 %v2945
    %v2947 = vpop.xlane.xlu0 %2946
    %v2948 = vtanh.pop %v2888
    %v2950 = vrot.slane %v2948, 4
    %2951 = vrot.lane.b32.xlu0 %v2950, 32
    %v2952 = vpop.permute.xlu0 %2951
    %v2954 = vmul.f32 %v2881, %v2952
    %v2955 = vsel %vm361, %v2954, 0.0
    %2956 = vadd.xlane.f32.xlu0 %v2955
    %v2957 = vpop.xlane.xlu0 %2956
    %v2958 = vtanh.pop %v2889
    %v2960 = vrot.slane %v2958, 6
    %2961 = vrot.lane.b32.xlu0 %v2960, 32
    %v2962 = vpop.permute.xlu0 %2961
    %v2964 = vmul.f32 %v2881, %v2962
    %v2965 = vsel %vm361, %v2964, 0.0
    %2966 = vadd.xlane.f32.xlu0 %v2965
    %v2967 = vpop.xlane.xlu0 %2966
    %v2968 = vmax.f32 %v2898, %v2908
    %v2969 = vmax.f32 %v2968, %v2918
    %v2970 = vmax.f32 %v2969, %v2928
    %v2971 = vmax.f32 %v2970, %v2937
    %v2972 = vmax.f32 %v2971, %v2947
    %v2973 = vmax.f32 %v2972, %v2957
    %v2974 = vmax.f32 %v2973, %v2967
    %v2975 = vsub.f32 %v2898, %v2974
    %v2976 = vmul.f32 %v2975, 1.442695
    %v2977 = vpow.pop %v2976
    %v2978 = vsub.f32 %v2908, %v2974
    %v2979 = vmul.f32 %v2978, 1.442695
    %v2980 = vpow.pop %v2979
    %v2981 = vsub.f32 %v2918, %v2974
    %v2982 = vmul.f32 %v2981, 1.442695
    %v2983 = vpow.pop %v2982
    %v2984 = vsub.f32 %v2928, %v2974
    %v2985 = vmul.f32 %v2984, 1.442695
    %v2986 = vpow.pop %v2985
    %v2987 = vsub.f32 %v2937, %v2974
    %v2988 = vmul.f32 %v2987, 1.442695
    %v2989 = vpow.pop %v2988
    %v2990 = vsub.f32 %v2947, %v2974
    %v2991 = vmul.f32 %v2990, 1.442695
    %v2992 = vpow.pop %v2991
    %v2993 = vsub.f32 %v2957, %v2974
    %v2994 = vmul.f32 %v2993, 1.442695
    %v2995 = vpow.pop %v2994
    %v2996 = vsub.f32 %v2967, %v2974
    %v2997 = vmul.f32 %v2996, 1.442695
    %v2998 = vpow.pop %v2997
    %v2999 = vmul.f32 %v2977, %v2882
    %v3000 = vadd.f32 %v2977, %v2980
    %v3002 = vrot.slane %v2883, 2
    %3003 = vrot.lane.b32.xlu0 %v3002, 32
    %v3004 = vpop.permute.xlu0 %3003
    %v3006 = vmul.f32 %v2980, %v3004
    %3008 = vrot.lane.b32.xlu0 %v3006, 96
    %v3009 = vpop.permute.xlu0 %3008
    %v3011 = vadd.f32 %v2999, %v3009
    %v3012 = vadd.f32 %v3000, %v2983
    %v3014 = vrot.slane %v2884, 4
    %3015 = vrot.lane.b32.xlu0 %v3014, 32
    %v3016 = vpop.permute.xlu0 %3015
    %v3018 = vmul.f32 %v2983, %v3016
    %3020 = vrot.lane.b32.xlu0 %v3018, 96
    %v3021 = vpop.permute.xlu0 %3020
    %v3023 = vadd.f32 %v3011, %v3021
    %v3024 = vadd.f32 %v3012, %v2986
    %v3026 = vrot.slane %v2885, 6
    %3027 = vrot.lane.b32.xlu0 %v3026, 32
    %v3028 = vpop.permute.xlu0 %3027
    %v3030 = vmul.f32 %v2986, %v3028
    %3032 = vrot.lane.b32.xlu0 %v3030, 96
    %v3033 = vpop.permute.xlu0 %3032
    %v3035 = vadd.f32 %v3023, %v3033
    %v3036 = vadd.f32 %v3024, %v2989
    %v3037 = vmul.f32 %v2989, %v2886
    %v3038 = vadd.f32 %v3035, %v3037
    %v3039 = vadd.f32 %v3036, %v2992
    %v3041 = vrot.slane %v2887, 2
    %3042 = vrot.lane.b32.xlu0 %v3041, 32
    %v3043 = vpop.permute.xlu0 %3042
    %v3045 = vmul.f32 %v2992, %v3043
    %3047 = vrot.lane.b32.xlu0 %v3045, 96
    %v3048 = vpop.permute.xlu0 %3047
    %v3050 = vadd.f32 %v3038, %v3048
    %v3051 = vadd.f32 %v3039, %v2995
    %v3053 = vrot.slane %v2888, 4
    %3054 = vrot.lane.b32.xlu0 %v3053, 32
    %v3055 = vpop.permute.xlu0 %3054
    %v3057 = vmul.f32 %v2995, %v3055
    %3059 = vrot.lane.b32.xlu0 %v3057, 96
    %v3060 = vpop.permute.xlu0 %3059
    %v3062 = vadd.f32 %v3050, %v3060
    %v3063 = vadd.f32 %v3051, %v2998
    %v3065 = vrot.slane %v2889, 6
    %3066 = vrot.lane.b32.xlu0 %v3065, 32
    %v3067 = vpop.permute.xlu0 %3066
    %v3069 = vmul.f32 %v2998, %v3067
    %3071 = vrot.lane.b32.xlu0 %v3069, 96
    %v3072 = vpop.permute.xlu0 %3071
    %v3074 = vadd.f32 %v3062, %v3072
    %v3075 = vrcp.pop %v3063
    %v3076 = vmul.f32 %v3074, %v3075
    %v3077 = vld [vmem:[%s9] sm:$0xff]
    %v3078 = vld [vmem:[%s9 + $0x8] sm:$0xff]
    %v3079 = vld [vmem:[%s9 + $0x10] sm:$0xff]
    %v3080 = vld [vmem:[%s9 + $0x18] sm:$0xff]
    %v3081 = vld [vmem:[%s10] sm:$0x1]
    %v3083 = vlaneseq
    %v3084 = vshrl.u32 %v3083, 7
    %v3085 = vsub.s32 0, %v3084
    %v3086 = vrot.slane %v3081, %v3085
    %3089 = vrot.lane.b32.xlu0 %v3076, 32
    %v3090 = vpop.permute.xlu0 %3089
    %v3091 = vsel %vm373, %v3090, 0
    %3093 = vmatprep.subr.mxu0 0.0
    %3094 = vmatpush1.msra.mxu0 %v3077
    %3095 = vmatprep.subr.mxu0 0.0
    %3096 = vmatpush1.msra.mxu0 %v3078
    %3097 = vmatprep.subr.mxu0 0.0
    %3098 = vmatpush1.msra.mxu0 %v3079
    %3099 = vmatprep.subr.mxu0 0.0
    %3100 = vmatpush1.msra.mxu0 %v3080
    %3101 = vmatprep.subr.mxu0 0.0
    %3102 = vmatpush1.msra.mxu0 0.0
    %3103 = vmatprep.subr.mxu0 0.0
    %3104 = vmatpush1.msra.mxu0 0.0
    %3105 = vmatprep.subr.mxu0 0.0
    %3106 = vmatpush1.msra.mxu0 0.0
    %3107 = vmatprep.subr.mxu0 0.0
    %3108 = vmatpush1.msra.mxu0 0.0
    %3109 = vmatprep.subr.mxu0 0.0
    %3110 = vmatpush1.msra.mxu0 0.0
    %3111 = vmatprep.subr.mxu0 0.0
    %3112 = vmatpush1.msra.mxu0 0.0
    %3113 = vmatprep.subr.mxu0 0.0
    %3114 = vmatpush1.msra.mxu0 0.0
    %3115 = vmatprep.subr.mxu0 0.0
    %3116 = vmatpush1.msra.mxu0 0.0
    %3117 = vmatprep.subr.mxu0 0.0
    %3118 = vmatpush1.msra.mxu0 0.0
    %3119 = vmatprep.subr.mxu0 0.0
    %3120 = vmatpush1.msra.mxu0 0.0
    %3121 = vmatprep.subr.mxu0 0.0
    %3122 = vmatpush1.msra.mxu0 0.0
    %3123 = vmatprep.subr.mxu0 0.0
    %3124 = vmatpush1.msra.mxu0 0.0
    %3125 = vmatprep.subr.mxu0 0.0
    %3126 = vmatpush1.msra.mxu0 0.0
    %3127 = vmatprep.subr.mxu0 0.0
    %3128 = vmatpush1.msra.mxu0 0.0
    %3129 = vmatprep.subr.mxu0 0.0
    %3130 = vmatpush1.msra.mxu0 0.0
    %3131 = vmatprep.subr.mxu0 0.0
    %3132 = vmatpush1.msra.mxu0 0.0
    %3133 = vmatprep.subr.mxu0 0.0
    %3134 = vmatpush1.msra.mxu0 0.0
    %3135 = vmatprep.subr.mxu0 0.0
    %3136 = vmatpush1.msra.mxu0 0.0
    %3137 = vmatprep.subr.mxu0 0.0
    %3138 = vmatpush1.msra.mxu0 0.0
    %3139 = vmatprep.subr.mxu0 0.0
    %3140 = vmatpush1.msra.mxu0 0.0
    %3141 = vmatprep.subr.mxu0 0.0
    %3142 = vmatpush1.msra.mxu0 0.0
    %3143 = vmatprep.subr.mxu0 0.0
    %3144 = vmatpush1.msra.mxu0 0.0
    %3145 = vmatprep.subr.mxu0 0.0
    %3146 = vmatpush1.msra.mxu0 0.0
    %3147 = vmatprep.subr.mxu0 0.0
    %3148 = vmatpush1.msra.mxu0 0.0
    %3149 = vmatprep.subr.mxu0 0.0
    %3150 = vmatpush1.msra.mxu0 0.0
    %3151 = vmatprep.subr.mxu0 0.0
    %3152 = vmatpush1.msra.mxu0 0.0
    %3153 = vmatprep.subr.mxu0 0.0
    %3154 = vmatpush1.msra.mxu0 0.0
    %3155 = vmatprep.subr.mxu0 0.0
    %3156 = vmatpush1.msra.mxu0 0.0
    %3157 = vmatprep.mubr.f32.mxu0 0.0
    %3158 = vmatmul.mubr.f32.gmra.mrb[0].mxu0 %v3091
    %v3159 = vpop.f32.mrb[0].mxu0
    %v3160 = vadd.f32 %v3086, %v3159
    %v3161 = vpop.f32.mrb[0].mxu0
    %3162 = vdwg.mxu0
    %v3163 = vmax.f32 %v3160, 0.0
    %v3164 = vld [vmem:[%s11] sm:$0xff]
    %v3165 = vld [vmem:[%s11 + $0x8] sm:$0xff]
    %v3166 = vld [vmem:[%s11 + $0x10] sm:$0xff]
    %v3167 = vld [vmem:[%s11 + $0x18] sm:$0xff]
    %v3168 = vld [vmem:[%s12] sm:$0x1]
    %v3170 = vlaneseq
    %v3171 = vshrl.u32 %v3170, 7
    %v3172 = vsub.s32 0, %v3171
    %v3173 = vrot.slane %v3168, %v3172
    %v3176 = vsel %vm373, %v3163, 0
    %3178 = vmatprep.subr.mxu0 0.0
    %3179 = vmatpush1.msra.mxu0 %v3164
    %3180 = vmatprep.subr.mxu0 0.0
    %3181 = vmatpush1.msra.mxu0 %v3165
    %3182 = vmatprep.subr.mxu0 0.0
    %3183 = vmatpush1.msra.mxu0 %v3166
    %3184 = vmatprep.subr.mxu0 0.0
    %3185 = vmatpush1.msra.mxu0 %v3167
    %3186 = vmatprep.subr.mxu0 0.0
    %3187 = vmatpush1.msra.mxu0 0.0
    %3188 = vmatprep.subr.mxu0 0.0
    %3189 = vmatpush1.msra.mxu0 0.0
    %3190 = vmatprep.subr.mxu0 0.0
    %3191 = vmatpush1.msra.mxu0 0.0
    %3192 = vmatprep.subr.mxu0 0.0
    %3193 = vmatpush1.msra.mxu0 0.0
    %3194 = vmatprep.subr.mxu0 0.0
    %3195 = vmatpush1.msra.mxu0 0.0
    %3196 = vmatprep.subr.mxu0 0.0
    %3197 = vmatpush1.msra.mxu0 0.0
    %3198 = vmatprep.subr.mxu0 0.0
    %3199 = vmatpush1.msra.mxu0 0.0
    %3200 = vmatprep.subr.mxu0 0.0
    %3201 = vmatpush1.msra.mxu0 0.0
    %3202 = vmatprep.subr.mxu0 0.0
    %3203 = vmatpush1.msra.mxu0 0.0
    %3204 = vmatprep.subr.mxu0 0.0
    %3205 = vmatpush1.msra.mxu0 0.0
    %3206 = vmatprep.subr.mxu0 0.0
    %3207 = vmatpush1.msra.mxu0 0.0
    %3208 = vmatprep.subr.mxu0 0.0
    %3209 = vmatpush1.msra.mxu0 0.0
    %3210 = vmatprep.subr.mxu0 0.0
    %3211 = vmatpush1.msra.mxu0 0.0
    %3212 = vmatprep.subr.mxu0 0.0
    %3213 = vmatpush1.msra.mxu0 0.0
    %3214 = vmatprep.subr.mxu0 0.0
    %3215 = vmatpush1.msra.mxu0 0.0
    %3216 = vmatprep.subr.mxu0 0.0
    %3217 = vmatpush1.msra.mxu0 0.0
    %3218 = vmatprep.subr.mxu0 0.0
    %3219 = vmatpush1.msra.mxu0 0.0
    %3220 = vmatprep.subr.mxu0 0.0
    %3221 = vmatpush1.msra.mxu0 0.0
    %3222 = vmatprep.subr.mxu0 0.0
    %3223 = vmatpush1.msra.mxu0 0.0
    %3224 = vmatprep.subr.mxu0 0.0
    %3225 = vmatpush1.msra.mxu0 0.0
    %3226 = vmatprep.subr.mxu0 0.0
    %3227 = vmatpush1.msra.mxu0 0.0
    %3228 = vmatprep.subr.mxu0 0.0
    %3229 = vmatpush1.msra.mxu0 0.0
    %3230 = vmatprep.subr.mxu0 0.0
    %3231 = vmatpush1.msra.mxu0 0.0
    %3232 = vmatprep.subr.mxu0 0.0
    %3233 = vmatpush1.msra.mxu0 0.0
    %3234 = vmatprep.subr.mxu0 0.0
    %3235 = vmatpush1.msra.mxu0 0.0
    %3236 = vmatprep.subr.mxu0 0.0
    %3237 = vmatpush1.msra.mxu0 0.0
    %3238 = vmatprep.subr.mxu0 0.0
    %3239 = vmatpush1.msra.mxu0 0.0
    %3240 = vmatprep.subr.mxu0 0.0
    %3241 = vmatpush1.msra.mxu0 0.0
    %3242 = vmatprep.mubr.f32.mxu0 0.0
    %3243 = vmatmul.mubr.f32.gmra.mrb[0].mxu0 %v3176
    %v3244 = vpop.f32.mrb[0].mxu0
    %v3245 = vadd.f32 %v3173, %v3244
    %v3246 = vpop.f32.mrb[0].mxu0
    %3247 = vdwg.mxu0
    %vm3248 = vcmask 9216
    %v3249 = vsel %vm3248, %v3245, -inf
    %3250 = vmax.xlane.f32.xlu0 %v3249
    %v3251 = vpop.xlane.xlu0 %3250
    %v3252 = vsub.f32 %v3245, %v3251
    %v3253 = vmul.f32 %v3252, 1.442695
    %v3254 = vpow.pop %v3253
    %v3255 = vsel %vm3248, %v3254, 0.0
    %3256 = vadd.xlane.f32.xlu0 %v3255
    %v3257 = vpop.xlane.xlu0 %3256
    %v3258 = vrcp.pop %v3257
    %v3259 = vmul.f32 %v3254, %v3258
    %3260 = vst.msk [vmem:[#allocation12] sm:$0x3] %vm3248, %v3259
    // Predicated region
    $region70: #{text_bilstm_forward.1} parent=1 // pred_check
      _
    $region71: #{text_bilstm_forward.1} parent=1 // pred_check_branch
      %3262 = sbr.rel (0) target = $region73
    $region72: #{text_bilstm_forward.1} parent=1 // pred_region
      %s3264 = ssub.s32 32, 32
      %3265 = vsyncadd [#allocation6], %s3264
      %s3267 = sshll.u32 [#allocation12], 4
      %s3268 = int_to_ptr.vmem [resolvable:$true] %s3267
      %3270 = dma.vmem_to_hbm [thread:$0]  %s3268, 32, %s13, [#allocation6]
    $region73: #{text_bilstm_forward.1} parent=1 // pred_fallthru
      _
    // Predicated region
    $region74: #{text_bilstm_forward.1} parent=1 // pred_check
      _
    $region75: #{text_bilstm_forward.1} parent=1 // pred_check_branch
      %3272 = sbr.rel (0) target = $region77
    $region76: #{text_bilstm_forward.1} parent=1 // pred_region
      %3273 = dma.done [#allocation6], 32
    $region77: #{text_bilstm_forward.1} parent=1 // pred_fallthru
      _
    %3274 = vsyncpa [#allocation5], 1
    %3275 = vsyncpa [#allocation8], 1
    %3276 = vsyncpa [#allocation11], 1
    %3277 = vsyncpa [#allocation6], 1

</llo_original>
